<compile_context>
chip_gen: v5e
topology: v5e:2x2
jax: 0.10.0
libtpu: 0.0.40
codegen_flags: <defaults>
</compile_context>

<pallas_src>
import functools
import math
import re

import jax
import jax.numpy as jnp
from jax import lax
from jax.experimental import pallas as pl
from jax.experimental.pallas import tpu as pltpu

EPS = 1e-5

# Abramowitz & Stegun 7.1.26 erf approximation, |error| <= 1.5e-7.
_ERF_P = 0.3275911
_ERF_A1 = 0.254829592
_ERF_A2 = -0.284496736
_ERF_A3 = 1.421413741
_ERF_A4 = -1.453152027
_ERF_A5 = 1.061405429


def _erf_approx(x):
    a = jnp.abs(x)
    t = 1.0 / (1.0 + _ERF_P * a)
    poly = ((((_ERF_A5 * t + _ERF_A4) * t + _ERF_A3) * t + _ERF_A2) * t + _ERF_A1) * t
    y = 1.0 - poly * jnp.exp(-(a * a))
    return jnp.where(x < 0, -y, y)


def _gelu(x):
    # Exact (erf-based) GELU, matching torch.nn.GELU() up to the 1.5e-7 erf
    # approximation error.  exp() executes on the EUP (its own VLIW slot).
    return 0.5 * x * (1.0 + _erf_approx(x * (1.0 / math.sqrt(2.0))))


def _gelu_torch(x):
    # PyTorch nn.GELU() default: exact erf-based GELU (reference only).
    return 0.5 * x * (1.0 + lax.erf(x * (1.0 / math.sqrt(2.0))))


def _layernorm(x, gamma, beta):
    """LayerNorm over the last dim with single-pass statistics.

    Biased variance, eps=1e-5, matching torch.nn.LayerNorm.  var is guarded
    with max(., 0); single-pass stats are fine for O(1)-scale activations
    (switch to two-pass for very large residual-stream means)."""
    inv_h = 1.0 / x.shape[-1]
    mean = jnp.sum(x, axis=-1, keepdims=True) * inv_h
    msq = jnp.sum(x * x, axis=-1, keepdims=True) * inv_h
    var = jnp.maximum(msq - mean * mean, 0.0)
    return (x - mean) * lax.rsqrt(var + EPS) * gamma + beta


def _mixer_block_kernel(x_ref,
                        g1_ref, b1_ref,      # LayerNorm1 gamma/beta    (1, H)  f32
                        wt1_ref, bt1_ref,    # token linear1  W (Td, P) bf16, b (Td, 1) f32
                        wt2_ref, bt2_ref,    # token linear2  W (P, Td) bf16, b (P, 1)  f32
                        g2_ref, b2_ref,      # LayerNorm2 gamma/beta    (1, H)  f32
                        wc1_ref, bc1_ref,    # channel linear1 W (H, Cd) bf16, b (1, Cd) f32
                        wc2_ref, bc2_ref,    # channel linear2 W (Cd, H) bf16, b (1, H)  f32
                        out_ref,
                        *, channel_act_dtype):
    BT, P, H = x_ref.shape
    R = BT * P
    mm_dt = wt1_ref.dtype            # matmul operand dtype (bf16); accumulate f32

    wt1 = wt1_ref[...]
    wt2 = wt2_ref[...]
    bt1 = bt1_ref[...]
    bt2 = bt2_ref[...]
    g1 = g1_ref[...]
    b1 = b1_ref[...]

    # ---- token-mixing branch ------------------------------------------------
    # Unrolled over the (compile-time-constant) BT samples: plain 2-D MXU dots
    # with the shared token weights (no broadcast_to replication).  The
    # post-token residual is staged in out_ref (used here as VMEM scratch).
    for b in range(BT):
        xb = x_ref[b]                                                 # (P, H) f32
        yb = _layernorm(xb, g1, b1).astype(mm_dt)                     # (P, H) bf16
        t = jnp.dot(wt1, yb, preferred_element_type=jnp.float32)      # (Td, H) f32
        t = _gelu(t + bt1).astype(mm_dt)                              # (Td, H) bf16
        tok = jnp.dot(wt2, t, preferred_element_type=jnp.float32)     # (P, H) f32
        out_ref[b] = xb + tok + bt2                                   # residual (+ bias over P)

    # ---- channel-mixing branch ----------------------------------------------
    # One flattened (R, H) matmul pair (good MXU M-dim); bias + GELU of the
    # large (R, Cd) intermediate in channel_act_dtype (bf16 on v6e/v7x).
    xr = out_ref[...].reshape(R, H)                                   # (R, H) f32
    y2 = _layernorm(xr, g2_ref[...], b2_ref[...]).astype(mm_dt)       # (R, H) bf16
    h = jnp.dot(y2, wc1_ref[...], preferred_element_type=jnp.float32)  # (R, Cd) f32
    h = _gelu(h.astype(channel_act_dtype) + bc1_ref[...].astype(channel_act_dtype))
    c = jnp.dot(h.astype(mm_dt), wc2_ref[...],
                preferred_element_type=jnp.float32)                   # (R, H) f32
    out_ref[...] = (xr + c + bc2_ref[...]).reshape(BT, P, H)


# -------------------------- wrapper-side helpers ------------------------------

def _tpu_generation():
    try:
        kind = jax.devices()[0].device_kind
    except Exception:
        return 0
    m = re.search(r"(\d+)", kind)
    return int(m.group(1)) if m else 0


def _default_channel_act_dtype(gen=None):
    gen = _tpu_generation() if gen is None else gen
    # v6e/v7x VPUs have packed bf16; v5e and older keep elementwise work in f32.
    return jnp.bfloat16 if gen >= 6 else jnp.float32


def _vmem_limit_bytes(gen):
    if gen >= 7:
        return 48 * 1024 * 1024        # headroom under v7x's 64 MiB / TC
    if gen in (5, 6):
        return 64 * 1024 * 1024        # 128 MiB physical on v5e/v6e
    return None                        # unknown / older: compiler default


def _round_up(v, m):
    return -(-v // m) * m


def _padded_elems(shape):
    """Rough (8,128)-padded element count for a VMEM-resident array."""
    if len(shape) == 1:
        return _round_up(shape[0], 128)
    lead = 1
    for d in shape[:-2]:
        lead *= d
    return lead * _round_up(shape[-2], 8) * _round_up(shape[-1], 128)


def _vmem_estimate_bytes(bt, P, H, Td, Cd, wbytes):
    xblk = _padded_elems((bt, P, H)) * 4
    weights = ((_padded_elems((Td, P)) + _padded_elems((P, Td))
                + _padded_elems((H, Cd)) + _padded_elems((Cd, H))) * wbytes
               + (_padded_elems((Td, 1)) + _padded_elems((P, 1))
                  + _padded_elems((1, Cd)) + 5 * _padded_elems((1, H))) * 4)
    R = bt * P
    inter = _padded_elems((R, Cd)) * 4 + 2 * _padded_elems((R, H)) * 4
    return 4 * xblk + weights + inter          # 2 input bufs + 2 output bufs


def _pick_block_batch(batch, n_patches, *, target_rows, max_bt=8, even_steps=False):
    """Samples per grid step: enough rows to amortize the ~0.35us/step overhead,
    >= 2 grid steps when possible, and (v7x) an even step count so the two
    TensorCores get balanced work under dimension_semantics=("parallel",)."""
    bt = max(1, min(batch, max_bt, max(1, target_rows // max(n_patches, 1))))
    while batch % bt:
        bt -= 1
    if batch >= 2 and batch // bt < 2:
        bt = max(1, batch // 2)
        while batch % bt:
            bt -= 1
    if even_steps and (batch // bt) % 2:
        cand = bt - 1
        while cand >= 1:
            if batch % cand == 0 and (batch // cand) % 2 == 0:
                bt = cand
                break
            cand -= 1
    return bt


def mixer_block(x, params, *, block_batch=None, matmul_dtype=jnp.bfloat16,
                channel_act_dtype=None):
    """x: (B, P, H) float32.  params: dict of f32 weights (see init_params)."""
    B, P, H = x.shape
    Td = params["wt1"].shape[1]
    Cd = params["wc1"].shape[1]
    gen = _tpu_generation()
    if channel_act_dtype is None:
        channel_act_dtype = _default_channel_act_dtype(gen)

    wbytes = jnp.dtype(matmul_dtype).itemsize
    vmem_limit = _vmem_limit_bytes(gen)
    vmem_budget = vmem_limit if vmem_limit is not None else 32 * 1024 * 1024

    if block_batch is not None:
        BT = block_batch
    else:
        target_rows = 1024 if gen in (5, 6) else 512
        BT = _pick_block_batch(B, P, target_rows=target_rows, even_steps=(gen >= 7))
        # Shrink BT if the estimated VMEM footprint would blow the budget.
        while BT > 1 and _vmem_estimate_bytes(BT, P, H, Td, Cd, wbytes) > 0.7 * vmem_budget:
            cand = BT - 1
            while cand > 1 and B % cand:
                cand -= 1
            BT = cand
    assert B % BT == 0, (B, BT)
    grid = (B // BT,)

    # Kernel-side parameter layout: token weights pre-transposed so both token
    # matmuls are plain (out, contract) @ (contract, H) dots (no in-kernel
    # transposes); token biases as columns; weight matrices cast to bf16.
    # Biases and LayerNorm affine params stay f32.
    wt1_t = params["wt1"].T.astype(matmul_dtype)      # (Td, P)
    wt2_t = params["wt2"].T.astype(matmul_dtype)      # (P, Td)
    bt1_c = params["bt1"].reshape(Td, 1)              # (Td, 1)
    bt2_c = params["bt2"].reshape(P, 1)               # (P, 1)
    wc1 = params["wc1"].astype(matmul_dtype)          # (H, Cd)
    wc2 = params["wc2"].astype(matmul_dtype)          # (Cd, H)

    operands = (x,
                params["g1"], params["b1"],
                wt1_t, bt1_c,
                wt2_t, bt2_c,
                params["g2"], params["b2"],
                wc1, params["bc1"],
                wc2, params["bc2"])

    kernel = functools.partial(_mixer_block_kernel,
                               channel_act_dtype=channel_act_dtype)

    # HBM traffic: x in + out once; constant-index weight blocks counted ONCE
    # (they are not re-fetched every grid step).
    weight_hbm_bytes = 2 * (P * Td + H * Cd) * wbytes + (Td + P + Cd + 5 * H) * 4
    cost = pl.CostEstimate(
        flops=int(4 * B * P * H * (Td + Cd)),
        transcendentals=int(B * (Td * H + P * Cd) + 2 * B * P),
        bytes_accessed=int(2 * B * P * H * 4 + weight_hbm_bytes),
    )

    def build_and_run(single_buffer_weights):
        def const_spec(shape):
            zeros = (0,) * len(shape)
            if single_buffer_weights:
                # Constant index_map => second pipeline buffer is pure waste.
                return pl.BlockSpec(shape, lambda b, z=zeros: z,
                                    pipeline_mode=pl.Buffered(1))
            return pl.BlockSpec(shape, lambda b, z=zeros: z)

        grid_spec = pltpu.PrefetchScalarGridSpec(
            num_scalar_prefetch=0,
            grid=grid,
            in_specs=[
                pl.BlockSpec((BT, P, H), lambda b: (b, 0, 0)),   # x
                const_spec((1, H)), const_spec((1, H)),          # norm1
                const_spec((Td, P)), const_spec((Td, 1)),        # token linear1
                const_spec((P, Td)), const_spec((P, 1)),         # token linear2
                const_spec((1, H)), const_spec((1, H)),          # norm2
                const_spec((H, Cd)), const_spec((1, Cd)),        # channel linear1
                const_spec((Cd, H)), const_spec((1, H)),         # channel linear2
            ],
            out_specs=pl.BlockSpec((BT, P, H), lambda b: (b, 0, 0)),
        )
        return pl.pallas_call(
            kernel,
            out_shape=jax.ShapeDtypeStruct((B, P, H), jnp.float32),
            grid_spec=grid_spec,
            compiler_params=pltpu.CompilerParams(
                dimension_semantics=("parallel",),
                vmem_limit_bytes=vmem_limit),
            cost_estimate=cost,
        )(*operands)

    if hasattr(pl, "Buffered"):
        try:
            return build_and_run(True)
        except Exception:
            # Fallback for JAX versions where pipeline_mode=pl.Buffered(1) is
            # not supported on pallas_call BlockSpecs.
            pass
    return build_and_run(False)


def init_params(key, n_patches, hidden_dim, tokens_mlp_dim, channels_mlp_dim):
    """Deterministic synthetic parameters (shapes match the PyTorch module).

    Linear weights are stored in right-multiply form (in_dim, out_dim), i.e.
    the transpose of PyTorch's nn.Linear.weight."""
    ks = jax.random.split(key, 8)
    f32 = jnp.float32
    return {
        "g1": jnp.ones((1, hidden_dim), f32),
        "b1": jnp.zeros((1, hidden_dim), f32),
        "g2": jnp.ones((1, hidden_dim), f32),
        "b2": jnp.zeros((1, hidden_dim), f32),
        "wt1": jax.random.normal(ks[0], (n_patches, tokens_mlp_dim), f32) * 0.1,
        "bt1": jax.random.normal(ks[1], (1, tokens_mlp_dim), f32) * 0.1,
        "wt2": jax.random.normal(ks[2], (tokens_mlp_dim, n_patches), f32) * 0.1,
        "bt2": jax.random.normal(ks[3], (1, n_patches), f32) * 0.1,
        "wc1": jax.random.normal(ks[4], (hidden_dim, channels_mlp_dim), f32) * 0.1,
        "bc1": jax.random.normal(ks[5], (1, channels_mlp_dim), f32) * 0.1,
        "wc2": jax.random.normal(ks[6], (channels_mlp_dim, hidden_dim), f32) * 0.1,
        "bc2": jax.random.normal(ks[7], (1, hidden_dim), f32) * 0.1,
    }


def mixer_block_ref(x, p, *, matmul_dtype=jnp.float32,
                    channel_act_dtype=jnp.float32, mirror_kernel=False):
    """Pure-JAX reference.

    mirror_kernel=False: faithful float32 mirror of the PyTorch forward.
    mirror_kernel=True : mirrors the kernel's precision policy (bf16 matmul
    operands, f32 accumulation, single-pass LayerNorm stats, A&S erf, and the
    channel-MLP bias+GELU in channel_act_dtype)."""
    gelu = _gelu if mirror_kernel else _gelu_torch

    def mm(a, w):
        return jnp.einsum('...ij,jk->...ik', a.astype(matmul_dtype),
                          w.astype(matmul_dtype),
                          preferred_element_type=jnp.float32)

    def ln(v, g, b):
        if mirror_kernel:
            return _layernorm(v, g, b)
        m = jnp.mean(v, axis=-1, keepdims=True)
        var = jnp.mean((v - m) ** 2, axis=-1, keepdims=True)
        return (v - m) * lax.rsqrt(var + EPS) * g + b

    y = ln(x, p["g1"], p["b1"])
    y = jnp.swapaxes(y, 1, 2)                               # (B, H, P)
    y = mm(gelu(mm(y, p["wt1"]) + p["bt1"]), p["wt2"]) + p["bt2"]
    y = jnp.swapaxes(y, 1, 2)                               # (B, P, H)
    x = x + y
    y = ln(x, p["g2"], p["b2"])
    h = mm(y, p["wc1"])
    h = gelu(h.astype(channel_act_dtype) + p["bc1"].astype(channel_act_dtype))
    c = mm(h, p["wc2"]) + p["bc2"]
    return x + c


if __name__ == "__main__":
    # Small demo shapes consistent with the module: (n_samples, n_patches, hidden)
    B, P, H = 8, 8, 32
    Td, Cd = 16, 64                       # tokens_mlp_dim, channels_mlp_dim

    key = jax.random.PRNGKey(0)
    kx, kp = jax.random.split(key)
    x = jax.random.normal(kx, (B, P, H), jnp.float32)
    params = init_params(kp, P, H, Td, Cd)

    act_dt = _default_channel_act_dtype()
    out = jax.block_until_ready(mixer_block(x, params, channel_act_dtype=act_dt))
    assert out.shape == (B, P, H) and out.dtype == jnp.float32

    # Tight check vs a reference mirroring the kernel's exact precision policy.
    ref_mirror = mixer_block_ref(x, params, matmul_dtype=jnp.bfloat16,
                                 channel_act_dtype=act_dt, mirror_kernel=True)
    err_mirror = float(jnp.max(jnp.abs(out - ref_mirror)))
    assert jnp.allclose(out, ref_mirror, atol=1e-2, rtol=1e-2), \
        f"max abs err vs mirrored-precision reference: {err_mirror}"

    # Looser check vs the full-f32, PyTorch-faithful reference (bf16 matmul
    # operands contribute ~0.4% relative error on the MLP branches).
    ref_f32 = mixer_block_ref(x, params)
    err_f32 = float(jnp.max(jnp.abs(out - ref_f32)))
    assert jnp.allclose(out, ref_f32, atol=3e-2, rtol=3e-2), \
        f"max abs err vs float32 reference: {err_f32}"

    print("KERNEL_OK")
</pallas_src>

<mosaic_0001>
module attributes {stable_mosaic.version = 11 : i64} {
  func.func @_mixer_block_kernel(%arg0: i32, %arg1: memref<4x8x32xf32, #tpu.memory_space<vmem>>, %arg2: memref<1x32xf32, #tpu.memory_space<vmem>>, %arg3: memref<1x32xf32, #tpu.memory_space<vmem>>, %arg4: memref<16x8xbf16, #tpu.memory_space<vmem>>, %arg5: memref<16x1xf32, #tpu.memory_space<vmem>>, %arg6: memref<8x16xbf16, #tpu.memory_space<vmem>>, %arg7: memref<8x1xf32, #tpu.memory_space<vmem>>, %arg8: memref<1x32xf32, #tpu.memory_space<vmem>>, %arg9: memref<1x32xf32, #tpu.memory_space<vmem>>, %arg10: memref<32x64xbf16, #tpu.memory_space<vmem>>, %arg11: memref<1x64xf32, #tpu.memory_space<vmem>>, %arg12: memref<64x32xbf16, #tpu.memory_space<vmem>>, %arg13: memref<1x32xf32, #tpu.memory_space<vmem>>, %arg14: memref<4x8x32xf32, #tpu.memory_space<vmem>>) attributes {dimension_semantics = [#tpu.dimension_semantics<parallel>], iteration_bounds = array<i64: 2>, scalar_prefetch = 0 : i64, scratch_operands = 0 : i64, tpu.core_type = #tpu.core_type<tc>, window_params = [{transform_indices = @transform_0, window_bounds = array<i64: 4, 8, 32>}, {pipeline_mode = #tpu.pipeline_mode<synchronous>, transform_indices = @transform_1, window_bounds = array<i64: 1, 32>}, {pipeline_mode = #tpu.pipeline_mode<synchronous>, transform_indices = @transform_2, window_bounds = array<i64: 1, 32>}, {pipeline_mode = #tpu.pipeline_mode<synchronous>, transform_indices = @transform_3, window_bounds = array<i64: 16, 8>}, {pipeline_mode = #tpu.pipeline_mode<synchronous>, transform_indices = @transform_4, window_bounds = array<i64: 16, 1>}, {pipeline_mode = #tpu.pipeline_mode<synchronous>, transform_indices = @transform_5, window_bounds = array<i64: 8, 16>}, {pipeline_mode = #tpu.pipeline_mode<synchronous>, transform_indices = @transform_6, window_bounds = array<i64: 8, 1>}, {pipeline_mode = #tpu.pipeline_mode<synchronous>, transform_indices = @transform_7, window_bounds = array<i64: 1, 32>}, {pipeline_mode = #tpu.pipeline_mode<synchronous>, transform_indices = @transform_8, window_bounds = array<i64: 1, 32>}, {pipeline_mode = #tpu.pipeline_mode<synchronous>, transform_indices = @transform_9, window_bounds = array<i64: 32, 64>}, {pipeline_mode = #tpu.pipeline_mode<synchronous>, transform_indices = @transform_10, window_bounds = array<i64: 1, 64>}, {pipeline_mode = #tpu.pipeline_mode<synchronous>, transform_indices = @transform_11, window_bounds = array<i64: 64, 32>}, {pipeline_mode = #tpu.pipeline_mode<synchronous>, transform_indices = @transform_12, window_bounds = array<i64: 1, 32>}, {transform_indices = @transform_13, window_bounds = array<i64: 4, 8, 32>}]} {
    %c0 = arith.constant 0 : index
    %c0_0 = arith.constant 0 : index
    %0 = vector.load %arg4[%c0, %c0_0] : memref<16x8xbf16, #tpu.memory_space<vmem>>, vector<16x8xbf16>
    %c0_1 = arith.constant 0 : index
    %c0_2 = arith.constant 0 : index
    %1 = vector.load %arg6[%c0_1, %c0_2] : memref<8x16xbf16, #tpu.memory_space<vmem>>, vector<8x16xbf16>
    %c0_3 = arith.constant 0 : index
    %c0_4 = arith.constant 0 : index
    %2 = vector.load %arg5[%c0_3, %c0_4] : memref<16x1xf32, #tpu.memory_space<vmem>>, vector<16x1xf32>
    %c0_5 = arith.constant 0 : index
    %c0_6 = arith.constant 0 : index
    %3 = vector.load %arg7[%c0_5, %c0_6] : memref<8x1xf32, #tpu.memory_space<vmem>>, vector<8x1xf32>
    %c0_7 = arith.constant 0 : index
    %c0_8 = arith.constant 0 : index
    %4 = vector.load %arg2[%c0_7, %c0_8] : memref<1x32xf32, #tpu.memory_space<vmem>>, vector<1x32xf32>
    %c0_9 = arith.constant 0 : index
    %c0_10 = arith.constant 0 : index
    %5 = vector.load %arg3[%c0_9, %c0_10] : memref<1x32xf32, #tpu.memory_space<vmem>>, vector<1x32xf32>
    %c0_11 = arith.constant 0 : index
    %c0_12 = arith.constant 0 : index
    %c0_13 = arith.constant 0 : index
    %6 = vector.load %arg1[%c0_11, %c0_12, %c0_13] : memref<4x8x32xf32, #tpu.memory_space<vmem>>, vector<1x8x32xf32>
    %7 = vector.shape_cast %6 : vector<1x8x32xf32> to vector<8x32xf32>
    %cst = arith.constant dense<0.000000e+00> : vector<8xf32>
    %8 = vector.multi_reduction <add>, %7, %cst [1] : vector<8x32xf32> to vector<8xf32>
    %9 = vector.shape_cast %8 : vector<8xf32> to vector<8x1xf32>
    %cst_14 = arith.constant 3.125000e-02 : f32
    %10 = vector.broadcast %cst_14 : f32 to vector<8x1xf32>
    %11 = arith.mulf %9, %10 : vector<8x1xf32>
    %12 = arith.mulf %7, %7 : vector<8x32xf32>
    %cst_15 = arith.constant dense<0.000000e+00> : vector<8xf32>
    %13 = vector.multi_reduction <add>, %12, %cst_15 [1] : vector<8x32xf32> to vector<8xf32>
    %14 = vector.shape_cast %13 : vector<8xf32> to vector<8x1xf32>
    %cst_16 = arith.constant 3.125000e-02 : f32
    %15 = vector.broadcast %cst_16 : f32 to vector<8x1xf32>
    %16 = arith.mulf %14, %15 : vector<8x1xf32>
    %17 = arith.mulf %11, %11 : vector<8x1xf32>
    %18 = arith.subf %16, %17 : vector<8x1xf32>
    %cst_17 = arith.constant 0.000000e+00 : f32
    %19 = vector.broadcast %cst_17 : f32 to vector<8x1xf32>
    %20 = arith.maximumf %18, %19 : vector<8x1xf32>
    %21 = vector.broadcast %11 : vector<8x1xf32> to vector<8x32xf32>
    %22 = arith.subf %7, %21 : vector<8x32xf32>
    %cst_18 = arith.constant 9.99999974E-6 : f32
    %23 = vector.broadcast %cst_18 : f32 to vector<8x1xf32>
    %24 = arith.addf %20, %23 : vector<8x1xf32>
    %25 = math.rsqrt %24 : vector<8x1xf32>
    %26 = vector.broadcast %25 : vector<8x1xf32> to vector<8x32xf32>
    %27 = arith.mulf %22, %26 : vector<8x32xf32>
    %28 = vector.broadcast %4 : vector<1x32xf32> to vector<8x32xf32>
    %29 = arith.mulf %27, %28 : vector<8x32xf32>
    %30 = vector.broadcast %5 : vector<1x32xf32> to vector<8x32xf32>
    %31 = arith.addf %29, %30 : vector<8x32xf32>
    %32 = arith.truncf %31 : vector<8x32xf32> to vector<8x32xbf16>
    %cst_19 = arith.constant dense<0.000000e+00> : vector<16x32xf32>
    %33 = tpu.matmul %0, %32, %cst_19 {dimension_numbers = #tpu.dot_dimension_numbers<[1], [0], [0], [1], [0, 0, 1, 1], [], []>} : vector<16x8xbf16>, vector<8x32xbf16>, vector<16x32xf32> -> vector<16x32xf32>
    %34 = vector.broadcast %2 : vector<16x1xf32> to vector<16x32xf32>
    %35 = arith.addf %33, %34 : vector<16x32xf32>
    %cst_20 = arith.constant 5.000000e-01 : f32
    %36 = vector.broadcast %cst_20 : f32 to vector<16x32xf32>
    %37 = arith.mulf %36, %35 : vector<16x32xf32>
    %cst_21 = arith.constant 0.707106769 : f32
    %38 = vector.broadcast %cst_21 : f32 to vector<16x32xf32>
    %39 = arith.mulf %35, %38 : vector<16x32xf32>
    %40 = math.absf %39 : vector<16x32xf32>
    %cst_22 = arith.constant 0.327591091 : f32
    %41 = vector.broadcast %cst_22 : f32 to vector<16x32xf32>
    %42 = arith.mulf %41, %40 : vector<16x32xf32>
    %cst_23 = arith.constant 1.000000e+00 : f32
    %43 = vector.broadcast %cst_23 : f32 to vector<16x32xf32>
    %44 = arith.addf %43, %42 : vector<16x32xf32>
    %cst_24 = arith.constant 1.000000e+00 : f32
    %45 = vector.broadcast %cst_24 : f32 to vector<16x32xf32>
    %46 = arith.divf %45, %44 : vector<16x32xf32>
    %cst_25 = arith.constant 1.06140542 : f32
    %47 = vector.broadcast %cst_25 : f32 to vector<16x32xf32>
    %48 = arith.mulf %47, %46 : vector<16x32xf32>
    %cst_26 = arith.constant -1.45315206 : f32
    %49 = vector.broadcast %cst_26 : f32 to vector<16x32xf32>
    %50 = arith.addf %48, %49 : vector<16x32xf32>
    %51 = arith.mulf %50, %46 : vector<16x32xf32>
    %cst_27 = arith.constant 1.42141378 : f32
    %52 = vector.broadcast %cst_27 : f32 to vector<16x32xf32>
    %53 = arith.addf %51, %52 : vector<16x32xf32>
    %54 = arith.mulf %53, %46 : vector<16x32xf32>
    %cst_28 = arith.constant -0.284496725 : f32
    %55 = vector.broadcast %cst_28 : f32 to vector<16x32xf32>
    %56 = arith.addf %54, %55 : vector<16x32xf32>
    %57 = arith.mulf %56, %46 : vector<16x32xf32>
    %cst_29 = arith.constant 0.254829586 : f32
    %58 = vector.broadcast %cst_29 : f32 to vector<16x32xf32>
    %59 = arith.addf %57, %58 : vector<16x32xf32>
    %60 = arith.mulf %59, %46 : vector<16x32xf32>
    %61 = arith.mulf %40, %40 : vector<16x32xf32>
    %cst_30 = arith.constant 0.000000e+00 : f32
    %62 = vector.broadcast %cst_30 : f32 to vector<16x32xf32>
    %63 = arith.subf %62, %61 : vector<16x32xf32>
    %64 = math.exp %63 : vector<16x32xf32>
    %65 = arith.mulf %60, %64 : vector<16x32xf32>
    %cst_31 = arith.constant 1.000000e+00 : f32
    %66 = vector.broadcast %cst_31 : f32 to vector<16x32xf32>
    %67 = arith.subf %66, %65 : vector<16x32xf32>
    %cst_32 = arith.constant 0.000000e+00 : f32
    %68 = vector.broadcast %cst_32 : f32 to vector<16x32xf32>
    %69 = arith.cmpf olt, %39, %68 : vector<16x32xf32>
    %cst_33 = arith.constant 0.000000e+00 : f32
    %70 = vector.broadcast %cst_33 : f32 to vector<16x32xf32>
    %71 = arith.subf %70, %67 : vector<16x32xf32>
    %72 = arith.select %69, %71, %67 : vector<16x32xi1>, vector<16x32xf32>
    %cst_34 = arith.constant 1.000000e+00 : f32
    %73 = vector.broadcast %cst_34 : f32 to vector<16x32xf32>
    %74 = arith.addf %73, %72 : vector<16x32xf32>
    %75 = arith.mulf %37, %74 : vector<16x32xf32>
    %76 = arith.truncf %75 : vector<16x32xf32> to vector<16x32xbf16>
    %cst_35 = arith.constant dense<0.000000e+00> : vector<8x32xf32>
    %77 = tpu.matmul %1, %76, %cst_35 {dimension_numbers = #tpu.dot_dimension_numbers<[1], [0], [0], [1], [0, 0, 1, 1], [], []>} : vector<8x16xbf16>, vector<16x32xbf16>, vector<8x32xf32> -> vector<8x32xf32>
    %78 = arith.addf %7, %77 : vector<8x32xf32>
    %79 = vector.broadcast %3 : vector<8x1xf32> to vector<8x32xf32>
    %80 = arith.addf %78, %79 : vector<8x32xf32>
    %c0_36 = arith.constant 0 : index
    %c0_37 = arith.constant 0 : index
    %c0_38 = arith.constant 0 : index
    %81 = vector.load %arg14[%c0_36, %c0_37, %c0_38] : memref<4x8x32xf32, #tpu.memory_space<vmem>>, vector<1x8x32xf32>
    %82 = vector.shape_cast %81 : vector<1x8x32xf32> to vector<8x32xf32>
    %83 = vector.shape_cast %80 : vector<8x32xf32> to vector<1x8x32xf32>
    tpu.vector_store %arg14[%c0_36, %c0_37, %c0_38], %83 {strides = array<i32>} : memref<4x8x32xf32, #tpu.memory_space<vmem>>, vector<1x8x32xf32>,
    %c1 = arith.constant 1 : index
    %c0_39 = arith.constant 0 : index
    %c0_40 = arith.constant 0 : index
    %84 = vector.load %arg1[%c1, %c0_39, %c0_40] : memref<4x8x32xf32, #tpu.memory_space<vmem>>, vector<1x8x32xf32>
    %85 = vector.shape_cast %84 : vector<1x8x32xf32> to vector<8x32xf32>
    %cst_41 = arith.constant dense<0.000000e+00> : vector<8xf32>
    %86 = vector.multi_reduction <add>, %85, %cst_41 [1] : vector<8x32xf32> to vector<8xf32>
    %87 = vector.shape_cast %86 : vector<8xf32> to vector<8x1xf32>
    %cst_42 = arith.constant 3.125000e-02 : f32
    %88 = vector.broadcast %cst_42 : f32 to vector<8x1xf32>
    %89 = arith.mulf %87, %88 : vector<8x1xf32>
    %90 = arith.mulf %85, %85 : vector<8x32xf32>
    %cst_43 = arith.constant dense<0.000000e+00> : vector<8xf32>
    %91 = vector.multi_reduction <add>, %90, %cst_43 [1] : vector<8x32xf32> to vector<8xf32>
    %92 = vector.shape_cast %91 : vector<8xf32> to vector<8x1xf32>
    %cst_44 = arith.constant 3.125000e-02 : f32
    %93 = vector.broadcast %cst_44 : f32 to vector<8x1xf32>
    %94 = arith.mulf %92, %93 : vector<8x1xf32>
    %95 = arith.mulf %89, %89 : vector<8x1xf32>
    %96 = arith.subf %94, %95 : vector<8x1xf32>
    %cst_45 = arith.constant 0.000000e+00 : f32
    %97 = vector.broadcast %cst_45 : f32 to vector<8x1xf32>
    %98 = arith.maximumf %96, %97 : vector<8x1xf32>
    %99 = vector.broadcast %89 : vector<8x1xf32> to vector<8x32xf32>
    %100 = arith.subf %85, %99 : vector<8x32xf32>
    %cst_46 = arith.constant 9.99999974E-6 : f32
    %101 = vector.broadcast %cst_46 : f32 to vector<8x1xf32>
    %102 = arith.addf %98, %101 : vector<8x1xf32>
    %103 = math.rsqrt %102 : vector<8x1xf32>
    %104 = vector.broadcast %103 : vector<8x1xf32> to vector<8x32xf32>
    %105 = arith.mulf %100, %104 : vector<8x32xf32>
    %106 = vector.broadcast %4 : vector<1x32xf32> to vector<8x32xf32>
    %107 = arith.mulf %105, %106 : vector<8x32xf32>
    %108 = vector.broadcast %5 : vector<1x32xf32> to vector<8x32xf32>
    %109 = arith.addf %107, %108 : vector<8x32xf32>
    %110 = arith.truncf %109 : vector<8x32xf32> to vector<8x32xbf16>
    %cst_47 = arith.constant dense<0.000000e+00> : vector<16x32xf32>
    %111 = tpu.matmul %0, %110, %cst_47 {dimension_numbers = #tpu.dot_dimension_numbers<[1], [0], [0], [1], [0, 0, 1, 1], [], []>} : vector<16x8xbf16>, vector<8x32xbf16>, vector<16x32xf32> -> vector<16x32xf32>
    %112 = vector.broadcast %2 : vector<16x1xf32> to vector<16x32xf32>
    %113 = arith.addf %111, %112 : vector<16x32xf32>
    %cst_48 = arith.constant 5.000000e-01 : f32
    %114 = vector.broadcast %cst_48 : f32 to vector<16x32xf32>
    %115 = arith.mulf %114, %113 : vector<16x32xf32>
    %cst_49 = arith.constant 0.707106769 : f32
    %116 = vector.broadcast %cst_49 : f32 to vector<16x32xf32>
    %117 = arith.mulf %113, %116 : vector<16x32xf32>
    %118 = math.absf %117 : vector<16x32xf32>
    %cst_50 = arith.constant 0.327591091 : f32
    %119 = vector.broadcast %cst_50 : f32 to vector<16x32xf32>
    %120 = arith.mulf %119, %118 : vector<16x32xf32>
    %cst_51 = arith.constant 1.000000e+00 : f32
    %121 = vector.broadcast %cst_51 : f32 to vector<16x32xf32>
    %122 = arith.addf %121, %120 : vector<16x32xf32>
    %cst_52 = arith.constant 1.000000e+00 : f32
    %123 = vector.broadcast %cst_52 : f32 to vector<16x32xf32>
    %124 = arith.divf %123, %122 : vector<16x32xf32>
    %cst_53 = arith.constant 1.06140542 : f32
    %125 = vector.broadcast %cst_53 : f32 to vector<16x32xf32>
    %126 = arith.mulf %125, %124 : vector<16x32xf32>
    %cst_54 = arith.constant -1.45315206 : f32
    %127 = vector.broadcast %cst_54 : f32 to vector<16x32xf32>
    %128 = arith.addf %126, %127 : vector<16x32xf32>
    %129 = arith.mulf %128, %124 : vector<16x32xf32>
    %cst_55 = arith.constant 1.42141378 : f32
    %130 = vector.broadcast %cst_55 : f32 to vector<16x32xf32>
    %131 = arith.addf %129, %130 : vector<16x32xf32>
    %132 = arith.mulf %131, %124 : vector<16x32xf32>
    %cst_56 = arith.constant -0.284496725 : f32
    %133 = vector.broadcast %cst_56 : f32 to vector<16x32xf32>
    %134 = arith.addf %132, %133 : vector<16x32xf32>
    %135 = arith.mulf %134, %124 : vector<16x32xf32>
    %cst_57 = arith.constant 0.254829586 : f32
    %136 = vector.broadcast %cst_57 : f32 to vector<16x32xf32>
    %137 = arith.addf %135, %136 : vector<16x32xf32>
    %138 = arith.mulf %137, %124 : vector<16x32xf32>
    %139 = arith.mulf %118, %118 : vector<16x32xf32>
    %cst_58 = arith.constant 0.000000e+00 : f32
    %140 = vector.broadcast %cst_58 : f32 to vector<16x32xf32>
    %141 = arith.subf %140, %139 : vector<16x32xf32>
    %142 = math.exp %141 : vector<16x32xf32>
    %143 = arith.mulf %138, %142 : vector<16x32xf32>
    %cst_59 = arith.constant 1.000000e+00 : f32
    %144 = vector.broadcast %cst_59 : f32 to vector<16x32xf32>
    %145 = arith.subf %144, %143 : vector<16x32xf32>
    %cst_60 = arith.constant 0.000000e+00 : f32
    %146 = vector.broadcast %cst_60 : f32 to vector<16x32xf32>
    %147 = arith.cmpf olt, %117, %146 : vector<16x32xf32>
    %cst_61 = arith.constant 0.000000e+00 : f32
    %148 = vector.broadcast %cst_61 : f32 to vector<16x32xf32>
    %149 = arith.subf %148, %145 : vector<16x32xf32>
    %150 = arith.select %147, %149, %145 : vector<16x32xi1>, vector<16x32xf32>
    %cst_62 = arith.constant 1.000000e+00 : f32
    %151 = vector.broadcast %cst_62 : f32 to vector<16x32xf32>
    %152 = arith.addf %151, %150 : vector<16x32xf32>
    %153 = arith.mulf %115, %152 : vector<16x32xf32>
    %154 = arith.truncf %153 : vector<16x32xf32> to vector<16x32xbf16>
    %cst_63 = arith.constant dense<0.000000e+00> : vector<8x32xf32>
    %155 = tpu.matmul %1, %154, %cst_63 {dimension_numbers = #tpu.dot_dimension_numbers<[1], [0], [0], [1], [0, 0, 1, 1], [], []>} : vector<8x16xbf16>, vector<16x32xbf16>, vector<8x32xf32> -> vector<8x32xf32>
    %156 = arith.addf %85, %155 : vector<8x32xf32>
    %157 = vector.broadcast %3 : vector<8x1xf32> to vector<8x32xf32>
    %158 = arith.addf %156, %157 : vector<8x32xf32>
    %c1_64 = arith.constant 1 : index
    %c0_65 = arith.constant 0 : index
    %c0_66 = arith.constant 0 : index
    %159 = vector.load %arg14[%c1_64, %c0_65, %c0_66] : memref<4x8x32xf32, #tpu.memory_space<vmem>>, vector<1x8x32xf32>
    %160 = vector.shape_cast %159 : vector<1x8x32xf32> to vector<8x32xf32>
    %161 = vector.shape_cast %158 : vector<8x32xf32> to vector<1x8x32xf32>
    tpu.vector_store %arg14[%c1_64, %c0_65, %c0_66], %161 {strides = array<i32>} : memref<4x8x32xf32, #tpu.memory_space<vmem>>, vector<1x8x32xf32>,
    %c2 = arith.constant 2 : index
    %c0_67 = arith.constant 0 : index
    %c0_68 = arith.constant 0 : index
    %162 = vector.load %arg1[%c2, %c0_67, %c0_68] : memref<4x8x32xf32, #tpu.memory_space<vmem>>, vector<1x8x32xf32>
    %163 = vector.shape_cast %162 : vector<1x8x32xf32> to vector<8x32xf32>
    %cst_69 = arith.constant dense<0.000000e+00> : vector<8xf32>
    %164 = vector.multi_reduction <add>, %163, %cst_69 [1] : vector<8x32xf32> to vector<8xf32>
    %165 = vector.shape_cast %164 : vector<8xf32> to vector<8x1xf32>
    %cst_70 = arith.constant 3.125000e-02 : f32
    %166 = vector.broadcast %cst_70 : f32 to vector<8x1xf32>
    %167 = arith.mulf %165, %166 : vector<8x1xf32>
    %168 = arith.mulf %163, %163 : vector<8x32xf32>
    %cst_71 = arith.constant dense<0.000000e+00> : vector<8xf32>
    %169 = vector.multi_reduction <add>, %168, %cst_71 [1] : vector<8x32xf32> to vector<8xf32>
    %170 = vector.shape_cast %169 : vector<8xf32> to vector<8x1xf32>
    %cst_72 = arith.constant 3.125000e-02 : f32
    %171 = vector.broadcast %cst_72 : f32 to vector<8x1xf32>
    %172 = arith.mulf %170, %171 : vector<8x1xf32>
    %173 = arith.mulf %167, %167 : vector<8x1xf32>
    %174 = arith.subf %172, %173 : vector<8x1xf32>
    %cst_73 = arith.constant 0.000000e+00 : f32
    %175 = vector.broadcast %cst_73 : f32 to vector<8x1xf32>
    %176 = arith.maximumf %174, %175 : vector<8x1xf32>
    %177 = vector.broadcast %167 : vector<8x1xf32> to vector<8x32xf32>
    %178 = arith.subf %163, %177 : vector<8x32xf32>
    %cst_74 = arith.constant 9.99999974E-6 : f32
    %179 = vector.broadcast %cst_74 : f32 to vector<8x1xf32>
    %180 = arith.addf %176, %179 : vector<8x1xf32>
    %181 = math.rsqrt %180 : vector<8x1xf32>
    %182 = vector.broadcast %181 : vector<8x1xf32> to vector<8x32xf32>
    %183 = arith.mulf %178, %182 : vector<8x32xf32>
    %184 = vector.broadcast %4 : vector<1x32xf32> to vector<8x32xf32>
    %185 = arith.mulf %183, %184 : vector<8x32xf32>
    %186 = vector.broadcast %5 : vector<1x32xf32> to vector<8x32xf32>
    %187 = arith.addf %185, %186 : vector<8x32xf32>
    %188 = arith.truncf %187 : vector<8x32xf32> to vector<8x32xbf16>
    %cst_75 = arith.constant dense<0.000000e+00> : vector<16x32xf32>
    %189 = tpu.matmul %0, %188, %cst_75 {dimension_numbers = #tpu.dot_dimension_numbers<[1], [0], [0], [1], [0, 0, 1, 1], [], []>} : vector<16x8xbf16>, vector<8x32xbf16>, vector<16x32xf32> -> vector<16x32xf32>
    %190 = vector.broadcast %2 : vector<16x1xf32> to vector<16x32xf32>
    %191 = arith.addf %189, %190 : vector<16x32xf32>
    %cst_76 = arith.constant 5.000000e-01 : f32
    %192 = vector.broadcast %cst_76 : f32 to vector<16x32xf32>
    %193 = arith.mulf %192, %191 : vector<16x32xf32>
    %cst_77 = arith.constant 0.707106769 : f32
    %194 = vector.broadcast %cst_77 : f32 to vector<16x32xf32>
    %195 = arith.mulf %191, %194 : vector<16x32xf32>
    %196 = math.absf %195 : vector<16x32xf32>
    %cst_78 = arith.constant 0.327591091 : f32
    %197 = vector.broadcast %cst_78 : f32 to vector<16x32xf32>
    %198 = arith.mulf %197, %196 : vector<16x32xf32>
    %cst_79 = arith.constant 1.000000e+00 : f32
    %199 = vector.broadcast %cst_79 : f32 to vector<16x32xf32>
    %200 = arith.addf %199, %198 : vector<16x32xf32>
    %cst_80 = arith.constant 1.000000e+00 : f32
    %201 = vector.broadcast %cst_80 : f32 to vector<16x32xf32>
    %202 = arith.divf %201, %200 : vector<16x32xf32>
    %cst_81 = arith.constant 1.06140542 : f32
    %203 = vector.broadcast %cst_81 : f32 to vector<16x32xf32>
    %204 = arith.mulf %203, %202 : vector<16x32xf32>
    %cst_82 = arith.constant -1.45315206 : f32
    %205 = vector.broadcast %cst_82 : f32 to vector<16x32xf32>
    %206 = arith.addf %204, %205 : vector<16x32xf32>
    %207 = arith.mulf %206, %202 : vector<16x32xf32>
    %cst_83 = arith.constant 1.42141378 : f32
    %208 = vector.broadcast %cst_83 : f32 to vector<16x32xf32>
    %209 = arith.addf %207, %208 : vector<16x32xf32>
    %210 = arith.mulf %209, %202 : vector<16x32xf32>
    %cst_84 = arith.constant -0.284496725 : f32
    %211 = vector.broadcast %cst_84 : f32 to vector<16x32xf32>
    %212 = arith.addf %210, %211 : vector<16x32xf32>
    %213 = arith.mulf %212, %202 : vector<16x32xf32>
    %cst_85 = arith.constant 0.254829586 : f32
    %214 = vector.broadcast %cst_85 : f32 to vector<16x32xf32>
    %215 = arith.addf %213, %214 : vector<16x32xf32>
    %216 = arith.mulf %215, %202 : vector<16x32xf32>
    %217 = arith.mulf %196, %196 : vector<16x32xf32>
    %cst_86 = arith.constant 0.000000e+00 : f32
    %218 = vector.broadcast %cst_86 : f32 to vector<16x32xf32>
    %219 = arith.subf %218, %217 : vector<16x32xf32>
    %220 = math.exp %219 : vector<16x32xf32>
    %221 = arith.mulf %216, %220 : vector<16x32xf32>
    %cst_87 = arith.constant 1.000000e+00 : f32
    %222 = vector.broadcast %cst_87 : f32 to vector<16x32xf32>
    %223 = arith.subf %222, %221 : vector<16x32xf32>
    %cst_88 = arith.constant 0.000000e+00 : f32
    %224 = vector.broadcast %cst_88 : f32 to vector<16x32xf32>
    %225 = arith.cmpf olt, %195, %224 : vector<16x32xf32>
    %cst_89 = arith.constant 0.000000e+00 : f32
    %226 = vector.broadcast %cst_89 : f32 to vector<16x32xf32>
    %227 = arith.subf %226, %223 : vector<16x32xf32>
    %228 = arith.select %225, %227, %223 : vector<16x32xi1>, vector<16x32xf32>
    %cst_90 = arith.constant 1.000000e+00 : f32
    %229 = vector.broadcast %cst_90 : f32 to vector<16x32xf32>
    %230 = arith.addf %229, %228 : vector<16x32xf32>
    %231 = arith.mulf %193, %230 : vector<16x32xf32>
    %232 = arith.truncf %231 : vector<16x32xf32> to vector<16x32xbf16>
    %cst_91 = arith.constant dense<0.000000e+00> : vector<8x32xf32>
    %233 = tpu.matmul %1, %232, %cst_91 {dimension_numbers = #tpu.dot_dimension_numbers<[1], [0], [0], [1], [0, 0, 1, 1], [], []>} : vector<8x16xbf16>, vector<16x32xbf16>, vector<8x32xf32> -> vector<8x32xf32>
    %234 = arith.addf %163, %233 : vector<8x32xf32>
    %235 = vector.broadcast %3 : vector<8x1xf32> to vector<8x32xf32>
    %236 = arith.addf %234, %235 : vector<8x32xf32>
    %c2_92 = arith.constant 2 : index
    %c0_93 = arith.constant 0 : index
    %c0_94 = arith.constant 0 : index
    %237 = vector.load %arg14[%c2_92, %c0_93, %c0_94] : memref<4x8x32xf32, #tpu.memory_space<vmem>>, vector<1x8x32xf32>
    %238 = vector.shape_cast %237 : vector<1x8x32xf32> to vector<8x32xf32>
    %239 = vector.shape_cast %236 : vector<8x32xf32> to vector<1x8x32xf32>
    tpu.vector_store %arg14[%c2_92, %c0_93, %c0_94], %239 {strides = array<i32>} : memref<4x8x32xf32, #tpu.memory_space<vmem>>, vector<1x8x32xf32>,
    %c3 = arith.constant 3 : index
    %c0_95 = arith.constant 0 : index
    %c0_96 = arith.constant 0 : index
    %240 = vector.load %arg1[%c3, %c0_95, %c0_96] : memref<4x8x32xf32, #tpu.memory_space<vmem>>, vector<1x8x32xf32>
    %241 = vector.shape_cast %240 : vector<1x8x32xf32> to vector<8x32xf32>
    %cst_97 = arith.constant dense<0.000000e+00> : vector<8xf32>
    %242 = vector.multi_reduction <add>, %241, %cst_97 [1] : vector<8x32xf32> to vector<8xf32>
    %243 = vector.shape_cast %242 : vector<8xf32> to vector<8x1xf32>
    %cst_98 = arith.constant 3.125000e-02 : f32
    %244 = vector.broadcast %cst_98 : f32 to vector<8x1xf32>
    %245 = arith.mulf %243, %244 : vector<8x1xf32>
    %246 = arith.mulf %241, %241 : vector<8x32xf32>
    %cst_99 = arith.constant dense<0.000000e+00> : vector<8xf32>
    %247 = vector.multi_reduction <add>, %246, %cst_99 [1] : vector<8x32xf32> to vector<8xf32>
    %248 = vector.shape_cast %247 : vector<8xf32> to vector<8x1xf32>
    %cst_100 = arith.constant 3.125000e-02 : f32
    %249 = vector.broadcast %cst_100 : f32 to vector<8x1xf32>
    %250 = arith.mulf %248, %249 : vector<8x1xf32>
    %251 = arith.mulf %245, %245 : vector<8x1xf32>
    %252 = arith.subf %250, %251 : vector<8x1xf32>
    %cst_101 = arith.constant 0.000000e+00 : f32
    %253 = vector.broadcast %cst_101 : f32 to vector<8x1xf32>
    %254 = arith.maximumf %252, %253 : vector<8x1xf32>
    %255 = vector.broadcast %245 : vector<8x1xf32> to vector<8x32xf32>
    %256 = arith.subf %241, %255 : vector<8x32xf32>
    %cst_102 = arith.constant 9.99999974E-6 : f32
    %257 = vector.broadcast %cst_102 : f32 to vector<8x1xf32>
    %258 = arith.addf %254, %257 : vector<8x1xf32>
    %259 = math.rsqrt %258 : vector<8x1xf32>
    %260 = vector.broadcast %259 : vector<8x1xf32> to vector<8x32xf32>
    %261 = arith.mulf %256, %260 : vector<8x32xf32>
    %262 = vector.broadcast %4 : vector<1x32xf32> to vector<8x32xf32>
    %263 = arith.mulf %261, %262 : vector<8x32xf32>
    %264 = vector.broadcast %5 : vector<1x32xf32> to vector<8x32xf32>
    %265 = arith.addf %263, %264 : vector<8x32xf32>
    %266 = arith.truncf %265 : vector<8x32xf32> to vector<8x32xbf16>
    %cst_103 = arith.constant dense<0.000000e+00> : vector<16x32xf32>
    %267 = tpu.matmul %0, %266, %cst_103 {dimension_numbers = #tpu.dot_dimension_numbers<[1], [0], [0], [1], [0, 0, 1, 1], [], []>} : vector<16x8xbf16>, vector<8x32xbf16>, vector<16x32xf32> -> vector<16x32xf32>
    %268 = vector.broadcast %2 : vector<16x1xf32> to vector<16x32xf32>
    %269 = arith.addf %267, %268 : vector<16x32xf32>
    %cst_104 = arith.constant 5.000000e-01 : f32
    %270 = vector.broadcast %cst_104 : f32 to vector<16x32xf32>
    %271 = arith.mulf %270, %269 : vector<16x32xf32>
    %cst_105 = arith.constant 0.707106769 : f32
    %272 = vector.broadcast %cst_105 : f32 to vector<16x32xf32>
    %273 = arith.mulf %269, %272 : vector<16x32xf32>
    %274 = math.absf %273 : vector<16x32xf32>
    %cst_106 = arith.constant 0.327591091 : f32
    %275 = vector.broadcast %cst_106 : f32 to vector<16x32xf32>
    %276 = arith.mulf %275, %274 : vector<16x32xf32>
    %cst_107 = arith.constant 1.000000e+00 : f32
    %277 = vector.broadcast %cst_107 : f32 to vector<16x32xf32>
    %278 = arith.addf %277, %276 : vector<16x32xf32>
    %cst_108 = arith.constant 1.000000e+00 : f32
    %279 = vector.broadcast %cst_108 : f32 to vector<16x32xf32>
    %280 = arith.divf %279, %278 : vector<16x32xf32>
    %cst_109 = arith.constant 1.06140542 : f32
    %281 = vector.broadcast %cst_109 : f32 to vector<16x32xf32>
    %282 = arith.mulf %281, %280 : vector<16x32xf32>
    %cst_110 = arith.constant -1.45315206 : f32
    %283 = vector.broadcast %cst_110 : f32 to vector<16x32xf32>
    %284 = arith.addf %282, %283 : vector<16x32xf32>
    %285 = arith.mulf %284, %280 : vector<16x32xf32>
    %cst_111 = arith.constant 1.42141378 : f32
    %286 = vector.broadcast %cst_111 : f32 to vector<16x32xf32>
    %287 = arith.addf %285, %286 : vector<16x32xf32>
    %288 = arith.mulf %287, %280 : vector<16x32xf32>
    %cst_112 = arith.constant -0.284496725 : f32
    %289 = vector.broadcast %cst_112 : f32 to vector<16x32xf32>
    %290 = arith.addf %288, %289 : vector<16x32xf32>
    %291 = arith.mulf %290, %280 : vector<16x32xf32>
    %cst_113 = arith.constant 0.254829586 : f32
    %292 = vector.broadcast %cst_113 : f32 to vector<16x32xf32>
    %293 = arith.addf %291, %292 : vector<16x32xf32>
    %294 = arith.mulf %293, %280 : vector<16x32xf32>
    %295 = arith.mulf %274, %274 : vector<16x32xf32>
    %cst_114 = arith.constant 0.000000e+00 : f32
    %296 = vector.broadcast %cst_114 : f32 to vector<16x32xf32>
    %297 = arith.subf %296, %295 : vector<16x32xf32>
    %298 = math.exp %297 : vector<16x32xf32>
    %299 = arith.mulf %294, %298 : vector<16x32xf32>
    %cst_115 = arith.constant 1.000000e+00 : f32
    %300 = vector.broadcast %cst_115 : f32 to vector<16x32xf32>
    %301 = arith.subf %300, %299 : vector<16x32xf32>
    %cst_116 = arith.constant 0.000000e+00 : f32
    %302 = vector.broadcast %cst_116 : f32 to vector<16x32xf32>
    %303 = arith.cmpf olt, %273, %302 : vector<16x32xf32>
    %cst_117 = arith.constant 0.000000e+00 : f32
    %304 = vector.broadcast %cst_117 : f32 to vector<16x32xf32>
    %305 = arith.subf %304, %301 : vector<16x32xf32>
    %306 = arith.select %303, %305, %301 : vector<16x32xi1>, vector<16x32xf32>
    %cst_118 = arith.constant 1.000000e+00 : f32
    %307 = vector.broadcast %cst_118 : f32 to vector<16x32xf32>
    %308 = arith.addf %307, %306 : vector<16x32xf32>
    %309 = arith.mulf %271, %308 : vector<16x32xf32>
    %310 = arith.truncf %309 : vector<16x32xf32> to vector<16x32xbf16>
    %cst_119 = arith.constant dense<0.000000e+00> : vector<8x32xf32>
    %311 = tpu.matmul %1, %310, %cst_119 {dimension_numbers = #tpu.dot_dimension_numbers<[1], [0], [0], [1], [0, 0, 1, 1], [], []>} : vector<8x16xbf16>, vector<16x32xbf16>, vector<8x32xf32> -> vector<8x32xf32>
    %312 = arith.addf %241, %311 : vector<8x32xf32>
    %313 = vector.broadcast %3 : vector<8x1xf32> to vector<8x32xf32>
    %314 = arith.addf %312, %313 : vector<8x32xf32>
    %c3_120 = arith.constant 3 : index
    %c0_121 = arith.constant 0 : index
    %c0_122 = arith.constant 0 : index
    %315 = vector.load %arg14[%c3_120, %c0_121, %c0_122] : memref<4x8x32xf32, #tpu.memory_space<vmem>>, vector<1x8x32xf32>
    %316 = vector.shape_cast %315 : vector<1x8x32xf32> to vector<8x32xf32>
    %317 = vector.shape_cast %314 : vector<8x32xf32> to vector<1x8x32xf32>
    tpu.vector_store %arg14[%c3_120, %c0_121, %c0_122], %317 {strides = array<i32>} : memref<4x8x32xf32, #tpu.memory_space<vmem>>, vector<1x8x32xf32>,
    %c0_123 = arith.constant 0 : index
    %c0_124 = arith.constant 0 : index
    %c0_125 = arith.constant 0 : index
    %318 = vector.load %arg14[%c0_123, %c0_124, %c0_125] : memref<4x8x32xf32, #tpu.memory_space<vmem>>, vector<4x8x32xf32>
    %319 = vector.shape_cast %318 : vector<4x8x32xf32> to vector<32x32xf32>
    %c0_126 = arith.constant 0 : index
    %c0_127 = arith.constant 0 : index
    %320 = vector.load %arg8[%c0_126, %c0_127] : memref<1x32xf32, #tpu.memory_space<vmem>>, vector<1x32xf32>
    %c0_128 = arith.constant 0 : index
    %c0_129 = arith.constant 0 : index
    %321 = vector.load %arg9[%c0_128, %c0_129] : memref<1x32xf32, #tpu.memory_space<vmem>>, vector<1x32xf32>
    %cst_130 = arith.constant dense<0.000000e+00> : vector<32xf32>
    %322 = vector.multi_reduction <add>, %319, %cst_130 [1] : vector<32x32xf32> to vector<32xf32>
    %323 = vector.shape_cast %322 : vector<32xf32> to vector<32x1xf32>
    %cst_131 = arith.constant 3.125000e-02 : f32
    %324 = vector.broadcast %cst_131 : f32 to vector<32x1xf32>
    %325 = arith.mulf %323, %324 : vector<32x1xf32>
    %326 = arith.mulf %319, %319 : vector<32x32xf32>
    %cst_132 = arith.constant dense<0.000000e+00> : vector<32xf32>
    %327 = vector.multi_reduction <add>, %326, %cst_132 [1] : vector<32x32xf32> to vector<32xf32>
    %328 = vector.shape_cast %327 : vector<32xf32> to vector<32x1xf32>
    %cst_133 = arith.constant 3.125000e-02 : f32
    %329 = vector.broadcast %cst_133 : f32 to vector<32x1xf32>
    %330 = arith.mulf %328, %329 : vector<32x1xf32>
    %331 = arith.mulf %325, %325 : vector<32x1xf32>
    %332 = arith.subf %330, %331 : vector<32x1xf32>
    %cst_134 = arith.constant 0.000000e+00 : f32
    %333 = vector.broadcast %cst_134 : f32 to vector<32x1xf32>
    %334 = arith.maximumf %332, %333 : vector<32x1xf32>
    %335 = vector.broadcast %325 : vector<32x1xf32> to vector<32x32xf32>
    %336 = arith.subf %319, %335 : vector<32x32xf32>
    %cst_135 = arith.constant 9.99999974E-6 : f32
    %337 = vector.broadcast %cst_135 : f32 to vector<32x1xf32>
    %338 = arith.addf %334, %337 : vector<32x1xf32>
    %339 = math.rsqrt %338 : vector<32x1xf32>
    %340 = vector.broadcast %339 : vector<32x1xf32> to vector<32x32xf32>
    %341 = arith.mulf %336, %340 : vector<32x32xf32>
    %342 = vector.broadcast %320 : vector<1x32xf32> to vector<32x32xf32>
    %343 = arith.mulf %341, %342 : vector<32x32xf32>
    %344 = vector.broadcast %321 : vector<1x32xf32> to vector<32x32xf32>
    %345 = arith.addf %343, %344 : vector<32x32xf32>
    %346 = arith.truncf %345 : vector<32x32xf32> to vector<32x32xbf16>
    %c0_136 = arith.constant 0 : index
    %c0_137 = arith.constant 0 : index
    %347 = vector.load %arg10[%c0_136, %c0_137] : memref<32x64xbf16, #tpu.memory_space<vmem>>, vector<32x64xbf16>
    %cst_138 = arith.constant dense<0.000000e+00> : vector<32x64xf32>
    %348 = tpu.matmul %346, %347, %cst_138 {dimension_numbers = #tpu.dot_dimension_numbers<[1], [0], [0], [1], [0, 0, 1, 1], [], []>} : vector<32x32xbf16>, vector<32x64xbf16>, vector<32x64xf32> -> vector<32x64xf32>
    %c0_139 = arith.constant 0 : index
    %c0_140 = arith.constant 0 : index
    %349 = vector.load %arg11[%c0_139, %c0_140] : memref<1x64xf32, #tpu.memory_space<vmem>>, vector<1x64xf32>
    %350 = vector.broadcast %349 : vector<1x64xf32> to vector<32x64xf32>
    %351 = arith.addf %348, %350 : vector<32x64xf32>
    %cst_141 = arith.constant 5.000000e-01 : f32
    %352 = vector.broadcast %cst_141 : f32 to vector<32x64xf32>
    %353 = arith.mulf %352, %351 : vector<32x64xf32>
    %cst_142 = arith.constant 0.707106769 : f32
    %354 = vector.broadcast %cst_142 : f32 to vector<32x64xf32>
    %355 = arith.mulf %351, %354 : vector<32x64xf32>
    %356 = math.absf %355 : vector<32x64xf32>
    %cst_143 = arith.constant 0.327591091 : f32
    %357 = vector.broadcast %cst_143 : f32 to vector<32x64xf32>
    %358 = arith.mulf %357, %356 : vector<32x64xf32>
    %cst_144 = arith.constant 1.000000e+00 : f32
    %359 = vector.broadcast %cst_144 : f32 to vector<32x64xf32>
    %360 = arith.addf %359, %358 : vector<32x64xf32>
    %cst_145 = arith.constant 1.000000e+00 : f32
    %361 = vector.broadcast %cst_145 : f32 to vector<32x64xf32>
    %362 = arith.divf %361, %360 : vector<32x64xf32>
    %cst_146 = arith.constant 1.06140542 : f32
    %363 = vector.broadcast %cst_146 : f32 to vector<32x64xf32>
    %364 = arith.mulf %363, %362 : vector<32x64xf32>
    %cst_147 = arith.constant -1.45315206 : f32
    %365 = vector.broadcast %cst_147 : f32 to vector<32x64xf32>
    %366 = arith.addf %364, %365 : vector<32x64xf32>
    %367 = arith.mulf %366, %362 : vector<32x64xf32>
    %cst_148 = arith.constant 1.42141378 : f32
    %368 = vector.broadcast %cst_148 : f32 to vector<32x64xf32>
    %369 = arith.addf %367, %368 : vector<32x64xf32>
    %370 = arith.mulf %369, %362 : vector<32x64xf32>
    %cst_149 = arith.constant -0.284496725 : f32
    %371 = vector.broadcast %cst_149 : f32 to vector<32x64xf32>
    %372 = arith.addf %370, %371 : vector<32x64xf32>
    %373 = arith.mulf %372, %362 : vector<32x64xf32>
    %cst_150 = arith.constant 0.254829586 : f32
    %374 = vector.broadcast %cst_150 : f32 to vector<32x64xf32>
    %375 = arith.addf %373, %374 : vector<32x64xf32>
    %376 = arith.mulf %375, %362 : vector<32x64xf32>
    %377 = arith.mulf %356, %356 : vector<32x64xf32>
    %cst_151 = arith.constant 0.000000e+00 : f32
    %378 = vector.broadcast %cst_151 : f32 to vector<32x64xf32>
    %379 = arith.subf %378, %377 : vector<32x64xf32>
    %380 = math.exp %379 : vector<32x64xf32>
    %381 = arith.mulf %376, %380 : vector<32x64xf32>
    %cst_152 = arith.constant 1.000000e+00 : f32
    %382 = vector.broadcast %cst_152 : f32 to vector<32x64xf32>
    %383 = arith.subf %382, %381 : vector<32x64xf32>
    %cst_153 = arith.constant 0.000000e+00 : f32
    %384 = vector.broadcast %cst_153 : f32 to vector<32x64xf32>
    %385 = arith.cmpf olt, %355, %384 : vector<32x64xf32>
    %cst_154 = arith.constant 0.000000e+00 : f32
    %386 = vector.broadcast %cst_154 : f32 to vector<32x64xf32>
    %387 = arith.subf %386, %383 : vector<32x64xf32>
    %388 = arith.select %385, %387, %383 : vector<32x64xi1>, vector<32x64xf32>
    %cst_155 = arith.constant 1.000000e+00 : f32
    %389 = vector.broadcast %cst_155 : f32 to vector<32x64xf32>
    %390 = arith.addf %389, %388 : vector<32x64xf32>
    %391 = arith.mulf %353, %390 : vector<32x64xf32>
    %392 = arith.truncf %391 : vector<32x64xf32> to vector<32x64xbf16>
    %c0_156 = arith.constant 0 : index
    %c0_157 = arith.constant 0 : index
    %393 = vector.load %arg12[%c0_156, %c0_157] : memref<64x32xbf16, #tpu.memory_space<vmem>>, vector<64x32xbf16>
    %cst_158 = arith.constant dense<0.000000e+00> : vector<32x32xf32>
    %394 = tpu.matmul %392, %393, %cst_158 {dimension_numbers = #tpu.dot_dimension_numbers<[1], [0], [0], [1], [0, 0, 1, 1], [], []>} : vector<32x64xbf16>, vector<64x32xbf16>, vector<32x32xf32> -> vector<32x32xf32>
    %395 = arith.addf %319, %394 : vector<32x32xf32>
    %c0_159 = arith.constant 0 : index
    %c0_160 = arith.constant 0 : index
    %396 = vector.load %arg13[%c0_159, %c0_160] : memref<1x32xf32, #tpu.memory_space<vmem>>, vector<1x32xf32>
    %397 = vector.broadcast %396 : vector<1x32xf32> to vector<32x32xf32>
    %398 = arith.addf %395, %397 : vector<32x32xf32>
    %399 = vector.shape_cast %398 : vector<32x32xf32> to vector<4x8x32xf32>
    %c0_161 = arith.constant 0 : index
    %c0_162 = arith.constant 0 : index
    %c0_163 = arith.constant 0 : index
    %400 = vector.load %arg14[%c0_161, %c0_162, %c0_163] : memref<4x8x32xf32, #tpu.memory_space<vmem>>, vector<4x8x32xf32>
    tpu.vector_store %arg14[%c0_161, %c0_162, %c0_163], %399 {strides = array<i32>} : memref<4x8x32xf32, #tpu.memory_space<vmem>>, vector<4x8x32xf32>,
    return
  }
  func.func @transform_0(%arg0: i32) -> (i32, i32, i32) {
    %c0_i32 = arith.constant 0 : i32
    %c0_i32_0 = arith.constant 0 : i32
    %c0_i32_1 = arith.constant 0 : i32
    return %arg0, %c0_i32, %c0_i32_0 : i32, i32, i32
  }
  func.func @transform_1(%arg0: i32) -> (i32, i32) {
    %c0_i32 = arith.constant 0 : i32
    %c0_i32_0 = arith.constant 0 : i32
    %c0_i32_1 = arith.constant 0 : i32
    return %c0_i32, %c0_i32_0 : i32, i32
  }
  func.func @transform_2(%arg0: i32) -> (i32, i32) {
    %c0_i32 = arith.constant 0 : i32
    %c0_i32_0 = arith.constant 0 : i32
    %c0_i32_1 = arith.constant 0 : i32
    return %c0_i32, %c0_i32_0 : i32, i32
  }
  func.func @transform_3(%arg0: i32) -> (i32, i32) {
    %c0_i32 = arith.constant 0 : i32
    %c0_i32_0 = arith.constant 0 : i32
    %c0_i32_1 = arith.constant 0 : i32
    return %c0_i32, %c0_i32_0 : i32, i32
  }
  func.func @transform_4(%arg0: i32) -> (i32, i32) {
    %c0_i32 = arith.constant 0 : i32
    %c0_i32_0 = arith.constant 0 : i32
    %c0_i32_1 = arith.constant 0 : i32
    return %c0_i32, %c0_i32_0 : i32, i32
  }
  func.func @transform_5(%arg0: i32) -> (i32, i32) {
    %c0_i32 = arith.constant 0 : i32
    %c0_i32_0 = arith.constant 0 : i32
    %c0_i32_1 = arith.constant 0 : i32
    return %c0_i32, %c0_i32_0 : i32, i32
  }
  func.func @transform_6(%arg0: i32) -> (i32, i32) {
    %c0_i32 = arith.constant 0 : i32
    %c0_i32_0 = arith.constant 0 : i32
    %c0_i32_1 = arith.constant 0 : i32
    return %c0_i32, %c0_i32_0 : i32, i32
  }
  func.func @transform_7(%arg0: i32) -> (i32, i32) {
    %c0_i32 = arith.constant 0 : i32
    %c0_i32_0 = arith.constant 0 : i32
    %c0_i32_1 = arith.constant 0 : i32
    return %c0_i32, %c0_i32_0 : i32, i32
  }
  func.func @transform_8(%arg0: i32) -> (i32, i32) {
    %c0_i32 = arith.constant 0 : i32
    %c0_i32_0 = arith.constant 0 : i32
    %c0_i32_1 = arith.constant 0 : i32
    return %c0_i32, %c0_i32_0 : i32, i32
  }
  func.func @transform_9(%arg0: i32) -> (i32, i32) {
    %c0_i32 = arith.constant 0 : i32
    %c0_i32_0 = arith.constant 0 : i32
    %c0_i32_1 = arith.constant 0 : i32
    return %c0_i32, %c0_i32_0 : i32, i32
  }
  func.func @transform_10(%arg0: i32) -> (i32, i32) {
    %c0_i32 = arith.constant 0 : i32
    %c0_i32_0 = arith.constant 0 : i32
    %c0_i32_1 = arith.constant 0 : i32
    return %c0_i32, %c0_i32_0 : i32, i32
  }
  func.func @transform_11(%arg0: i32) -> (i32, i32) {
    %c0_i32 = arith.constant 0 : i32
    %c0_i32_0 = arith.constant 0 : i32
    %c0_i32_1 = arith.constant 0 : i32
    return %c0_i32, %c0_i32_0 : i32, i32
  }
  func.func @transform_12(%arg0: i32) -> (i32, i32) {
    %c0_i32 = arith.constant 0 : i32
    %c0_i32_0 = arith.constant 0 : i32
    %c0_i32_1 = arith.constant 0 : i32
    return %c0_i32, %c0_i32_0 : i32, i32
  }
  func.func @transform_13(%arg0: i32) -> (i32, i32, i32) {
    %c0_i32 = arith.constant 0 : i32
    %c0_i32_0 = arith.constant 0 : i32
    %c0_i32_1 = arith.constant 0 : i32
    return %arg0, %c0_i32, %c0_i32_0 : i32, i32, i32
  }
}

module attributes {stable_mosaic.version = 11 : i64} {
  func.func @_mixer_block_kernel(%arg0: i32, %arg1: memref<4x8x32xf32, #tpu.memory_space<vmem>>, %arg2: memref<1x32xf32, #tpu.memory_space<vmem>>, %arg3: memref<1x32xf32, #tpu.memory_space<vmem>>, %arg4: memref<16x8xbf16, #tpu.memory_space<vmem>>, %arg5: memref<16x1xf32, #tpu.memory_space<vmem>>, %arg6: memref<8x16xbf16, #tpu.memory_space<vmem>>, %arg7: memref<8x1xf32, #tpu.memory_space<vmem>>, %arg8: memref<1x32xf32, #tpu.memory_space<vmem>>, %arg9: memref<1x32xf32, #tpu.memory_space<vmem>>, %arg10: memref<32x64xbf16, #tpu.memory_space<vmem>>, %arg11: memref<1x64xf32, #tpu.memory_space<vmem>>, %arg12: memref<64x32xbf16, #tpu.memory_space<vmem>>, %arg13: memref<1x32xf32, #tpu.memory_space<vmem>>, %arg14: memref<4x8x32xf32, #tpu.memory_space<vmem>>) attributes {dimension_semantics = [#tpu.dimension_semantics<parallel>], iteration_bounds = array<i64: 2>, scalar_prefetch = 0 : i64, scratch_operands = 0 : i64, tpu.core_type = #tpu.core_type<tc>, window_params = [{transform_indices = @transform_0, window_bounds = array<i64: 4, 8, 32>}, {pipeline_mode = #tpu.pipeline_mode<synchronous>, transform_indices = @transform_1, window_bounds = array<i64: 1, 32>}, {pipeline_mode = #tpu.pipeline_mode<synchronous>, transform_indices = @transform_2, window_bounds = array<i64: 1, 32>}, {pipeline_mode = #tpu.pipeline_mode<synchronous>, transform_indices = @transform_3, window_bounds = array<i64: 16, 8>}, {pipeline_mode = #tpu.pipeline_mode<synchronous>, transform_indices = @transform_4, window_bounds = array<i64: 16, 1>}, {pipeline_mode = #tpu.pipeline_mode<synchronous>, transform_indices = @transform_5, window_bounds = array<i64: 8, 16>}, {pipeline_mode = #tpu.pipeline_mode<synchronous>, transform_indices = @transform_6, window_bounds = array<i64: 8, 1>}, {pipeline_mode = #tpu.pipeline_mode<synchronous>, transform_indices = @transform_7, window_bounds = array<i64: 1, 32>}, {pipeline_mode = #tpu.pipeline_mode<synchronous>, transform_indices = @transform_8, window_bounds = array<i64: 1, 32>}, {pipeline_mode = #tpu.pipeline_mode<synchronous>, transform_indices = @transform_9, window_bounds = array<i64: 32, 64>}, {pipeline_mode = #tpu.pipeline_mode<synchronous>, transform_indices = @transform_10, window_bounds = array<i64: 1, 64>}, {pipeline_mode = #tpu.pipeline_mode<synchronous>, transform_indices = @transform_11, window_bounds = array<i64: 64, 32>}, {pipeline_mode = #tpu.pipeline_mode<synchronous>, transform_indices = @transform_12, window_bounds = array<i64: 1, 32>}, {transform_indices = @transform_13, window_bounds = array<i64: 4, 8, 32>}]} {
    %c0 = arith.constant 0 : index
    %c0_0 = arith.constant 0 : index
    %0 = vector.load %arg4[%c0, %c0_0] : memref<16x8xbf16, #tpu.memory_space<vmem>>, vector<16x8xbf16>
    %c0_1 = arith.constant 0 : index
    %c0_2 = arith.constant 0 : index
    %1 = vector.load %arg6[%c0_1, %c0_2] : memref<8x16xbf16, #tpu.memory_space<vmem>>, vector<8x16xbf16>
    %c0_3 = arith.constant 0 : index
    %c0_4 = arith.constant 0 : index
    %2 = vector.load %arg5[%c0_3, %c0_4] : memref<16x1xf32, #tpu.memory_space<vmem>>, vector<16x1xf32>
    %c0_5 = arith.constant 0 : index
    %c0_6 = arith.constant 0 : index
    %3 = vector.load %arg7[%c0_5, %c0_6] : memref<8x1xf32, #tpu.memory_space<vmem>>, vector<8x1xf32>
    %c0_7 = arith.constant 0 : index
    %c0_8 = arith.constant 0 : index
    %4 = vector.load %arg2[%c0_7, %c0_8] : memref<1x32xf32, #tpu.memory_space<vmem>>, vector<1x32xf32>
    %c0_9 = arith.constant 0 : index
    %c0_10 = arith.constant 0 : index
    %5 = vector.load %arg3[%c0_9, %c0_10] : memref<1x32xf32, #tpu.memory_space<vmem>>, vector<1x32xf32>
    %c0_11 = arith.constant 0 : index
    %c0_12 = arith.constant 0 : index
    %c0_13 = arith.constant 0 : index
    %6 = vector.load %arg1[%c0_11, %c0_12, %c0_13] : memref<4x8x32xf32, #tpu.memory_space<vmem>>, vector<1x8x32xf32>
    %7 = vector.shape_cast %6 : vector<1x8x32xf32> to vector<8x32xf32>
    %cst = arith.constant dense<0.000000e+00> : vector<8xf32>
    %8 = vector.multi_reduction <add>, %7, %cst [1] : vector<8x32xf32> to vector<8xf32>
    %9 = vector.shape_cast %8 : vector<8xf32> to vector<8x1xf32>
    %cst_14 = arith.constant 3.125000e-02 : f32
    %10 = vector.broadcast %cst_14 : f32 to vector<8x1xf32>
    %11 = arith.mulf %9, %10 : vector<8x1xf32>
    %12 = arith.mulf %7, %7 : vector<8x32xf32>
    %cst_15 = arith.constant dense<0.000000e+00> : vector<8xf32>
    %13 = vector.multi_reduction <add>, %12, %cst_15 [1] : vector<8x32xf32> to vector<8xf32>
    %14 = vector.shape_cast %13 : vector<8xf32> to vector<8x1xf32>
    %cst_16 = arith.constant 3.125000e-02 : f32
    %15 = vector.broadcast %cst_16 : f32 to vector<8x1xf32>
    %16 = arith.mulf %14, %15 : vector<8x1xf32>
    %17 = arith.mulf %11, %11 : vector<8x1xf32>
    %18 = arith.subf %16, %17 : vector<8x1xf32>
    %cst_17 = arith.constant 0.000000e+00 : f32
    %19 = vector.broadcast %cst_17 : f32 to vector<8x1xf32>
    %20 = arith.maximumf %18, %19 : vector<8x1xf32>
    %21 = vector.broadcast %11 : vector<8x1xf32> to vector<8x32xf32>
    %22 = arith.subf %7, %21 : vector<8x32xf32>
    %cst_18 = arith.constant 9.99999974E-6 : f32
    %23 = vector.broadcast %cst_18 : f32 to vector<8x1xf32>
    %24 = arith.addf %20, %23 : vector<8x1xf32>
    %25 = math.rsqrt %24 : vector<8x1xf32>
    %26 = vector.broadcast %25 : vector<8x1xf32> to vector<8x32xf32>
    %27 = arith.mulf %22, %26 : vector<8x32xf32>
    %28 = vector.broadcast %4 : vector<1x32xf32> to vector<8x32xf32>
    %29 = arith.mulf %27, %28 : vector<8x32xf32>
    %30 = vector.broadcast %5 : vector<1x32xf32> to vector<8x32xf32>
    %31 = arith.addf %29, %30 : vector<8x32xf32>
    %32 = arith.truncf %31 : vector<8x32xf32> to vector<8x32xbf16>
    %cst_19 = arith.constant dense<0.000000e+00> : vector<16x32xf32>
    %33 = tpu.matmul %0, %32, %cst_19 {dimension_numbers = #tpu.dot_dimension_numbers<[1], [0], [0], [1], [0, 0, 1, 1], [], []>} : vector<16x8xbf16>, vector<8x32xbf16>, vector<16x32xf32> -> vector<16x32xf32>
    %34 = vector.broadcast %2 : vector<16x1xf32> to vector<16x32xf32>
    %35 = arith.addf %33, %34 : vector<16x32xf32>
    %cst_20 = arith.constant 5.000000e-01 : f32
    %36 = vector.broadcast %cst_20 : f32 to vector<16x32xf32>
    %37 = arith.mulf %36, %35 : vector<16x32xf32>
    %cst_21 = arith.constant 0.707106769 : f32
    %38 = vector.broadcast %cst_21 : f32 to vector<16x32xf32>
    %39 = arith.mulf %35, %38 : vector<16x32xf32>
    %40 = math.absf %39 : vector<16x32xf32>
    %cst_22 = arith.constant 0.327591091 : f32
    %41 = vector.broadcast %cst_22 : f32 to vector<16x32xf32>
    %42 = arith.mulf %41, %40 : vector<16x32xf32>
    %cst_23 = arith.constant 1.000000e+00 : f32
    %43 = vector.broadcast %cst_23 : f32 to vector<16x32xf32>
    %44 = arith.addf %43, %42 : vector<16x32xf32>
    %cst_24 = arith.constant 1.000000e+00 : f32
    %45 = vector.broadcast %cst_24 : f32 to vector<16x32xf32>
    %46 = arith.divf %45, %44 : vector<16x32xf32>
    %cst_25 = arith.constant 1.06140542 : f32
    %47 = vector.broadcast %cst_25 : f32 to vector<16x32xf32>
    %48 = arith.mulf %47, %46 : vector<16x32xf32>
    %cst_26 = arith.constant -1.45315206 : f32
    %49 = vector.broadcast %cst_26 : f32 to vector<16x32xf32>
    %50 = arith.addf %48, %49 : vector<16x32xf32>
    %51 = arith.mulf %50, %46 : vector<16x32xf32>
    %cst_27 = arith.constant 1.42141378 : f32
    %52 = vector.broadcast %cst_27 : f32 to vector<16x32xf32>
    %53 = arith.addf %51, %52 : vector<16x32xf32>
    %54 = arith.mulf %53, %46 : vector<16x32xf32>
    %cst_28 = arith.constant -0.284496725 : f32
    %55 = vector.broadcast %cst_28 : f32 to vector<16x32xf32>
    %56 = arith.addf %54, %55 : vector<16x32xf32>
    %57 = arith.mulf %56, %46 : vector<16x32xf32>
    %cst_29 = arith.constant 0.254829586 : f32
    %58 = vector.broadcast %cst_29 : f32 to vector<16x32xf32>
    %59 = arith.addf %57, %58 : vector<16x32xf32>
    %60 = arith.mulf %59, %46 : vector<16x32xf32>
    %61 = arith.mulf %40, %40 : vector<16x32xf32>
    %cst_30 = arith.constant 0.000000e+00 : f32
    %62 = vector.broadcast %cst_30 : f32 to vector<16x32xf32>
    %63 = arith.subf %62, %61 : vector<16x32xf32>
    %64 = math.exp %63 : vector<16x32xf32>
    %65 = arith.mulf %60, %64 : vector<16x32xf32>
    %cst_31 = arith.constant 1.000000e+00 : f32
    %66 = vector.broadcast %cst_31 : f32 to vector<16x32xf32>
    %67 = arith.subf %66, %65 : vector<16x32xf32>
    %cst_32 = arith.constant 0.000000e+00 : f32
    %68 = vector.broadcast %cst_32 : f32 to vector<16x32xf32>
    %69 = arith.cmpf olt, %39, %68 : vector<16x32xf32>
    %cst_33 = arith.constant 0.000000e+00 : f32
    %70 = vector.broadcast %cst_33 : f32 to vector<16x32xf32>
    %71 = arith.subf %70, %67 : vector<16x32xf32>
    %72 = arith.select %69, %71, %67 : vector<16x32xi1>, vector<16x32xf32>
    %cst_34 = arith.constant 1.000000e+00 : f32
    %73 = vector.broadcast %cst_34 : f32 to vector<16x32xf32>
    %74 = arith.addf %73, %72 : vector<16x32xf32>
    %75 = arith.mulf %37, %74 : vector<16x32xf32>
    %76 = arith.truncf %75 : vector<16x32xf32> to vector<16x32xbf16>
    %cst_35 = arith.constant dense<0.000000e+00> : vector<8x32xf32>
    %77 = tpu.matmul %1, %76, %cst_35 {dimension_numbers = #tpu.dot_dimension_numbers<[1], [0], [0], [1], [0, 0, 1, 1], [], []>} : vector<8x16xbf16>, vector<16x32xbf16>, vector<8x32xf32> -> vector<8x32xf32>
    %78 = arith.addf %7, %77 : vector<8x32xf32>
    %79 = vector.broadcast %3 : vector<8x1xf32> to vector<8x32xf32>
    %80 = arith.addf %78, %79 : vector<8x32xf32>
    %c0_36 = arith.constant 0 : index
    %c0_37 = arith.constant 0 : index
    %c0_38 = arith.constant 0 : index
    %81 = vector.load %arg14[%c0_36, %c0_37, %c0_38] : memref<4x8x32xf32, #tpu.memory_space<vmem>>, vector<1x8x32xf32>
    %82 = vector.shape_cast %81 : vector<1x8x32xf32> to vector<8x32xf32>
    %83 = vector.shape_cast %80 : vector<8x32xf32> to vector<1x8x32xf32>
    tpu.vector_store %arg14[%c0_36, %c0_37, %c0_38], %83 {strides = array<i32>} : memref<4x8x32xf32, #tpu.memory_space<vmem>>, vector<1x8x32xf32>,
    %c1 = arith.constant 1 : index
    %c0_39 = arith.constant 0 : index
    %c0_40 = arith.constant 0 : index
    %84 = vector.load %arg1[%c1, %c0_39, %c0_40] : memref<4x8x32xf32, #tpu.memory_space<vmem>>, vector<1x8x32xf32>
    %85 = vector.shape_cast %84 : vector<1x8x32xf32> to vector<8x32xf32>
    %cst_41 = arith.constant dense<0.000000e+00> : vector<8xf32>
    %86 = vector.multi_reduction <add>, %85, %cst_41 [1] : vector<8x32xf32> to vector<8xf32>
    %87 = vector.shape_cast %86 : vector<8xf32> to vector<8x1xf32>
    %cst_42 = arith.constant 3.125000e-02 : f32
    %88 = vector.broadcast %cst_42 : f32 to vector<8x1xf32>
    %89 = arith.mulf %87, %88 : vector<8x1xf32>
    %90 = arith.mulf %85, %85 : vector<8x32xf32>
    %cst_43 = arith.constant dense<0.000000e+00> : vector<8xf32>
    %91 = vector.multi_reduction <add>, %90, %cst_43 [1] : vector<8x32xf32> to vector<8xf32>
    %92 = vector.shape_cast %91 : vector<8xf32> to vector<8x1xf32>
    %cst_44 = arith.constant 3.125000e-02 : f32
    %93 = vector.broadcast %cst_44 : f32 to vector<8x1xf32>
    %94 = arith.mulf %92, %93 : vector<8x1xf32>
    %95 = arith.mulf %89, %89 : vector<8x1xf32>
    %96 = arith.subf %94, %95 : vector<8x1xf32>
    %cst_45 = arith.constant 0.000000e+00 : f32
    %97 = vector.broadcast %cst_45 : f32 to vector<8x1xf32>
    %98 = arith.maximumf %96, %97 : vector<8x1xf32>
    %99 = vector.broadcast %89 : vector<8x1xf32> to vector<8x32xf32>
    %100 = arith.subf %85, %99 : vector<8x32xf32>
    %cst_46 = arith.constant 9.99999974E-6 : f32
    %101 = vector.broadcast %cst_46 : f32 to vector<8x1xf32>
    %102 = arith.addf %98, %101 : vector<8x1xf32>
    %103 = math.rsqrt %102 : vector<8x1xf32>
    %104 = vector.broadcast %103 : vector<8x1xf32> to vector<8x32xf32>
    %105 = arith.mulf %100, %104 : vector<8x32xf32>
    %106 = vector.broadcast %4 : vector<1x32xf32> to vector<8x32xf32>
    %107 = arith.mulf %105, %106 : vector<8x32xf32>
    %108 = vector.broadcast %5 : vector<1x32xf32> to vector<8x32xf32>
    %109 = arith.addf %107, %108 : vector<8x32xf32>
    %110 = arith.truncf %109 : vector<8x32xf32> to vector<8x32xbf16>
    %cst_47 = arith.constant dense<0.000000e+00> : vector<16x32xf32>
    %111 = tpu.matmul %0, %110, %cst_47 {dimension_numbers = #tpu.dot_dimension_numbers<[1], [0], [0], [1], [0, 0, 1, 1], [], []>} : vector<16x8xbf16>, vector<8x32xbf16>, vector<16x32xf32> -> vector<16x32xf32>
    %112 = vector.broadcast %2 : vector<16x1xf32> to vector<16x32xf32>
    %113 = arith.addf %111, %112 : vector<16x32xf32>
    %cst_48 = arith.constant 5.000000e-01 : f32
    %114 = vector.broadcast %cst_48 : f32 to vector<16x32xf32>
    %115 = arith.mulf %114, %113 : vector<16x32xf32>
    %cst_49 = arith.constant 0.707106769 : f32
    %116 = vector.broadcast %cst_49 : f32 to vector<16x32xf32>
    %117 = arith.mulf %113, %116 : vector<16x32xf32>
    %118 = math.absf %117 : vector<16x32xf32>
    %cst_50 = arith.constant 0.327591091 : f32
    %119 = vector.broadcast %cst_50 : f32 to vector<16x32xf32>
    %120 = arith.mulf %119, %118 : vector<16x32xf32>
    %cst_51 = arith.constant 1.000000e+00 : f32
    %121 = vector.broadcast %cst_51 : f32 to vector<16x32xf32>
    %122 = arith.addf %121, %120 : vector<16x32xf32>
    %cst_52 = arith.constant 1.000000e+00 : f32
    %123 = vector.broadcast %cst_52 : f32 to vector<16x32xf32>
    %124 = arith.divf %123, %122 : vector<16x32xf32>
    %cst_53 = arith.constant 1.06140542 : f32
    %125 = vector.broadcast %cst_53 : f32 to vector<16x32xf32>
    %126 = arith.mulf %125, %124 : vector<16x32xf32>
    %cst_54 = arith.constant -1.45315206 : f32
    %127 = vector.broadcast %cst_54 : f32 to vector<16x32xf32>
    %128 = arith.addf %126, %127 : vector<16x32xf32>
    %129 = arith.mulf %128, %124 : vector<16x32xf32>
    %cst_55 = arith.constant 1.42141378 : f32
    %130 = vector.broadcast %cst_55 : f32 to vector<16x32xf32>
    %131 = arith.addf %129, %130 : vector<16x32xf32>
    %132 = arith.mulf %131, %124 : vector<16x32xf32>
    %cst_56 = arith.constant -0.284496725 : f32
    %133 = vector.broadcast %cst_56 : f32 to vector<16x32xf32>
    %134 = arith.addf %132, %133 : vector<16x32xf32>
    %135 = arith.mulf %134, %124 : vector<16x32xf32>
    %cst_57 = arith.constant 0.254829586 : f32
    %136 = vector.broadcast %cst_57 : f32 to vector<16x32xf32>
    %137 = arith.addf %135, %136 : vector<16x32xf32>
    %138 = arith.mulf %137, %124 : vector<16x32xf32>
    %139 = arith.mulf %118, %118 : vector<16x32xf32>
    %cst_58 = arith.constant 0.000000e+00 : f32
    %140 = vector.broadcast %cst_58 : f32 to vector<16x32xf32>
    %141 = arith.subf %140, %139 : vector<16x32xf32>
    %142 = math.exp %141 : vector<16x32xf32>
    %143 = arith.mulf %138, %142 : vector<16x32xf32>
    %cst_59 = arith.constant 1.000000e+00 : f32
    %144 = vector.broadcast %cst_59 : f32 to vector<16x32xf32>
    %145 = arith.subf %144, %143 : vector<16x32xf32>
    %cst_60 = arith.constant 0.000000e+00 : f32
    %146 = vector.broadcast %cst_60 : f32 to vector<16x32xf32>
    %147 = arith.cmpf olt, %117, %146 : vector<16x32xf32>
    %cst_61 = arith.constant 0.000000e+00 : f32
    %148 = vector.broadcast %cst_61 : f32 to vector<16x32xf32>
    %149 = arith.subf %148, %145 : vector<16x32xf32>
    %150 = arith.select %147, %149, %145 : vector<16x32xi1>, vector<16x32xf32>
    %cst_62 = arith.constant 1.000000e+00 : f32
    %151 = vector.broadcast %cst_62 : f32 to vector<16x32xf32>
    %152 = arith.addf %151, %150 : vector<16x32xf32>
    %153 = arith.mulf %115, %152 : vector<16x32xf32>
    %154 = arith.truncf %153 : vector<16x32xf32> to vector<16x32xbf16>
    %cst_63 = arith.constant dense<0.000000e+00> : vector<8x32xf32>
    %155 = tpu.matmul %1, %154, %cst_63 {dimension_numbers = #tpu.dot_dimension_numbers<[1], [0], [0], [1], [0, 0, 1, 1], [], []>} : vector<8x16xbf16>, vector<16x32xbf16>, vector<8x32xf32> -> vector<8x32xf32>
    %156 = arith.addf %85, %155 : vector<8x32xf32>
    %157 = vector.broadcast %3 : vector<8x1xf32> to vector<8x32xf32>
    %158 = arith.addf %156, %157 : vector<8x32xf32>
    %c1_64 = arith.constant 1 : index
    %c0_65 = arith.constant 0 : index
    %c0_66 = arith.constant 0 : index
    %159 = vector.load %arg14[%c1_64, %c0_65, %c0_66] : memref<4x8x32xf32, #tpu.memory_space<vmem>>, vector<1x8x32xf32>
    %160 = vector.shape_cast %159 : vector<1x8x32xf32> to vector<8x32xf32>
    %161 = vector.shape_cast %158 : vector<8x32xf32> to vector<1x8x32xf32>
    tpu.vector_store %arg14[%c1_64, %c0_65, %c0_66], %161 {strides = array<i32>} : memref<4x8x32xf32, #tpu.memory_space<vmem>>, vector<1x8x32xf32>,
    %c2 = arith.constant 2 : index
    %c0_67 = arith.constant 0 : index
    %c0_68 = arith.constant 0 : index
    %162 = vector.load %arg1[%c2, %c0_67, %c0_68] : memref<4x8x32xf32, #tpu.memory_space<vmem>>, vector<1x8x32xf32>
    %163 = vector.shape_cast %162 : vector<1x8x32xf32> to vector<8x32xf32>
    %cst_69 = arith.constant dense<0.000000e+00> : vector<8xf32>
    %164 = vector.multi_reduction <add>, %163, %cst_69 [1] : vector<8x32xf32> to vector<8xf32>
    %165 = vector.shape_cast %164 : vector<8xf32> to vector<8x1xf32>
    %cst_70 = arith.constant 3.125000e-02 : f32
    %166 = vector.broadcast %cst_70 : f32 to vector<8x1xf32>
    %167 = arith.mulf %165, %166 : vector<8x1xf32>
    %168 = arith.mulf %163, %163 : vector<8x32xf32>
    %cst_71 = arith.constant dense<0.000000e+00> : vector<8xf32>
    %169 = vector.multi_reduction <add>, %168, %cst_71 [1] : vector<8x32xf32> to vector<8xf32>
    %170 = vector.shape_cast %169 : vector<8xf32> to vector<8x1xf32>
    %cst_72 = arith.constant 3.125000e-02 : f32
    %171 = vector.broadcast %cst_72 : f32 to vector<8x1xf32>
    %172 = arith.mulf %170, %171 : vector<8x1xf32>
    %173 = arith.mulf %167, %167 : vector<8x1xf32>
    %174 = arith.subf %172, %173 : vector<8x1xf32>
    %cst_73 = arith.constant 0.000000e+00 : f32
    %175 = vector.broadcast %cst_73 : f32 to vector<8x1xf32>
    %176 = arith.maximumf %174, %175 : vector<8x1xf32>
    %177 = vector.broadcast %167 : vector<8x1xf32> to vector<8x32xf32>
    %178 = arith.subf %163, %177 : vector<8x32xf32>
    %cst_74 = arith.constant 9.99999974E-6 : f32
    %179 = vector.broadcast %cst_74 : f32 to vector<8x1xf32>
    %180 = arith.addf %176, %179 : vector<8x1xf32>
    %181 = math.rsqrt %180 : vector<8x1xf32>
    %182 = vector.broadcast %181 : vector<8x1xf32> to vector<8x32xf32>
    %183 = arith.mulf %178, %182 : vector<8x32xf32>
    %184 = vector.broadcast %4 : vector<1x32xf32> to vector<8x32xf32>
    %185 = arith.mulf %183, %184 : vector<8x32xf32>
    %186 = vector.broadcast %5 : vector<1x32xf32> to vector<8x32xf32>
    %187 = arith.addf %185, %186 : vector<8x32xf32>
    %188 = arith.truncf %187 : vector<8x32xf32> to vector<8x32xbf16>
    %cst_75 = arith.constant dense<0.000000e+00> : vector<16x32xf32>
    %189 = tpu.matmul %0, %188, %cst_75 {dimension_numbers = #tpu.dot_dimension_numbers<[1], [0], [0], [1], [0, 0, 1, 1], [], []>} : vector<16x8xbf16>, vector<8x32xbf16>, vector<16x32xf32> -> vector<16x32xf32>
    %190 = vector.broadcast %2 : vector<16x1xf32> to vector<16x32xf32>
    %191 = arith.addf %189, %190 : vector<16x32xf32>
    %cst_76 = arith.constant 5.000000e-01 : f32
    %192 = vector.broadcast %cst_76 : f32 to vector<16x32xf32>
    %193 = arith.mulf %192, %191 : vector<16x32xf32>
    %cst_77 = arith.constant 0.707106769 : f32
    %194 = vector.broadcast %cst_77 : f32 to vector<16x32xf32>
    %195 = arith.mulf %191, %194 : vector<16x32xf32>
    %196 = math.absf %195 : vector<16x32xf32>
    %cst_78 = arith.constant 0.327591091 : f32
    %197 = vector.broadcast %cst_78 : f32 to vector<16x32xf32>
    %198 = arith.mulf %197, %196 : vector<16x32xf32>
    %cst_79 = arith.constant 1.000000e+00 : f32
    %199 = vector.broadcast %cst_79 : f32 to vector<16x32xf32>
    %200 = arith.addf %199, %198 : vector<16x32xf32>
    %cst_80 = arith.constant 1.000000e+00 : f32
    %201 = vector.broadcast %cst_80 : f32 to vector<16x32xf32>
    %202 = arith.divf %201, %200 : vector<16x32xf32>
    %cst_81 = arith.constant 1.06140542 : f32
    %203 = vector.broadcast %cst_81 : f32 to vector<16x32xf32>
    %204 = arith.mulf %203, %202 : vector<16x32xf32>
    %cst_82 = arith.constant -1.45315206 : f32
    %205 = vector.broadcast %cst_82 : f32 to vector<16x32xf32>
    %206 = arith.addf %204, %205 : vector<16x32xf32>
    %207 = arith.mulf %206, %202 : vector<16x32xf32>
    %cst_83 = arith.constant 1.42141378 : f32
    %208 = vector.broadcast %cst_83 : f32 to vector<16x32xf32>
    %209 = arith.addf %207, %208 : vector<16x32xf32>
    %210 = arith.mulf %209, %202 : vector<16x32xf32>
    %cst_84 = arith.constant -0.284496725 : f32
    %211 = vector.broadcast %cst_84 : f32 to vector<16x32xf32>
    %212 = arith.addf %210, %211 : vector<16x32xf32>
    %213 = arith.mulf %212, %202 : vector<16x32xf32>
    %cst_85 = arith.constant 0.254829586 : f32
    %214 = vector.broadcast %cst_85 : f32 to vector<16x32xf32>
    %215 = arith.addf %213, %214 : vector<16x32xf32>
    %216 = arith.mulf %215, %202 : vector<16x32xf32>
    %217 = arith.mulf %196, %196 : vector<16x32xf32>
    %cst_86 = arith.constant 0.000000e+00 : f32
    %218 = vector.broadcast %cst_86 : f32 to vector<16x32xf32>
    %219 = arith.subf %218, %217 : vector<16x32xf32>
    %220 = math.exp %219 : vector<16x32xf32>
    %221 = arith.mulf %216, %220 : vector<16x32xf32>
    %cst_87 = arith.constant 1.000000e+00 : f32
    %222 = vector.broadcast %cst_87 : f32 to vector<16x32xf32>
    %223 = arith.subf %222, %221 : vector<16x32xf32>
    %cst_88 = arith.constant 0.000000e+00 : f32
    %224 = vector.broadcast %cst_88 : f32 to vector<16x32xf32>
    %225 = arith.cmpf olt, %195, %224 : vector<16x32xf32>
    %cst_89 = arith.constant 0.000000e+00 : f32
    %226 = vector.broadcast %cst_89 : f32 to vector<16x32xf32>
    %227 = arith.subf %226, %223 : vector<16x32xf32>
    %228 = arith.select %225, %227, %223 : vector<16x32xi1>, vector<16x32xf32>
    %cst_90 = arith.constant 1.000000e+00 : f32
    %229 = vector.broadcast %cst_90 : f32 to vector<16x32xf32>
    %230 = arith.addf %229, %228 : vector<16x32xf32>
    %231 = arith.mulf %193, %230 : vector<16x32xf32>
    %232 = arith.truncf %231 : vector<16x32xf32> to vector<16x32xbf16>
    %cst_91 = arith.constant dense<0.000000e+00> : vector<8x32xf32>
    %233 = tpu.matmul %1, %232, %cst_91 {dimension_numbers = #tpu.dot_dimension_numbers<[1], [0], [0], [1], [0, 0, 1, 1], [], []>} : vector<8x16xbf16>, vector<16x32xbf16>, vector<8x32xf32> -> vector<8x32xf32>
    %234 = arith.addf %163, %233 : vector<8x32xf32>
    %235 = vector.broadcast %3 : vector<8x1xf32> to vector<8x32xf32>
    %236 = arith.addf %234, %235 : vector<8x32xf32>
    %c2_92 = arith.constant 2 : index
    %c0_93 = arith.constant 0 : index
    %c0_94 = arith.constant 0 : index
    %237 = vector.load %arg14[%c2_92, %c0_93, %c0_94] : memref<4x8x32xf32, #tpu.memory_space<vmem>>, vector<1x8x32xf32>
    %238 = vector.shape_cast %237 : vector<1x8x32xf32> to vector<8x32xf32>
    %239 = vector.shape_cast %236 : vector<8x32xf32> to vector<1x8x32xf32>
    tpu.vector_store %arg14[%c2_92, %c0_93, %c0_94], %239 {strides = array<i32>} : memref<4x8x32xf32, #tpu.memory_space<vmem>>, vector<1x8x32xf32>,
    %c3 = arith.constant 3 : index
    %c0_95 = arith.constant 0 : index
    %c0_96 = arith.constant 0 : index
    %240 = vector.load %arg1[%c3, %c0_95, %c0_96] : memref<4x8x32xf32, #tpu.memory_space<vmem>>, vector<1x8x32xf32>
    %241 = vector.shape_cast %240 : vector<1x8x32xf32> to vector<8x32xf32>
    %cst_97 = arith.constant dense<0.000000e+00> : vector<8xf32>
    %242 = vector.multi_reduction <add>, %241, %cst_97 [1] : vector<8x32xf32> to vector<8xf32>
    %243 = vector.shape_cast %242 : vector<8xf32> to vector<8x1xf32>
    %cst_98 = arith.constant 3.125000e-02 : f32
    %244 = vector.broadcast %cst_98 : f32 to vector<8x1xf32>
    %245 = arith.mulf %243, %244 : vector<8x1xf32>
    %246 = arith.mulf %241, %241 : vector<8x32xf32>
    %cst_99 = arith.constant dense<0.000000e+00> : vector<8xf32>
    %247 = vector.multi_reduction <add>, %246, %cst_99 [1] : vector<8x32xf32> to vector<8xf32>
    %248 = vector.shape_cast %247 : vector<8xf32> to vector<8x1xf32>
    %cst_100 = arith.constant 3.125000e-02 : f32
    %249 = vector.broadcast %cst_100 : f32 to vector<8x1xf32>
    %250 = arith.mulf %248, %249 : vector<8x1xf32>
    %251 = arith.mulf %245, %245 : vector<8x1xf32>
    %252 = arith.subf %250, %251 : vector<8x1xf32>
    %cst_101 = arith.constant 0.000000e+00 : f32
    %253 = vector.broadcast %cst_101 : f32 to vector<8x1xf32>
    %254 = arith.maximumf %252, %253 : vector<8x1xf32>
    %255 = vector.broadcast %245 : vector<8x1xf32> to vector<8x32xf32>
    %256 = arith.subf %241, %255 : vector<8x32xf32>
    %cst_102 = arith.constant 9.99999974E-6 : f32
    %257 = vector.broadcast %cst_102 : f32 to vector<8x1xf32>
    %258 = arith.addf %254, %257 : vector<8x1xf32>
    %259 = math.rsqrt %258 : vector<8x1xf32>
    %260 = vector.broadcast %259 : vector<8x1xf32> to vector<8x32xf32>
    %261 = arith.mulf %256, %260 : vector<8x32xf32>
    %262 = vector.broadcast %4 : vector<1x32xf32> to vector<8x32xf32>
    %263 = arith.mulf %261, %262 : vector<8x32xf32>
    %264 = vector.broadcast %5 : vector<1x32xf32> to vector<8x32xf32>
    %265 = arith.addf %263, %264 : vector<8x32xf32>
    %266 = arith.truncf %265 : vector<8x32xf32> to vector<8x32xbf16>
    %cst_103 = arith.constant dense<0.000000e+00> : vector<16x32xf32>
    %267 = tpu.matmul %0, %266, %cst_103 {dimension_numbers = #tpu.dot_dimension_numbers<[1], [0], [0], [1], [0, 0, 1, 1], [], []>} : vector<16x8xbf16>, vector<8x32xbf16>, vector<16x32xf32> -> vector<16x32xf32>
    %268 = vector.broadcast %2 : vector<16x1xf32> to vector<16x32xf32>
    %269 = arith.addf %267, %268 : vector<16x32xf32>
    %cst_104 = arith.constant 5.000000e-01 : f32
    %270 = vector.broadcast %cst_104 : f32 to vector<16x32xf32>
    %271 = arith.mulf %270, %269 : vector<16x32xf32>
    %cst_105 = arith.constant 0.707106769 : f32
    %272 = vector.broadcast %cst_105 : f32 to vector<16x32xf32>
    %273 = arith.mulf %269, %272 : vector<16x32xf32>
    %274 = math.absf %273 : vector<16x32xf32>
    %cst_106 = arith.constant 0.327591091 : f32
    %275 = vector.broadcast %cst_106 : f32 to vector<16x32xf32>
    %276 = arith.mulf %275, %274 : vector<16x32xf32>
    %cst_107 = arith.constant 1.000000e+00 : f32
    %277 = vector.broadcast %cst_107 : f32 to vector<16x32xf32>
    %278 = arith.addf %277, %276 : vector<16x32xf32>
    %cst_108 = arith.constant 1.000000e+00 : f32
    %279 = vector.broadcast %cst_108 : f32 to vector<16x32xf32>
    %280 = arith.divf %279, %278 : vector<16x32xf32>
    %cst_109 = arith.constant 1.06140542 : f32
    %281 = vector.broadcast %cst_109 : f32 to vector<16x32xf32>
    %282 = arith.mulf %281, %280 : vector<16x32xf32>
    %cst_110 = arith.constant -1.45315206 : f32
    %283 = vector.broadcast %cst_110 : f32 to vector<16x32xf32>
    %284 = arith.addf %282, %283 : vector<16x32xf32>
    %285 = arith.mulf %284, %280 : vector<16x32xf32>
    %cst_111 = arith.constant 1.42141378 : f32
    %286 = vector.broadcast %cst_111 : f32 to vector<16x32xf32>
    %287 = arith.addf %285, %286 : vector<16x32xf32>
    %288 = arith.mulf %287, %280 : vector<16x32xf32>
    %cst_112 = arith.constant -0.284496725 : f32
    %289 = vector.broadcast %cst_112 : f32 to vector<16x32xf32>
    %290 = arith.addf %288, %289 : vector<16x32xf32>
    %291 = arith.mulf %290, %280 : vector<16x32xf32>
    %cst_113 = arith.constant 0.254829586 : f32
    %292 = vector.broadcast %cst_113 : f32 to vector<16x32xf32>
    %293 = arith.addf %291, %292 : vector<16x32xf32>
    %294 = arith.mulf %293, %280 : vector<16x32xf32>
    %295 = arith.mulf %274, %274 : vector<16x32xf32>
    %cst_114 = arith.constant 0.000000e+00 : f32
    %296 = vector.broadcast %cst_114 : f32 to vector<16x32xf32>
    %297 = arith.subf %296, %295 : vector<16x32xf32>
    %298 = math.exp %297 : vector<16x32xf32>
    %299 = arith.mulf %294, %298 : vector<16x32xf32>
    %cst_115 = arith.constant 1.000000e+00 : f32
    %300 = vector.broadcast %cst_115 : f32 to vector<16x32xf32>
    %301 = arith.subf %300, %299 : vector<16x32xf32>
    %cst_116 = arith.constant 0.000000e+00 : f32
    %302 = vector.broadcast %cst_116 : f32 to vector<16x32xf32>
    %303 = arith.cmpf olt, %273, %302 : vector<16x32xf32>
    %cst_117 = arith.constant 0.000000e+00 : f32
    %304 = vector.broadcast %cst_117 : f32 to vector<16x32xf32>
    %305 = arith.subf %304, %301 : vector<16x32xf32>
    %306 = arith.select %303, %305, %301 : vector<16x32xi1>, vector<16x32xf32>
    %cst_118 = arith.constant 1.000000e+00 : f32
    %307 = vector.broadcast %cst_118 : f32 to vector<16x32xf32>
    %308 = arith.addf %307, %306 : vector<16x32xf32>
    %309 = arith.mulf %271, %308 : vector<16x32xf32>
    %310 = arith.truncf %309 : vector<16x32xf32> to vector<16x32xbf16>
    %cst_119 = arith.constant dense<0.000000e+00> : vector<8x32xf32>
    %311 = tpu.matmul %1, %310, %cst_119 {dimension_numbers = #tpu.dot_dimension_numbers<[1], [0], [0], [1], [0, 0, 1, 1], [], []>} : vector<8x16xbf16>, vector<16x32xbf16>, vector<8x32xf32> -> vector<8x32xf32>
    %312 = arith.addf %241, %311 : vector<8x32xf32>
    %313 = vector.broadcast %3 : vector<8x1xf32> to vector<8x32xf32>
    %314 = arith.addf %312, %313 : vector<8x32xf32>
    %c3_120 = arith.constant 3 : index
    %c0_121 = arith.constant 0 : index
    %c0_122 = arith.constant 0 : index
    %315 = vector.load %arg14[%c3_120, %c0_121, %c0_122] : memref<4x8x32xf32, #tpu.memory_space<vmem>>, vector<1x8x32xf32>
    %316 = vector.shape_cast %315 : vector<1x8x32xf32> to vector<8x32xf32>
    %317 = vector.shape_cast %314 : vector<8x32xf32> to vector<1x8x32xf32>
    tpu.vector_store %arg14[%c3_120, %c0_121, %c0_122], %317 {strides = array<i32>} : memref<4x8x32xf32, #tpu.memory_space<vmem>>, vector<1x8x32xf32>,
    %c0_123 = arith.constant 0 : index
    %c0_124 = arith.constant 0 : index
    %c0_125 = arith.constant 0 : index
    %318 = vector.load %arg14[%c0_123, %c0_124, %c0_125] : memref<4x8x32xf32, #tpu.memory_space<vmem>>, vector<4x8x32xf32>
    %319 = vector.shape_cast %318 : vector<4x8x32xf32> to vector<32x32xf32>
    %c0_126 = arith.constant 0 : index
    %c0_127 = arith.constant 0 : index
    %320 = vector.load %arg8[%c0_126, %c0_127] : memref<1x32xf32, #tpu.memory_space<vmem>>, vector<1x32xf32>
    %c0_128 = arith.constant 0 : index
    %c0_129 = arith.constant 0 : index
    %321 = vector.load %arg9[%c0_128, %c0_129] : memref<1x32xf32, #tpu.memory_space<vmem>>, vector<1x32xf32>
    %cst_130 = arith.constant dense<0.000000e+00> : vector<32xf32>
    %322 = vector.multi_reduction <add>, %319, %cst_130 [1] : vector<32x32xf32> to vector<32xf32>
    %323 = vector.shape_cast %322 : vector<32xf32> to vector<32x1xf32>
    %cst_131 = arith.constant 3.125000e-02 : f32
    %324 = vector.broadcast %cst_131 : f32 to vector<32x1xf32>
    %325 = arith.mulf %323, %324 : vector<32x1xf32>
    %326 = arith.mulf %319, %319 : vector<32x32xf32>
    %cst_132 = arith.constant dense<0.000000e+00> : vector<32xf32>
    %327 = vector.multi_reduction <add>, %326, %cst_132 [1] : vector<32x32xf32> to vector<32xf32>
    %328 = vector.shape_cast %327 : vector<32xf32> to vector<32x1xf32>
    %cst_133 = arith.constant 3.125000e-02 : f32
    %329 = vector.broadcast %cst_133 : f32 to vector<32x1xf32>
    %330 = arith.mulf %328, %329 : vector<32x1xf32>
    %331 = arith.mulf %325, %325 : vector<32x1xf32>
    %332 = arith.subf %330, %331 : vector<32x1xf32>
    %cst_134 = arith.constant 0.000000e+00 : f32
    %333 = vector.broadcast %cst_134 : f32 to vector<32x1xf32>
    %334 = arith.maximumf %332, %333 : vector<32x1xf32>
    %335 = vector.broadcast %325 : vector<32x1xf32> to vector<32x32xf32>
    %336 = arith.subf %319, %335 : vector<32x32xf32>
    %cst_135 = arith.constant 9.99999974E-6 : f32
    %337 = vector.broadcast %cst_135 : f32 to vector<32x1xf32>
    %338 = arith.addf %334, %337 : vector<32x1xf32>
    %339 = math.rsqrt %338 : vector<32x1xf32>
    %340 = vector.broadcast %339 : vector<32x1xf32> to vector<32x32xf32>
    %341 = arith.mulf %336, %340 : vector<32x32xf32>
    %342 = vector.broadcast %320 : vector<1x32xf32> to vector<32x32xf32>
    %343 = arith.mulf %341, %342 : vector<32x32xf32>
    %344 = vector.broadcast %321 : vector<1x32xf32> to vector<32x32xf32>
    %345 = arith.addf %343, %344 : vector<32x32xf32>
    %346 = arith.truncf %345 : vector<32x32xf32> to vector<32x32xbf16>
    %c0_136 = arith.constant 0 : index
    %c0_137 = arith.constant 0 : index
    %347 = vector.load %arg10[%c0_136, %c0_137] : memref<32x64xbf16, #tpu.memory_space<vmem>>, vector<32x64xbf16>
    %cst_138 = arith.constant dense<0.000000e+00> : vector<32x64xf32>
    %348 = tpu.matmul %346, %347, %cst_138 {dimension_numbers = #tpu.dot_dimension_numbers<[1], [0], [0], [1], [0, 0, 1, 1], [], []>} : vector<32x32xbf16>, vector<32x64xbf16>, vector<32x64xf32> -> vector<32x64xf32>
    %c0_139 = arith.constant 0 : index
    %c0_140 = arith.constant 0 : index
    %349 = vector.load %arg11[%c0_139, %c0_140] : memref<1x64xf32, #tpu.memory_space<vmem>>, vector<1x64xf32>
    %350 = vector.broadcast %349 : vector<1x64xf32> to vector<32x64xf32>
    %351 = arith.addf %348, %350 : vector<32x64xf32>
    %cst_141 = arith.constant 5.000000e-01 : f32
    %352 = vector.broadcast %cst_141 : f32 to vector<32x64xf32>
    %353 = arith.mulf %352, %351 : vector<32x64xf32>
    %cst_142 = arith.constant 0.707106769 : f32
    %354 = vector.broadcast %cst_142 : f32 to vector<32x64xf32>
    %355 = arith.mulf %351, %354 : vector<32x64xf32>
    %356 = math.absf %355 : vector<32x64xf32>
    %cst_143 = arith.constant 0.327591091 : f32
    %357 = vector.broadcast %cst_143 : f32 to vector<32x64xf32>
    %358 = arith.mulf %357, %356 : vector<32x64xf32>
    %cst_144 = arith.constant 1.000000e+00 : f32
    %359 = vector.broadcast %cst_144 : f32 to vector<32x64xf32>
    %360 = arith.addf %359, %358 : vector<32x64xf32>
    %cst_145 = arith.constant 1.000000e+00 : f32
    %361 = vector.broadcast %cst_145 : f32 to vector<32x64xf32>
    %362 = arith.divf %361, %360 : vector<32x64xf32>
    %cst_146 = arith.constant 1.06140542 : f32
    %363 = vector.broadcast %cst_146 : f32 to vector<32x64xf32>
    %364 = arith.mulf %363, %362 : vector<32x64xf32>
    %cst_147 = arith.constant -1.45315206 : f32
    %365 = vector.broadcast %cst_147 : f32 to vector<32x64xf32>
    %366 = arith.addf %364, %365 : vector<32x64xf32>
    %367 = arith.mulf %366, %362 : vector<32x64xf32>
    %cst_148 = arith.constant 1.42141378 : f32
    %368 = vector.broadcast %cst_148 : f32 to vector<32x64xf32>
    %369 = arith.addf %367, %368 : vector<32x64xf32>
    %370 = arith.mulf %369, %362 : vector<32x64xf32>
    %cst_149 = arith.constant -0.284496725 : f32
    %371 = vector.broadcast %cst_149 : f32 to vector<32x64xf32>
    %372 = arith.addf %370, %371 : vector<32x64xf32>
    %373 = arith.mulf %372, %362 : vector<32x64xf32>
    %cst_150 = arith.constant 0.254829586 : f32
    %374 = vector.broadcast %cst_150 : f32 to vector<32x64xf32>
    %375 = arith.addf %373, %374 : vector<32x64xf32>
    %376 = arith.mulf %375, %362 : vector<32x64xf32>
    %377 = arith.mulf %356, %356 : vector<32x64xf32>
    %cst_151 = arith.constant 0.000000e+00 : f32
    %378 = vector.broadcast %cst_151 : f32 to vector<32x64xf32>
    %379 = arith.subf %378, %377 : vector<32x64xf32>
    %380 = math.exp %379 : vector<32x64xf32>
    %381 = arith.mulf %376, %380 : vector<32x64xf32>
    %cst_152 = arith.constant 1.000000e+00 : f32
    %382 = vector.broadcast %cst_152 : f32 to vector<32x64xf32>
    %383 = arith.subf %382, %381 : vector<32x64xf32>
    %cst_153 = arith.constant 0.000000e+00 : f32
    %384 = vector.broadcast %cst_153 : f32 to vector<32x64xf32>
    %385 = arith.cmpf olt, %355, %384 : vector<32x64xf32>
    %cst_154 = arith.constant 0.000000e+00 : f32
    %386 = vector.broadcast %cst_154 : f32 to vector<32x64xf32>
    %387 = arith.subf %386, %383 : vector<32x64xf32>
    %388 = arith.select %385, %387, %383 : vector<32x64xi1>, vector<32x64xf32>
    %cst_155 = arith.constant 1.000000e+00 : f32
    %389 = vector.broadcast %cst_155 : f32 to vector<32x64xf32>
    %390 = arith.addf %389, %388 : vector<32x64xf32>
    %391 = arith.mulf %353, %390 : vector<32x64xf32>
    %392 = arith.truncf %391 : vector<32x64xf32> to vector<32x64xbf16>
    %c0_156 = arith.constant 0 : index
    %c0_157 = arith.constant 0 : index
    %393 = vector.load %arg12[%c0_156, %c0_157] : memref<64x32xbf16, #tpu.memory_space<vmem>>, vector<64x32xbf16>
    %cst_158 = arith.constant dense<0.000000e+00> : vector<32x32xf32>
    %394 = tpu.matmul %392, %393, %cst_158 {dimension_numbers = #tpu.dot_dimension_numbers<[1], [0], [0], [1], [0, 0, 1, 1], [], []>} : vector<32x64xbf16>, vector<64x32xbf16>, vector<32x32xf32> -> vector<32x32xf32>
    %395 = arith.addf %319, %394 : vector<32x32xf32>
    %c0_159 = arith.constant 0 : index
    %c0_160 = arith.constant 0 : index
    %396 = vector.load %arg13[%c0_159, %c0_160] : memref<1x32xf32, #tpu.memory_space<vmem>>, vector<1x32xf32>
    %397 = vector.broadcast %396 : vector<1x32xf32> to vector<32x32xf32>
    %398 = arith.addf %395, %397 : vector<32x32xf32>
    %399 = vector.shape_cast %398 : vector<32x32xf32> to vector<4x8x32xf32>
    %c0_161 = arith.constant 0 : index
    %c0_162 = arith.constant 0 : index
    %c0_163 = arith.constant 0 : index
    %400 = vector.load %arg14[%c0_161, %c0_162, %c0_163] : memref<4x8x32xf32, #tpu.memory_space<vmem>>, vector<4x8x32xf32>
    tpu.vector_store %arg14[%c0_161, %c0_162, %c0_163], %399 {strides = array<i32>} : memref<4x8x32xf32, #tpu.memory_space<vmem>>, vector<4x8x32xf32>,
    return
  }
  func.func @transform_0(%arg0: i32) -> (i32, i32, i32) {
    %c0_i32 = arith.constant 0 : i32
    %c0_i32_0 = arith.constant 0 : i32
    %c0_i32_1 = arith.constant 0 : i32
    return %arg0, %c0_i32, %c0_i32_0 : i32, i32, i32
  }
  func.func @transform_1(%arg0: i32) -> (i32, i32) {
    %c0_i32 = arith.constant 0 : i32
    %c0_i32_0 = arith.constant 0 : i32
    %c0_i32_1 = arith.constant 0 : i32
    return %c0_i32, %c0_i32_0 : i32, i32
  }
  func.func @transform_2(%arg0: i32) -> (i32, i32) {
    %c0_i32 = arith.constant 0 : i32
    %c0_i32_0 = arith.constant 0 : i32
    %c0_i32_1 = arith.constant 0 : i32
    return %c0_i32, %c0_i32_0 : i32, i32
  }
  func.func @transform_3(%arg0: i32) -> (i32, i32) {
    %c0_i32 = arith.constant 0 : i32
    %c0_i32_0 = arith.constant 0 : i32
    %c0_i32_1 = arith.constant 0 : i32
    return %c0_i32, %c0_i32_0 : i32, i32
  }
  func.func @transform_4(%arg0: i32) -> (i32, i32) {
    %c0_i32 = arith.constant 0 : i32
    %c0_i32_0 = arith.constant 0 : i32
    %c0_i32_1 = arith.constant 0 : i32
    return %c0_i32, %c0_i32_0 : i32, i32
  }
  func.func @transform_5(%arg0: i32) -> (i32, i32) {
    %c0_i32 = arith.constant 0 : i32
    %c0_i32_0 = arith.constant 0 : i32
    %c0_i32_1 = arith.constant 0 : i32
    return %c0_i32, %c0_i32_0 : i32, i32
  }
  func.func @transform_6(%arg0: i32) -> (i32, i32) {
    %c0_i32 = arith.constant 0 : i32
    %c0_i32_0 = arith.constant 0 : i32
    %c0_i32_1 = arith.constant 0 : i32
    return %c0_i32, %c0_i32_0 : i32, i32
  }
  func.func @transform_7(%arg0: i32) -> (i32, i32) {
    %c0_i32 = arith.constant 0 : i32
    %c0_i32_0 = arith.constant 0 : i32
    %c0_i32_1 = arith.constant 0 : i32
    return %c0_i32, %c0_i32_0 : i32, i32
  }
  func.func @transform_8(%arg0: i32) -> (i32, i32) {
    %c0_i32 = arith.constant 0 : i32
    %c0_i32_0 = arith.constant 0 : i32
    %c0_i32_1 = arith.constant 0 : i32
    return %c0_i32, %c0_i32_0 : i32, i32
  }
  func.func @transform_9(%arg0: i32) -> (i32, i32) {
    %c0_i32 = arith.constant 0 : i32
    %c0_i32_0 = arith.constant 0 : i32
    %c0_i32_1 = arith.constant 0 : i32
    return %c0_i32, %c0_i32_0 : i32, i32
  }
  func.func @transform_10(%arg0: i32) -> (i32, i32) {
    %c0_i32 = arith.constant 0 : i32
    %c0_i32_0 = arith.constant 0 : i32
    %c0_i32_1 = arith.constant 0 : i32
    return %c0_i32, %c0_i32_0 : i32, i32
  }
  func.func @transform_11(%arg0: i32) -> (i32, i32) {
    %c0_i32 = arith.constant 0 : i32
    %c0_i32_0 = arith.constant 0 : i32
    %c0_i32_1 = arith.constant 0 : i32
    return %c0_i32, %c0_i32_0 : i32, i32
  }
  func.func @transform_12(%arg0: i32) -> (i32, i32) {
    %c0_i32 = arith.constant 0 : i32
    %c0_i32_0 = arith.constant 0 : i32
    %c0_i32_1 = arith.constant 0 : i32
    return %c0_i32, %c0_i32_0 : i32, i32
  }
  func.func @transform_13(%arg0: i32) -> (i32, i32, i32) {
    %c0_i32 = arith.constant 0 : i32
    %c0_i32_0 = arith.constant 0 : i32
    %c0_i32_1 = arith.constant 0 : i32
    return %arg0, %c0_i32, %c0_i32_0 : i32, i32, i32
  }
}

</mosaic_0001>

<llo_original>
// kernel: tpu_custom_call.1
$region0: #{tpu_custom_call.1}
  #allocation0 [shape = 'u32[]', space=smem, size = 0x4, offset = 0x4, fixed_abs, tag = 'smem constant byte address 0x4 - core index']
  #allocation1 [shape = 'u32[72,128]{1,0:T(1,128)}', space=vmem, size = 0x9000, scoped, tag = 'internal scratch']
  %s0 = inlined_call_operand.vmem [shape: f32[8,8,32], index: 0, kind: input, shape index: {}]
  %s1 = inlined_call_operand.vmem [shape: f32[1,32], index: 1, kind: input, shape index: {}]
  %s2 = inlined_call_operand.vmem [shape: f32[1,32], index: 2, kind: input, shape index: {}]
  %s3 = inlined_call_operand.vmem [shape: bf16[16,8], index: 3, kind: input, shape index: {}]
  %s4 = inlined_call_operand.vmem [shape: f32[16,1], index: 4, kind: input, shape index: {}]
  %s5 = inlined_call_operand.vmem [shape: bf16[8,16], index: 5, kind: input, shape index: {}]
  %s6 = inlined_call_operand.vmem [shape: f32[8,1], index: 6, kind: input, shape index: {}]
  %s7 = inlined_call_operand.vmem [shape: f32[1,32], index: 7, kind: input, shape index: {}]
  %s8 = inlined_call_operand.vmem [shape: f32[1,32], index: 8, kind: input, shape index: {}]
  %s9 = inlined_call_operand.hbm [shape: bf16[32,64], index: 9, kind: input, shape index: {}]
  %s10 = inlined_call_operand.vmem [shape: f32[1,64], index: 10, kind: input, shape index: {}]
  %s11 = inlined_call_operand.vmem [shape: bf16[64,32], index: 11, kind: input, shape index: {}]
  %s12 = inlined_call_operand.vmem [shape: f32[1,32], index: 12, kind: input, shape index: {}]
  %s13 = inlined_call_operand.hbm [shape: f32[8,8,32], index: 13, kind: output, shape index: {}]
  %s14 = sld [smem:[#allocation0]]
  $region89: #{tpu_custom_call.1} parent=0
    _
  %s16 = ssub.s32 1, %s14
  %s17 = scalar_select 0, %s16, %s14
  $region1: #{tpu_custom_call.1} parent=0
    #allocation2 [shape = 'u8[8192]{0}', space=vmem, size = 0x2000, scoped, tag = 'input window, operand 9, single buffered']
    #allocation3 [shape = 's32[2]{0}', space=sflag, size = 0x8, scoped, tag = 'scoped memory for tpu_custom_call.1']
    #allocation4 [shape = 's32[2]{0}', space=sflag, size = 0x8, scoped, tag = 'scoped memory for tpu_custom_call.1']
    #allocation5 [shape = 'u8[32768]{0}', space=vmem, size = 0x8000, scoped, tag = 'output window, operand 0']
    %18 = vsyncpa [#allocation3], 0
    %19 = vsyncpa [#allocation4], 0
    %s20 = scalar_lea.sflag [#allocation4], 1
    %21 = vsyncpa %s20, 0
    loop: start=0, step=1, limit=4
    $region2: #{tpu_custom_call.1} parent=1 // loop_pre_header
      _
    $region3: #{tpu_custom_call.1} parent=1 // loop_header
      %s23 = sphi 0, %s27
      %p24 = scmp.ge.s32.totalorder %s23, 4
      %s33 = sphi 0, %s35
      %s36 = sphi 0, %s33
      %s37 = sphi 0, %s36
      %s53 = sphi 0, %s37
      %s57 = sphi 0, %s57
      %s59 = sphi 0, %s57
      %s60 = sphi 0, %s59
      %s74 = sphi 0, %s60
      %s78 = sphi 0, %s78
      %s80 = sphi 0, %s78
      %s81 = sphi 0, %s80
      %s95 = sphi 0, %s81
      %s99 = sphi 0, %s99
      %s101 = sphi 0, %s99
      %s102 = sphi 0, %s101
      %s116 = sphi 0, %s102
      %s120 = sphi 0, %s120
      %s122 = sphi 0, %s120
      %s123 = sphi 0, %s122
      %s137 = sphi 0, %s123
      %s141 = sphi 0, %s141
      %s143 = sphi 0, %s141
      %s144 = sphi 0, %s143
      %s158 = sphi 0, %s144
      %s162 = sphi 0, %s162
      %s164 = sphi 0, %s162
      %s165 = sphi 0, %s164
      %s179 = sphi 0, %s165
      %s183 = sphi 0, %s183
      %s185 = sphi 0, %s183
      %s186 = sphi 0, %s185
      %s200 = sphi 0, %s186
      %s204 = sphi 0, %s204
      %s206 = sphi 0, %s204
      %s207 = sphi 0, %s206
      %s221 = sphi 0, %s207
      %s225 = sphi 0, %s225
      %s227 = sphi 0, %s225
      %s228 = sphi 0, %s227
      %s242 = sphi 0, %s228
      %s246 = sphi 0, %s246
      %s248 = sphi 0, %s246
      %s249 = sphi 0, %s248
      %s263 = sphi 0, %s249
      %s267 = sphi 0, %s267
      %s269 = sphi 0, %s267
      %s270 = sphi 0, %s269
      %s284 = sphi 0, %s270
      %s288 = sphi 0, %s288
      %s290 = sphi 0, %s288
      %s291 = sphi 0, %s290
      %s305 = sphi 0, %s291
      %s311 = sphi 0, %s313
      %s314 = sphi 0, %s311
      %s315 = sphi 0, %s314
      %s331 = sphi 0, %s315
    $region4: #{tpu_custom_call.1} parent=1 // loop_header_branch
      %26 = sbr.rel (%p24) target = $region8
    $region5: #{tpu_custom_call.1} parent=1 // loop_body
      %s28 = ssub.s32 %s23, 1
      %s29 = ssub.s32 %s23, 2
      %s30 = sadd.s32 %s23, 1
      %s31 = ssub.s32 %s23, %s30
      %p32 = scmp.eq.s32.totalorder %s31, 0
      %s34 = sadd.s32 %s33, 1
      %s35 = scalar_select %p32, %s33, %s34
      %p38 = pneg %p32
      %p39 = scmp.eq.s32.totalorder %s23, 1
      %p40 = por %p38, %p39
      %p41 = scmp.ne.s32.totalorder %s33, %s36
      %p42 = scmp.eq.s32.totalorder %s23, 0
      %p43 = por %p41, %p42
      %p44 = scmp.ne.s32.totalorder %s33, %s36
      %p45 = scmp.eq.s32.totalorder %s28, 1
      %p46 = por %p44, %p45
      %p47 = scmp.ne.s32.totalorder %s36, %s37
      %p48 = scmp.eq.s32.totalorder %s28, 0
      %p49 = por %p47, %p48
      %p50 = scmp.ne.s32.totalorder %s36, %s37
      %p51 = scmp.eq.s32.totalorder %s29, 1
      %p52 = por %p50, %p51
      %p54 = scmp.ne.s32.totalorder %s37, %s53
      %p55 = scmp.eq.s32.totalorder %s29, 0
      %p56 = por %p54, %p55
      %s58 = sadd.s32 %s57, 1
      %p61 = scmp.eq.s32.totalorder %s23, 1
      %p62 = scmp.ne.s32.totalorder %s57, %s59
      %p63 = scmp.eq.s32.totalorder %s23, 0
      %p64 = por %p62, %p63
      %p65 = scmp.ne.s32.totalorder %s57, %s59
      %p66 = scmp.eq.s32.totalorder %s28, 1
      %p67 = por %p65, %p66
      %p68 = scmp.ne.s32.totalorder %s59, %s60
      %p69 = scmp.eq.s32.totalorder %s28, 0
      %p70 = por %p68, %p69
      %p71 = scmp.ne.s32.totalorder %s59, %s60
      %p72 = scmp.eq.s32.totalorder %s29, 1
      %p73 = por %p71, %p72
      %p75 = scmp.ne.s32.totalorder %s60, %s74
      %p76 = scmp.eq.s32.totalorder %s29, 0
      %p77 = por %p75, %p76
      %s79 = sadd.s32 %s78, 1
      %p82 = scmp.eq.s32.totalorder %s23, 1
      %p83 = scmp.ne.s32.totalorder %s78, %s80
      %p84 = scmp.eq.s32.totalorder %s23, 0
      %p85 = por %p83, %p84
      %p86 = scmp.ne.s32.totalorder %s78, %s80
      %p87 = scmp.eq.s32.totalorder %s28, 1
      %p88 = por %p86, %p87
      %p89 = scmp.ne.s32.totalorder %s80, %s81
      %p90 = scmp.eq.s32.totalorder %s28, 0
      %p91 = por %p89, %p90
      %p92 = scmp.ne.s32.totalorder %s80, %s81
      %p93 = scmp.eq.s32.totalorder %s29, 1
      %p94 = por %p92, %p93
      %p96 = scmp.ne.s32.totalorder %s81, %s95
      %p97 = scmp.eq.s32.totalorder %s29, 0
      %p98 = por %p96, %p97
      %s100 = sadd.s32 %s99, 1
      %p103 = scmp.eq.s32.totalorder %s23, 1
      %p104 = scmp.ne.s32.totalorder %s99, %s101
      %p105 = scmp.eq.s32.totalorder %s23, 0
      %p106 = por %p104, %p105
      %p107 = scmp.ne.s32.totalorder %s99, %s101
      %p108 = scmp.eq.s32.totalorder %s28, 1
      %p109 = por %p107, %p108
      %p110 = scmp.ne.s32.totalorder %s101, %s102
      %p111 = scmp.eq.s32.totalorder %s28, 0
      %p112 = por %p110, %p111
      %p113 = scmp.ne.s32.totalorder %s101, %s102
      %p114 = scmp.eq.s32.totalorder %s29, 1
      %p115 = por %p113, %p114
      %p117 = scmp.ne.s32.totalorder %s102, %s116
      %p118 = scmp.eq.s32.totalorder %s29, 0
      %p119 = por %p117, %p118
      %s121 = sadd.s32 %s120, 1
      %p124 = scmp.eq.s32.totalorder %s23, 1
      %p125 = scmp.ne.s32.totalorder %s120, %s122
      %p126 = scmp.eq.s32.totalorder %s23, 0
      %p127 = por %p125, %p126
      %p128 = scmp.ne.s32.totalorder %s120, %s122
      %p129 = scmp.eq.s32.totalorder %s28, 1
      %p130 = por %p128, %p129
      %p131 = scmp.ne.s32.totalorder %s122, %s123
      %p132 = scmp.eq.s32.totalorder %s28, 0
      %p133 = por %p131, %p132
      %p134 = scmp.ne.s32.totalorder %s122, %s123
      %p135 = scmp.eq.s32.totalorder %s29, 1
      %p136 = por %p134, %p135
      %p138 = scmp.ne.s32.totalorder %s123, %s137
      %p139 = scmp.eq.s32.totalorder %s29, 0
      %p140 = por %p138, %p139
      %s142 = sadd.s32 %s141, 1
      %p145 = scmp.eq.s32.totalorder %s23, 1
      %p146 = scmp.ne.s32.totalorder %s141, %s143
      %p147 = scmp.eq.s32.totalorder %s23, 0
      %p148 = por %p146, %p147
      %p149 = scmp.ne.s32.totalorder %s141, %s143
      %p150 = scmp.eq.s32.totalorder %s28, 1
      %p151 = por %p149, %p150
      %p152 = scmp.ne.s32.totalorder %s143, %s144
      %p153 = scmp.eq.s32.totalorder %s28, 0
      %p154 = por %p152, %p153
      %p155 = scmp.ne.s32.totalorder %s143, %s144
      %p156 = scmp.eq.s32.totalorder %s29, 1
      %p157 = por %p155, %p156
      %p159 = scmp.ne.s32.totalorder %s144, %s158
      %p160 = scmp.eq.s32.totalorder %s29, 0
      %p161 = por %p159, %p160
      %s163 = sadd.s32 %s162, 1
      %p166 = scmp.eq.s32.totalorder %s23, 1
      %p167 = scmp.ne.s32.totalorder %s162, %s164
      %p168 = scmp.eq.s32.totalorder %s23, 0
      %p169 = por %p167, %p168
      %p170 = scmp.ne.s32.totalorder %s162, %s164
      %p171 = scmp.eq.s32.totalorder %s28, 1
      %p172 = por %p170, %p171
      %p173 = scmp.ne.s32.totalorder %s164, %s165
      %p174 = scmp.eq.s32.totalorder %s28, 0
      %p175 = por %p173, %p174
      %p176 = scmp.ne.s32.totalorder %s164, %s165
      %p177 = scmp.eq.s32.totalorder %s29, 1
      %p178 = por %p176, %p177
      %p180 = scmp.ne.s32.totalorder %s165, %s179
      %p181 = scmp.eq.s32.totalorder %s29, 0
      %p182 = por %p180, %p181
      %s184 = sadd.s32 %s183, 1
      %p187 = scmp.eq.s32.totalorder %s23, 1
      %p188 = scmp.ne.s32.totalorder %s183, %s185
      %p189 = scmp.eq.s32.totalorder %s23, 0
      %p190 = por %p188, %p189
      %p191 = scmp.ne.s32.totalorder %s183, %s185
      %p192 = scmp.eq.s32.totalorder %s28, 1
      %p193 = por %p191, %p192
      %p194 = scmp.ne.s32.totalorder %s185, %s186
      %p195 = scmp.eq.s32.totalorder %s28, 0
      %p196 = por %p194, %p195
      %p197 = scmp.ne.s32.totalorder %s185, %s186
      %p198 = scmp.eq.s32.totalorder %s29, 1
      %p199 = por %p197, %p198
      %p201 = scmp.ne.s32.totalorder %s186, %s200
      %p202 = scmp.eq.s32.totalorder %s29, 0
      %p203 = por %p201, %p202
      %s205 = sadd.s32 %s204, 1
      %p208 = scmp.eq.s32.totalorder %s23, 1
      %p209 = scmp.ne.s32.totalorder %s204, %s206
      %p210 = scmp.eq.s32.totalorder %s23, 0
      %p211 = por %p209, %p210
      %p212 = scmp.ne.s32.totalorder %s204, %s206
      %p213 = scmp.eq.s32.totalorder %s28, 1
      %p214 = por %p212, %p213
      %p215 = scmp.ne.s32.totalorder %s206, %s207
      %p216 = scmp.eq.s32.totalorder %s28, 0
      %p217 = por %p215, %p216
      %p218 = scmp.ne.s32.totalorder %s206, %s207
      %p219 = scmp.eq.s32.totalorder %s29, 1
      %p220 = por %p218, %p219
      %p222 = scmp.ne.s32.totalorder %s207, %s221
      %p223 = scmp.eq.s32.totalorder %s29, 0
      %p224 = por %p222, %p223
      %s226 = sadd.s32 %s225, 1
      %p229 = scmp.eq.s32.totalorder %s23, 1
      %p230 = scmp.ne.s32.totalorder %s225, %s227
      %p231 = scmp.eq.s32.totalorder %s23, 0
      %p232 = por %p230, %p231
      %p233 = scmp.ne.s32.totalorder %s225, %s227
      %p234 = scmp.eq.s32.totalorder %s28, 1
      %p235 = por %p233, %p234
      %p236 = scmp.ne.s32.totalorder %s227, %s228
      %p237 = scmp.eq.s32.totalorder %s28, 0
      %p238 = por %p236, %p237
      %p239 = scmp.ne.s32.totalorder %s227, %s228
      %p240 = scmp.eq.s32.totalorder %s29, 1
      %p241 = por %p239, %p240
      %p243 = scmp.ne.s32.totalorder %s228, %s242
      %p244 = scmp.eq.s32.totalorder %s29, 0
      %p245 = por %p243, %p244
      %s247 = sadd.s32 %s246, 1
      %p250 = scmp.eq.s32.totalorder %s23, 1
      %p251 = scmp.ne.s32.totalorder %s246, %s248
      %p252 = scmp.eq.s32.totalorder %s23, 0
      %p253 = por %p251, %p252
      %p254 = scmp.ne.s32.totalorder %s246, %s248
      %p255 = scmp.eq.s32.totalorder %s28, 1
      %p256 = por %p254, %p255
      %p257 = scmp.ne.s32.totalorder %s248, %s249
      %p258 = scmp.eq.s32.totalorder %s28, 0
      %p259 = por %p257, %p258
      %p260 = scmp.ne.s32.totalorder %s248, %s249
      %p261 = scmp.eq.s32.totalorder %s29, 1
      %p262 = por %p260, %p261
      %p264 = scmp.ne.s32.totalorder %s249, %s263
      %p265 = scmp.eq.s32.totalorder %s29, 0
      %p266 = por %p264, %p265
      %s268 = sadd.s32 %s267, 1
      %p271 = scmp.eq.s32.totalorder %s23, 1
      %p272 = scmp.ne.s32.totalorder %s267, %s269
      %p273 = scmp.eq.s32.totalorder %s23, 0
      %p274 = por %p272, %p273
      %p275 = scmp.ne.s32.totalorder %s267, %s269
      %p276 = scmp.eq.s32.totalorder %s28, 1
      %p277 = por %p275, %p276
      %p278 = scmp.ne.s32.totalorder %s269, %s270
      %p279 = scmp.eq.s32.totalorder %s28, 0
      %p280 = por %p278, %p279
      %p281 = scmp.ne.s32.totalorder %s269, %s270
      %p282 = scmp.eq.s32.totalorder %s29, 1
      %p283 = por %p281, %p282
      %p285 = scmp.ne.s32.totalorder %s270, %s284
      %p286 = scmp.eq.s32.totalorder %s29, 0
      %p287 = por %p285, %p286
      %s289 = sadd.s32 %s288, 1
      %p292 = scmp.eq.s32.totalorder %s23, 1
      %p293 = scmp.ne.s32.totalorder %s288, %s290
      %p294 = scmp.eq.s32.totalorder %s23, 0
      %p295 = por %p293, %p294
      %p296 = scmp.ne.s32.totalorder %s288, %s290
      %p297 = scmp.eq.s32.totalorder %s28, 1
      %p298 = por %p296, %p297
      %p299 = scmp.ne.s32.totalorder %s290, %s291
      %p300 = scmp.eq.s32.totalorder %s28, 0
      %p301 = por %p299, %p300
      %p302 = scmp.ne.s32.totalorder %s290, %s291
      %p303 = scmp.eq.s32.totalorder %s29, 1
      %p304 = por %p302, %p303
      %p306 = scmp.ne.s32.totalorder %s291, %s305
      %p307 = scmp.eq.s32.totalorder %s29, 0
      %p308 = por %p306, %p307
      %s309 = ssub.s32 %s23, %s30
      %p310 = scmp.eq.s32.totalorder %s309, 0
      %s312 = sadd.s32 %s311, 1
      %s313 = scalar_select %p310, %s311, %s312
      %p316 = pneg %p310
      %p317 = scmp.eq.s32.totalorder %s23, 1
      %p318 = por %p316, %p317
      %p319 = scmp.ne.s32.totalorder %s311, %s314
      %p320 = scmp.eq.s32.totalorder %s23, 0
      %p321 = por %p319, %p320
      %p322 = scmp.ne.s32.totalorder %s311, %s314
      %p323 = scmp.eq.s32.totalorder %s28, 1
      %p324 = por %p322, %p323
      %p325 = scmp.ne.s32.totalorder %s314, %s315
      %p326 = scmp.eq.s32.totalorder %s28, 0
      %p327 = por %p325, %p326
      %p328 = scmp.ne.s32.totalorder %s314, %s315
      %p329 = scmp.eq.s32.totalorder %s29, 1
      %p330 = por %p328, %p329
      %p332 = scmp.ne.s32.totalorder %s315, %s331
      %p333 = scmp.eq.s32.totalorder %s29, 0
      %p334 = por %p332, %p333
      %p335 = scmp.le.s32.totalorder 1, %s23
      %p336 = scmp.lt.s32.totalorder %s23, 3
      %p337 = pnand %p335, %p336
      %p338 = pneg %p337
      // Predicated region
      $region9: #{tpu_custom_call.1} parent=5 // pred_check
        _
      $region10: #{tpu_custom_call.1} parent=5 // pred_check_branch
        %340 = sbr.rel (%p337) target = $region12
      $region11: #{tpu_custom_call.1} parent=5 // pred_region
        %s341 = ssub.s32 %s23, 1
        // Predicated region
        $region13: #{tpu_custom_call.1} parent=11 // pred_check
          %p342 = pneg %p70
        $region14: #{tpu_custom_call.1} parent=11 // pred_check_branch
          %344 = sbr.rel (%p342) target = $region16
        $region15: #{tpu_custom_call.1} parent=11 // pred_region
          _
        $region16: #{tpu_custom_call.1} parent=11 // pred_fallthru
          _
        // Predicated region
        $region17: #{tpu_custom_call.1} parent=11 // pred_check
          %p345 = pneg %p91
        $region18: #{tpu_custom_call.1} parent=11 // pred_check_branch
          %347 = sbr.rel (%p345) target = $region20
        $region19: #{tpu_custom_call.1} parent=11 // pred_region
          _
        $region20: #{tpu_custom_call.1} parent=11 // pred_fallthru
          _
        // Predicated region
        $region21: #{tpu_custom_call.1} parent=11 // pred_check
          %p348 = pneg %p112
        $region22: #{tpu_custom_call.1} parent=11 // pred_check_branch
          %350 = sbr.rel (%p348) target = $region24
        $region23: #{tpu_custom_call.1} parent=11 // pred_region
          _
        $region24: #{tpu_custom_call.1} parent=11 // pred_fallthru
          _
        // Predicated region
        $region25: #{tpu_custom_call.1} parent=11 // pred_check
          %p351 = pneg %p133
        $region26: #{tpu_custom_call.1} parent=11 // pred_check_branch
          %353 = sbr.rel (%p351) target = $region28
        $region27: #{tpu_custom_call.1} parent=11 // pred_region
          _
        $region28: #{tpu_custom_call.1} parent=11 // pred_fallthru
          _
        // Predicated region
        $region29: #{tpu_custom_call.1} parent=11 // pred_check
          %p354 = pneg %p154
        $region30: #{tpu_custom_call.1} parent=11 // pred_check_branch
          %356 = sbr.rel (%p354) target = $region32
        $region31: #{tpu_custom_call.1} parent=11 // pred_region
          _
        $region32: #{tpu_custom_call.1} parent=11 // pred_fallthru
          _
        // Predicated region
        $region33: #{tpu_custom_call.1} parent=11 // pred_check
          %p357 = pneg %p175
        $region34: #{tpu_custom_call.1} parent=11 // pred_check_branch
          %359 = sbr.rel (%p357) target = $region36
        $region35: #{tpu_custom_call.1} parent=11 // pred_region
          _
        $region36: #{tpu_custom_call.1} parent=11 // pred_fallthru
          _
        // Predicated region
        $region37: #{tpu_custom_call.1} parent=11 // pred_check
          %p360 = pneg %p196
        $region38: #{tpu_custom_call.1} parent=11 // pred_check_branch
          %362 = sbr.rel (%p360) target = $region40
        $region39: #{tpu_custom_call.1} parent=11 // pred_region
          _
        $region40: #{tpu_custom_call.1} parent=11 // pred_fallthru
          _
        // Predicated region
        $region41: #{tpu_custom_call.1} parent=11 // pred_check
          %p363 = pneg %p217
        $region42: #{tpu_custom_call.1} parent=11 // pred_check_branch
          %365 = sbr.rel (%p363) target = $region44
        $region43: #{tpu_custom_call.1} parent=11 // pred_region
          _
        $region44: #{tpu_custom_call.1} parent=11 // pred_fallthru
          _
        // Predicated region
        $region45: #{tpu_custom_call.1} parent=11 // pred_check
          %p366 = pneg %p238
        $region46: #{tpu_custom_call.1} parent=11 // pred_check_branch
          %368 = sbr.rel (%p366) target = $region48
        $region47: #{tpu_custom_call.1} parent=11 // pred_region
          %370 = vsyncadd [#allocation3], 0
          %s371 = sshll.u32 %s9, 4
          %s372 = int_to_ptr.hbm [resolvable:$true] %s371
          %s373 = sshll.u32 [#allocation2], 4
          %s374 = int_to_ptr.vmem [resolvable:$true] %s373
          %379 = dma.hbm_to_vmem [thread:$0]  %s372, 256, %s374, [#allocation3], 64, 64, 4
        $region48: #{tpu_custom_call.1} parent=11 // pred_fallthru
          _
        // Predicated region
        $region49: #{tpu_custom_call.1} parent=11 // pred_check
          %p380 = pneg %p259
        $region50: #{tpu_custom_call.1} parent=11 // pred_check_branch
          %382 = sbr.rel (%p380) target = $region52
        $region51: #{tpu_custom_call.1} parent=11 // pred_region
          _
        $region52: #{tpu_custom_call.1} parent=11 // pred_fallthru
          _
        // Predicated region
        $region53: #{tpu_custom_call.1} parent=11 // pred_check
          %p383 = pneg %p280
        $region54: #{tpu_custom_call.1} parent=11 // pred_check_branch
          %385 = sbr.rel (%p383) target = $region56
        $region55: #{tpu_custom_call.1} parent=11 // pred_region
          _
        $region56: #{tpu_custom_call.1} parent=11 // pred_fallthru
          _
        // Predicated region
        $region57: #{tpu_custom_call.1} parent=11 // pred_check
          %p386 = pneg %p301
        $region58: #{tpu_custom_call.1} parent=11 // pred_check_branch
          %388 = sbr.rel (%p386) target = $region60
        $region59: #{tpu_custom_call.1} parent=11 // pred_region
          _
        $region60: #{tpu_custom_call.1} parent=11 // pred_fallthru
          _
      $region12: #{tpu_custom_call.1} parent=5 // pred_fallthru
        _
      %p389 = scmp.lt.s32.totalorder %s23, 2
      // Predicated region
      $region61: #{tpu_custom_call.1} parent=5 // pred_check
        %p390 = pneg %p389
      $region62: #{tpu_custom_call.1} parent=5 // pred_check_branch
        %392 = sbr.rel (%p390) target = $region64
      $region63: #{tpu_custom_call.1} parent=5 // pred_region
        // Predicated region
        $region65: #{tpu_custom_call.1} parent=63 // pred_check
          %p393 = pneg %p43
        $region66: #{tpu_custom_call.1} parent=63 // pred_check_branch
          %395 = sbr.rel (%p393) target = $region68
        $region67: #{tpu_custom_call.1} parent=63 // pred_region
          %s396 = smul.u32 4, %s23
          %p397 = scmp.lt.s32.totalorder %s396, 7
          %s398 = scalar_select %p397, %s396, 7
          %s399 = smul.addr %s398, 8
          %s400 = scalar_lea.vmem %s0, %s399
          %s401 = smul.u32 4, %s23
        $region68: #{tpu_custom_call.1} parent=63 // pred_fallthru
          _
      $region64: #{tpu_custom_call.1} parent=5 // pred_fallthru
        _
      %p402 = scmp.le.s32.totalorder 1, %s23
      %p403 = scmp.lt.s32.totalorder %s23, 3
      %p404 = pnand %p402, %p403
      %p405 = pneg %p404
      // Predicated region
      $region69: #{tpu_custom_call.1} parent=5 // pred_check
        _
      $region70: #{tpu_custom_call.1} parent=5 // pred_check_branch
        %407 = sbr.rel (%p404) target = $region72
      $region71: #{tpu_custom_call.1} parent=5 // pred_region
        %s408 = ssub.s32 %s23, 1
        // Predicated region
        $region73: #{tpu_custom_call.1} parent=71 // pred_check
          %p409 = pneg %p238
        $region74: #{tpu_custom_call.1} parent=71 // pred_check_branch
          %411 = sbr.rel (%p409) target = $region76
        $region75: #{tpu_custom_call.1} parent=71 // pred_region
          %413 = dma.done [#allocation3], 256
        $region76: #{tpu_custom_call.1} parent=71 // pred_fallthru
          _
        %s414 = smul.u32 4, %s28
        %p415 = scmp.lt.s32.totalorder %s414, 7
        %s416 = scalar_select %p415, %s414, 7
        %s417 = smul.addr %s416, 8
        %s418 = scalar_lea.vmem %s0, %s417
        %p419 = pneg %p49
        %p420 = pneg %p46
        %p421 = pneg %p70
        %p422 = pneg %p67
        %p423 = pneg %p91
        %p424 = pneg %p88
        %p425 = pneg %p112
        %p426 = pneg %p109
        %p427 = pneg %p133
        %p428 = pneg %p130
        %p429 = pneg %p154
        %p430 = pneg %p151
        %p431 = pneg %p175
        %p432 = pneg %p172
        %p433 = pneg %p196
        %p434 = pneg %p193
        %p435 = pneg %p217
        %p436 = pneg %p214
        %p437 = pneg %p238
        %p438 = pneg %p235
        %p439 = pneg %p259
        %p440 = pneg %p256
        %p441 = pneg %p280
        %p442 = pneg %p277
        %p443 = pneg %p301
        %p444 = pneg %p298
        %p445 = pneg %p327
        %p446 = pneg %p324
        %s447 = sand.u32 %s314, 1
        %s448 = scalar_lea.sflag [#allocation4], %s447
        %s449 = sand.u32 %s314, 1
        %s450 = smul.addr %s449, 32
        %s451 = scalar_lea.vmem [#allocation5], %s450
        %s452 = smul.u32 4, %s28
        %p453 = scmp.lt.s32.totalorder %s452, 7
        %s454 = scalar_select %p453, %s452, 7
        %s455 = smul.addr %s454, 8
        %s456 = scalar_lea.vmem %s0, %s455
        %s457 = smul.u32 4, %s28
        %s458 = smul.u32 4, %s28
        %v460 = vld [vmem:[%s3] sm:$0xf]
        %v461 = vld [vmem:[%s3 + $0x4] sm:$0xf]
        %v462 = vld [vmem:[%s5] sm:$0xf]
        %v463 = vld [vmem:[%s4] sm:$0xff]
        %v464 = vld [vmem:[%s4 + $0x8] sm:$0xff]
        %v465 = vld [vmem:[%s6] sm:$0xff]
        %v466 = vld [vmem:[%s1] sm:$0x1]
        %v467 = vld [vmem:[%s2] sm:$0x1]
        %v468 = vld [vmem:[%s456] sm:$0xff]
        %vm469 = vcmask 261120
        %v470 = vsel %vm469, %v468, 0.0
        %471 = vadd.xlane.f32.xlu0 %v470
        %v472 = vpop.xlane.xlu0 %471
        %v473 = vmul.f32 %v472, 0.03125
        %v474 = vmul.f32 %v468, %v468
        %v475 = vsel %vm469, %v474, 0.0
        %476 = vadd.xlane.f32.xlu0 %v475
        %v477 = vpop.xlane.xlu0 %476
        %v478 = vmul.f32 %v477, 0.03125
        %v479 = vmul.f32 %v473, %v473
        %v480 = vsub.f32 %v478, %v479
        %v481 = vmax.f32 %v480, 0.0
        %v482 = vsub.f32 %v468, %v473
        %v483 = vadd.f32 %v481, 1e-05
        %v484 = vrsqrt.pop %v483
        %v485 = vmul.f32 %v484, %v483
        %v486 = vmul.f32 %v485, %v484
        %v487 = vmul.f32 0.5, %v486
        %v488 = vsub.f32 1.5, %v487
        %v489 = vmul.f32 %v484, %v488
        %vm490 = vweird.f32 %v483
        %vm491 = vweird.f32 %v484
        %vm492 = vmor %vm490, %vm491
        %v493 = vsel %vm492, %v484, %v489
        %v494 = vmul.f32 %v482, %v493
        %v496 = vperm.slane %v466, 0
        %v498 = vmul.f32 %v494, %v496
        %v500 = vperm.slane %v467, 0
        %v502 = vadd.f32 %v498, %v500
        %v503 = vpack.c.bf16 %v502, %v502
        %505 = vset.pattern.permute.xlu0 0
        %506 = vperm.xlu0 %505, %v463
        %v507 = vpop.permute.xlu0 %506
        %510 = vset.pattern.permute.xlu0 0
        %511 = vperm.xlu0 %510, %v464
        %v512 = vpop.permute.xlu0 %511
        %v516 = vunpack.c.l.b16 %v460
        %v517 = vunpack.c.l.b16 %v461
        %v518 = vpack.c.b16 %v517, %v516
        %vm519 = vcmask 64512
        %v521 = vsel %vm519, %v518, 0
        %vm523 = vcmask 1043456
        %v525 = vsel %vm523, %v503, 0
        %527 = vmatpush.bf16.msra.mxu0 0
        %528 = vmatpush.bf16.msra.mxu0 0
        %529 = vmatpush.bf16.msra.mxu0 0
        %530 = vmatpush.bf16.msra.mxu0 0
        %531 = vmatpush.bf16.msra.mxu0 0
        %532 = vmatpush.bf16.msra.mxu0 0
        %533 = vmatpush.bf16.msra.mxu0 0
        %534 = vmatpush.bf16.msra.mxu0 %v525
        %535 = vmatmul.bf16.gmra.mxu0 %v521
        %v536 = vpop.f32.mrf.mxu0
        %v537 = vadd.f32 %v507, %v536
        %v538 = vpop.f32.mrf.mxu0
        %v539 = vadd.f32 %v512, %v538
        %540 = vdwg.mxu0
        %v541 = vmul.f32 %v537, 0.5
        %v542 = vmul.f32 %v539, 0.5
        %v543 = vmul.f32 %v537, 0.70710677
        %v544 = vmul.f32 %v539, 0.70710677
        %v545 = vand.u32 2147483647, %v543
        %v546 = vand.u32 2147483647, %v544
        %v547 = vmul.f32 %v545, 0.3275911
        %v548 = vmul.f32 %v546, 0.3275911
        %v549 = vadd.f32 %v547, 1.0
        %v550 = vadd.f32 %v548, 1.0
        %v551 = vrcp.pop %v549
        %v552 = vmul.f32 %v549, %v551
        %v553 = vsub.f32 1.0, %v552
        %v554 = vmul.f32 %v551, %v553
        %v555 = vadd.f32 %v551, %v554
        %vm556 = vweird.f32 %v549
        %vm557 = vweird.f32 %v551
        %vm558 = vmor %vm556, %vm557
        %v559 = vsel %vm558, %v551, %v555
        %v560 = vand.u32 2147483647, %v549
        %vm561 = vcmp.eq.f32.partialorder %v560, 8.507059e+37
        %v562 = vand.u32 %v549, 2147483648
        %v563 = vor.u32 1.1754944e-38, %v562
        %v564 = vsel %vm561, %v563, %v559
        %v565 = vmul.f32 1.0, %v564
        %v566 = vrcp.pop %v550
        %v567 = vmul.f32 %v550, %v566
        %v568 = vsub.f32 1.0, %v567
        %v569 = vmul.f32 %v566, %v568
        %v570 = vadd.f32 %v566, %v569
        %vm571 = vweird.f32 %v550
        %vm572 = vweird.f32 %v566
        %vm573 = vmor %vm571, %vm572
        %v574 = vsel %vm573, %v566, %v570
        %v575 = vand.u32 2147483647, %v550
        %vm576 = vcmp.eq.f32.partialorder %v575, 8.507059e+37
        %v577 = vand.u32 %v550, 2147483648
        %v578 = vor.u32 1.1754944e-38, %v577
        %v579 = vsel %vm576, %v578, %v574
        %v580 = vmul.f32 1.0, %v579
        %v581 = vmul.f32 %v565, 1.0614054
        %v582 = vmul.f32 %v580, 1.0614054
        %v583 = vadd.f32 %v581, -1.4531521
        %v584 = vadd.f32 %v582, -1.4531521
        %v585 = vmul.f32 %v583, %v565
        %v586 = vmul.f32 %v584, %v580
        %v587 = vadd.f32 %v585, 1.4214138
        %v588 = vadd.f32 %v586, 1.4214138
        %v589 = vmul.f32 %v587, %v565
        %v590 = vmul.f32 %v588, %v580
        %v591 = vadd.f32 %v589, -0.28449672
        %v592 = vadd.f32 %v590, -0.28449672
        %v593 = vmul.f32 %v591, %v565
        %v594 = vmul.f32 %v592, %v580
        %v595 = vadd.f32 %v593, 0.2548296
        %v596 = vadd.f32 %v594, 0.2548296
        %v597 = vmul.f32 %v595, %v565
        %v598 = vmul.f32 %v596, %v580
        %v599 = vmul.f32 %v545, %v545
        %v600 = vmul.f32 %v546, %v546
        %v601 = vsub.f32 0.0, %v599
        %v602 = vsub.f32 0.0, %v600
        %v603 = vmul.f32 %v601, 1.442695
        %v604 = vpow.pop %v603
        %v605 = vmul.f32 %v602, 1.442695
        %v606 = vpow.pop %v605
        %v607 = vmul.f32 %v597, %v604
        %v608 = vmul.f32 %v598, %v606
        %v609 = vsub.f32 1.0, %v607
        %v610 = vsub.f32 1.0, %v608
        %vm611 = vcmp.lt.f32.partialorder %v543, 0.0
        %vm612 = vcmp.lt.f32.partialorder %v544, 0.0
        %v613 = vsub.f32 0.0, %v609
        %v614 = vsub.f32 0.0, %v610
        %v615 = vsel %vm611, %v613, %v609
        %v616 = vsel %vm612, %v614, %v610
        %v617 = vadd.f32 %v615, 1.0
        %v618 = vadd.f32 %v616, 1.0
        %v619 = vmul.f32 %v541, %v617
        %v620 = vmul.f32 %v542, %v618
        %v621 = vpack.c.bf16 %v620, %v619
        %vm622 = vcmask 130048
        %v624 = vsel %vm622, %v462, 0
        %626 = vmatpush.bf16.msra.mxu0 0
        %627 = vmatpush.bf16.msra.mxu0 0
        %628 = vmatpush.bf16.msra.mxu0 0
        %629 = vmatpush.bf16.msra.mxu0 0
        %630 = vmatpush.bf16.msra.mxu0 0
        %631 = vmatpush.bf16.msra.mxu0 0
        %632 = vmatpush.bf16.msra.mxu0 0
        %633 = vmatpush.bf16.msra.mxu0 %v621
        %634 = vmatmul.bf16.gmra.mxu0 %v624
        %v635 = vpop.f32.mrf.mxu0
        %v636 = vadd.f32 0.0, %v635
        %v637 = vpop.f32.mrf.mxu0
        %638 = vdwg.mxu0
        %v639 = vadd.f32 %v468, %v636
        %641 = vset.pattern.permute.xlu0 0
        %642 = vperm.xlu0 %641, %v465
        %v643 = vpop.permute.xlu0 %642
        %v645 = vadd.f32 %v639, %v643
        %646 = vst.msk [vmem:[%s451] sm:$0xff] %vm469, %v645
        %s647 = scalar_lea.vmem %s456, 8
        %v648 = vld [vmem:[%s647] sm:$0xff]
        %v649 = vsel %vm469, %v648, 0.0
        %650 = vadd.xlane.f32.xlu0 %v649
        %v651 = vpop.xlane.xlu0 %650
        %v652 = vmul.f32 %v651, 0.03125
        %v653 = vmul.f32 %v648, %v648
        %v654 = vsel %vm469, %v653, 0.0
        %655 = vadd.xlane.f32.xlu0 %v654
        %v656 = vpop.xlane.xlu0 %655
        %v657 = vmul.f32 %v656, 0.03125
        %v658 = vmul.f32 %v652, %v652
        %v659 = vsub.f32 %v657, %v658
        %v660 = vmax.f32 %v659, 0.0
        %v661 = vsub.f32 %v648, %v652
        %v662 = vadd.f32 %v660, 1e-05
        %v663 = vrsqrt.pop %v662
        %v664 = vmul.f32 %v663, %v662
        %v665 = vmul.f32 %v664, %v663
        %v666 = vmul.f32 0.5, %v665
        %v667 = vsub.f32 1.5, %v666
        %v668 = vmul.f32 %v663, %v667
        %vm669 = vweird.f32 %v662
        %vm670 = vweird.f32 %v663
        %vm671 = vmor %vm669, %vm670
        %v672 = vsel %vm671, %v663, %v668
        %v673 = vmul.f32 %v661, %v672
        %v674 = vmul.f32 %v673, %v496
        %v675 = vadd.f32 %v674, %v500
        %v676 = vpack.c.bf16 %v675, %v675
        %v678 = vsel %vm523, %v676, 0
        %680 = vmatpush.bf16.msra.mxu0 0
        %681 = vmatpush.bf16.msra.mxu0 0
        %682 = vmatpush.bf16.msra.mxu0 0
        %683 = vmatpush.bf16.msra.mxu0 0
        %684 = vmatpush.bf16.msra.mxu0 0
        %685 = vmatpush.bf16.msra.mxu0 0
        %686 = vmatpush.bf16.msra.mxu0 0
        %687 = vmatpush.bf16.msra.mxu0 %v678
        %688 = vmatmul.bf16.gmra.mxu0 %v521
        %v689 = vpop.f32.mrf.mxu0
        %v690 = vadd.f32 %v507, %v689
        %v691 = vpop.f32.mrf.mxu0
        %v692 = vadd.f32 %v512, %v691
        %693 = vdwg.mxu0
        %v694 = vmul.f32 %v690, 0.5
        %v695 = vmul.f32 %v692, 0.5
        %v696 = vmul.f32 %v690, 0.70710677
        %v697 = vmul.f32 %v692, 0.70710677
        %v698 = vand.u32 2147483647, %v696
        %v699 = vand.u32 2147483647, %v697
        %v700 = vmul.f32 %v698, 0.3275911
        %v701 = vmul.f32 %v699, 0.3275911
        %v702 = vadd.f32 %v700, 1.0
        %v703 = vadd.f32 %v701, 1.0
        %v704 = vrcp.pop %v702
        %v705 = vmul.f32 %v702, %v704
        %v706 = vsub.f32 1.0, %v705
        %v707 = vmul.f32 %v704, %v706
        %v708 = vadd.f32 %v704, %v707
        %vm709 = vweird.f32 %v702
        %vm710 = vweird.f32 %v704
        %vm711 = vmor %vm709, %vm710
        %v712 = vsel %vm711, %v704, %v708
        %v713 = vand.u32 2147483647, %v702
        %vm714 = vcmp.eq.f32.partialorder %v713, 8.507059e+37
        %v715 = vand.u32 %v702, 2147483648
        %v716 = vor.u32 1.1754944e-38, %v715
        %v717 = vsel %vm714, %v716, %v712
        %v718 = vmul.f32 1.0, %v717
        %v719 = vrcp.pop %v703
        %v720 = vmul.f32 %v703, %v719
        %v721 = vsub.f32 1.0, %v720
        %v722 = vmul.f32 %v719, %v721
        %v723 = vadd.f32 %v719, %v722
        %vm724 = vweird.f32 %v703
        %vm725 = vweird.f32 %v719
        %vm726 = vmor %vm724, %vm725
        %v727 = vsel %vm726, %v719, %v723
        %v728 = vand.u32 2147483647, %v703
        %vm729 = vcmp.eq.f32.partialorder %v728, 8.507059e+37
        %v730 = vand.u32 %v703, 2147483648
        %v731 = vor.u32 1.1754944e-38, %v730
        %v732 = vsel %vm729, %v731, %v727
        %v733 = vmul.f32 1.0, %v732
        %v734 = vmul.f32 %v718, 1.0614054
        %v735 = vmul.f32 %v733, 1.0614054
        %v736 = vadd.f32 %v734, -1.4531521
        %v737 = vadd.f32 %v735, -1.4531521
        %v738 = vmul.f32 %v736, %v718
        %v739 = vmul.f32 %v737, %v733
        %v740 = vadd.f32 %v738, 1.4214138
        %v741 = vadd.f32 %v739, 1.4214138
        %v742 = vmul.f32 %v740, %v718
        %v743 = vmul.f32 %v741, %v733
        %v744 = vadd.f32 %v742, -0.28449672
        %v745 = vadd.f32 %v743, -0.28449672
        %v746 = vmul.f32 %v744, %v718
        %v747 = vmul.f32 %v745, %v733
        %v748 = vadd.f32 %v746, 0.2548296
        %v749 = vadd.f32 %v747, 0.2548296
        %v750 = vmul.f32 %v748, %v718
        %v751 = vmul.f32 %v749, %v733
        %v752 = vmul.f32 %v698, %v698
        %v753 = vmul.f32 %v699, %v699
        %v754 = vsub.f32 0.0, %v752
        %v755 = vsub.f32 0.0, %v753
        %v756 = vmul.f32 %v754, 1.442695
        %v757 = vpow.pop %v756
        %v758 = vmul.f32 %v755, 1.442695
        %v759 = vpow.pop %v758
        %v760 = vmul.f32 %v750, %v757
        %v761 = vmul.f32 %v751, %v759
        %v762 = vsub.f32 1.0, %v760
        %v763 = vsub.f32 1.0, %v761
        %vm764 = vcmp.lt.f32.partialorder %v696, 0.0
        %vm765 = vcmp.lt.f32.partialorder %v697, 0.0
        %v766 = vsub.f32 0.0, %v762
        %v767 = vsub.f32 0.0, %v763
        %v768 = vsel %vm764, %v766, %v762
        %v769 = vsel %vm765, %v767, %v763
        %v770 = vadd.f32 %v768, 1.0
        %v771 = vadd.f32 %v769, 1.0
        %v772 = vmul.f32 %v694, %v770
        %v773 = vmul.f32 %v695, %v771
        %v774 = vpack.c.bf16 %v773, %v772
        %775 = vmatpush.bf16.msra.mxu0 0
        %776 = vmatpush.bf16.msra.mxu0 0
        %777 = vmatpush.bf16.msra.mxu0 0
        %778 = vmatpush.bf16.msra.mxu0 0
        %779 = vmatpush.bf16.msra.mxu0 0
        %780 = vmatpush.bf16.msra.mxu0 0
        %781 = vmatpush.bf16.msra.mxu0 0
        %782 = vmatpush.bf16.msra.mxu0 %v774
        %783 = vmatmul.bf16.gmra.mxu0 %v624
        %v784 = vpop.f32.mrf.mxu0
        %v785 = vadd.f32 0.0, %v784
        %v786 = vpop.f32.mrf.mxu0
        %787 = vdwg.mxu0
        %v788 = vadd.f32 %v648, %v785
        %v789 = vadd.f32 %v788, %v643
        %s790 = scalar_lea.vmem %s451, 8 [#allocation5]
        %791 = vst.msk [vmem:[%s790] sm:$0xff] %vm469, %v789
        %s792 = scalar_lea.vmem %s456, 16
        %v793 = vld [vmem:[%s792] sm:$0xff]
        %v794 = vsel %vm469, %v793, 0.0
        %795 = vadd.xlane.f32.xlu0 %v794
        %v796 = vpop.xlane.xlu0 %795
        %v797 = vmul.f32 %v796, 0.03125
        %v798 = vmul.f32 %v793, %v793
        %v799 = vsel %vm469, %v798, 0.0
        %800 = vadd.xlane.f32.xlu0 %v799
        %v801 = vpop.xlane.xlu0 %800
        %v802 = vmul.f32 %v801, 0.03125
        %v803 = vmul.f32 %v797, %v797
        %v804 = vsub.f32 %v802, %v803
        %v805 = vmax.f32 %v804, 0.0
        %v806 = vsub.f32 %v793, %v797
        %v807 = vadd.f32 %v805, 1e-05
        %v808 = vrsqrt.pop %v807
        %v809 = vmul.f32 %v808, %v807
        %v810 = vmul.f32 %v809, %v808
        %v811 = vmul.f32 0.5, %v810
        %v812 = vsub.f32 1.5, %v811
        %v813 = vmul.f32 %v808, %v812
        %vm814 = vweird.f32 %v807
        %vm815 = vweird.f32 %v808
        %vm816 = vmor %vm814, %vm815
        %v817 = vsel %vm816, %v808, %v813
        %v818 = vmul.f32 %v806, %v817
        %v819 = vmul.f32 %v818, %v496
        %v820 = vadd.f32 %v819, %v500
        %v821 = vpack.c.bf16 %v820, %v820
        %v823 = vsel %vm523, %v821, 0
        %825 = vmatpush.bf16.msra.mxu0 0
        %826 = vmatpush.bf16.msra.mxu0 0
        %827 = vmatpush.bf16.msra.mxu0 0
        %828 = vmatpush.bf16.msra.mxu0 0
        %829 = vmatpush.bf16.msra.mxu0 0
        %830 = vmatpush.bf16.msra.mxu0 0
        %831 = vmatpush.bf16.msra.mxu0 0
        %832 = vmatpush.bf16.msra.mxu0 %v823
        %833 = vmatmul.bf16.gmra.mxu0 %v521
        %v834 = vpop.f32.mrf.mxu0
        %v835 = vadd.f32 %v507, %v834
        %v836 = vpop.f32.mrf.mxu0
        %v837 = vadd.f32 %v512, %v836
        %838 = vdwg.mxu0
        %v839 = vmul.f32 %v835, 0.5
        %v840 = vmul.f32 %v837, 0.5
        %v841 = vmul.f32 %v835, 0.70710677
        %v842 = vmul.f32 %v837, 0.70710677
        %v843 = vand.u32 2147483647, %v841
        %v844 = vand.u32 2147483647, %v842
        %v845 = vmul.f32 %v843, 0.3275911
        %v846 = vmul.f32 %v844, 0.3275911
        %v847 = vadd.f32 %v845, 1.0
        %v848 = vadd.f32 %v846, 1.0
        %v849 = vrcp.pop %v847
        %v850 = vmul.f32 %v847, %v849
        %v851 = vsub.f32 1.0, %v850
        %v852 = vmul.f32 %v849, %v851
        %v853 = vadd.f32 %v849, %v852
        %vm854 = vweird.f32 %v847
        %vm855 = vweird.f32 %v849
        %vm856 = vmor %vm854, %vm855
        %v857 = vsel %vm856, %v849, %v853
        %v858 = vand.u32 2147483647, %v847
        %vm859 = vcmp.eq.f32.partialorder %v858, 8.507059e+37
        %v860 = vand.u32 %v847, 2147483648
        %v861 = vor.u32 1.1754944e-38, %v860
        %v862 = vsel %vm859, %v861, %v857
        %v863 = vmul.f32 1.0, %v862
        %v864 = vrcp.pop %v848
        %v865 = vmul.f32 %v848, %v864
        %v866 = vsub.f32 1.0, %v865
        %v867 = vmul.f32 %v864, %v866
        %v868 = vadd.f32 %v864, %v867
        %vm869 = vweird.f32 %v848
        %vm870 = vweird.f32 %v864
        %vm871 = vmor %vm869, %vm870
        %v872 = vsel %vm871, %v864, %v868
        %v873 = vand.u32 2147483647, %v848
        %vm874 = vcmp.eq.f32.partialorder %v873, 8.507059e+37
        %v875 = vand.u32 %v848, 2147483648
        %v876 = vor.u32 1.1754944e-38, %v875
        %v877 = vsel %vm874, %v876, %v872
        %v878 = vmul.f32 1.0, %v877
        %v879 = vmul.f32 %v863, 1.0614054
        %v880 = vmul.f32 %v878, 1.0614054
        %v881 = vadd.f32 %v879, -1.4531521
        %v882 = vadd.f32 %v880, -1.4531521
        %v883 = vmul.f32 %v881, %v863
        %v884 = vmul.f32 %v882, %v878
        %v885 = vadd.f32 %v883, 1.4214138
        %v886 = vadd.f32 %v884, 1.4214138
        %v887 = vmul.f32 %v885, %v863
        %v888 = vmul.f32 %v886, %v878
        %v889 = vadd.f32 %v887, -0.28449672
        %v890 = vadd.f32 %v888, -0.28449672
        %v891 = vmul.f32 %v889, %v863
        %v892 = vmul.f32 %v890, %v878
        %v893 = vadd.f32 %v891, 0.2548296
        %v894 = vadd.f32 %v892, 0.2548296
        %v895 = vmul.f32 %v893, %v863
        %v896 = vmul.f32 %v894, %v878
        %v897 = vmul.f32 %v843, %v843
        %v898 = vmul.f32 %v844, %v844
        %v899 = vsub.f32 0.0, %v897
        %v900 = vsub.f32 0.0, %v898
        %v901 = vmul.f32 %v899, 1.442695
        %v902 = vpow.pop %v901
        %v903 = vmul.f32 %v900, 1.442695
        %v904 = vpow.pop %v903
        %v905 = vmul.f32 %v895, %v902
        %v906 = vmul.f32 %v896, %v904
        %v907 = vsub.f32 1.0, %v905
        %v908 = vsub.f32 1.0, %v906
        %vm909 = vcmp.lt.f32.partialorder %v841, 0.0
        %vm910 = vcmp.lt.f32.partialorder %v842, 0.0
        %v911 = vsub.f32 0.0, %v907
        %v912 = vsub.f32 0.0, %v908
        %v913 = vsel %vm909, %v911, %v907
        %v914 = vsel %vm910, %v912, %v908
        %v915 = vadd.f32 %v913, 1.0
        %v916 = vadd.f32 %v914, 1.0
        %v917 = vmul.f32 %v839, %v915
        %v918 = vmul.f32 %v840, %v916
        %v919 = vpack.c.bf16 %v918, %v917
        %920 = vmatpush.bf16.msra.mxu0 0
        %921 = vmatpush.bf16.msra.mxu0 0
        %922 = vmatpush.bf16.msra.mxu0 0
        %923 = vmatpush.bf16.msra.mxu0 0
        %924 = vmatpush.bf16.msra.mxu0 0
        %925 = vmatpush.bf16.msra.mxu0 0
        %926 = vmatpush.bf16.msra.mxu0 0
        %927 = vmatpush.bf16.msra.mxu0 %v919
        %928 = vmatmul.bf16.gmra.mxu0 %v624
        %v929 = vpop.f32.mrf.mxu0
        %v930 = vadd.f32 0.0, %v929
        %v931 = vpop.f32.mrf.mxu0
        %932 = vdwg.mxu0
        %v933 = vadd.f32 %v793, %v930
        %v934 = vadd.f32 %v933, %v643
        %s935 = scalar_lea.vmem %s451, 16 [#allocation5]
        %936 = vst.msk [vmem:[%s935] sm:$0xff] %vm469, %v934
        %s937 = scalar_lea.vmem %s456, 24
        %v938 = vld [vmem:[%s937] sm:$0xff]
        %v939 = vsel %vm469, %v938, 0.0
        %940 = vadd.xlane.f32.xlu0 %v939
        %v941 = vpop.xlane.xlu0 %940
        %v942 = vmul.f32 %v941, 0.03125
        %v943 = vmul.f32 %v938, %v938
        %v944 = vsel %vm469, %v943, 0.0
        %945 = vadd.xlane.f32.xlu0 %v944
        %v946 = vpop.xlane.xlu0 %945
        %v947 = vmul.f32 %v946, 0.03125
        %v948 = vmul.f32 %v942, %v942
        %v949 = vsub.f32 %v947, %v948
        %v950 = vmax.f32 %v949, 0.0
        %v951 = vsub.f32 %v938, %v942
        %v952 = vadd.f32 %v950, 1e-05
        %v953 = vrsqrt.pop %v952
        %v954 = vmul.f32 %v953, %v952
        %v955 = vmul.f32 %v954, %v953
        %v956 = vmul.f32 0.5, %v955
        %v957 = vsub.f32 1.5, %v956
        %v958 = vmul.f32 %v953, %v957
        %vm959 = vweird.f32 %v952
        %vm960 = vweird.f32 %v953
        %vm961 = vmor %vm959, %vm960
        %v962 = vsel %vm961, %v953, %v958
        %v963 = vmul.f32 %v951, %v962
        %v964 = vmul.f32 %v963, %v496
        %v965 = vadd.f32 %v964, %v500
        %v966 = vpack.c.bf16 %v965, %v965
        %v968 = vsel %vm523, %v966, 0
        %970 = vmatpush.bf16.msra.mxu0 0
        %971 = vmatpush.bf16.msra.mxu0 0
        %972 = vmatpush.bf16.msra.mxu0 0
        %973 = vmatpush.bf16.msra.mxu0 0
        %974 = vmatpush.bf16.msra.mxu0 0
        %975 = vmatpush.bf16.msra.mxu0 0
        %976 = vmatpush.bf16.msra.mxu0 0
        %977 = vmatpush.bf16.msra.mxu0 %v968
        %978 = vmatmul.bf16.gmra.mxu0 %v521
        %v979 = vpop.f32.mrf.mxu0
        %v980 = vadd.f32 %v507, %v979
        %v981 = vpop.f32.mrf.mxu0
        %v982 = vadd.f32 %v512, %v981
        %983 = vdwg.mxu0
        %v984 = vmul.f32 %v980, 0.5
        %v985 = vmul.f32 %v982, 0.5
        %v986 = vmul.f32 %v980, 0.70710677
        %v987 = vmul.f32 %v982, 0.70710677
        %v988 = vand.u32 2147483647, %v986
        %v989 = vand.u32 2147483647, %v987
        %v990 = vmul.f32 %v988, 0.3275911
        %v991 = vmul.f32 %v989, 0.3275911
        %v992 = vadd.f32 %v990, 1.0
        %v993 = vadd.f32 %v991, 1.0
        %v994 = vrcp.pop %v992
        %v995 = vmul.f32 %v992, %v994
        %v996 = vsub.f32 1.0, %v995
        %v997 = vmul.f32 %v994, %v996
        %v998 = vadd.f32 %v994, %v997
        %vm999 = vweird.f32 %v992
        %vm1000 = vweird.f32 %v994
        %vm1001 = vmor %vm999, %vm1000
        %v1002 = vsel %vm1001, %v994, %v998
        %v1003 = vand.u32 2147483647, %v992
        %vm1004 = vcmp.eq.f32.partialorder %v1003, 8.507059e+37
        %v1005 = vand.u32 %v992, 2147483648
        %v1006 = vor.u32 1.1754944e-38, %v1005
        %v1007 = vsel %vm1004, %v1006, %v1002
        %v1008 = vmul.f32 1.0, %v1007
        %v1009 = vrcp.pop %v993
        %v1010 = vmul.f32 %v993, %v1009
        %v1011 = vsub.f32 1.0, %v1010
        %v1012 = vmul.f32 %v1009, %v1011
        %v1013 = vadd.f32 %v1009, %v1012
        %vm1014 = vweird.f32 %v993
        %vm1015 = vweird.f32 %v1009
        %vm1016 = vmor %vm1014, %vm1015
        %v1017 = vsel %vm1016, %v1009, %v1013
        %v1018 = vand.u32 2147483647, %v993
        %vm1019 = vcmp.eq.f32.partialorder %v1018, 8.507059e+37
        %v1020 = vand.u32 %v993, 2147483648
        %v1021 = vor.u32 1.1754944e-38, %v1020
        %v1022 = vsel %vm1019, %v1021, %v1017
        %v1023 = vmul.f32 1.0, %v1022
        %v1024 = vmul.f32 %v1008, 1.0614054
        %v1025 = vmul.f32 %v1023, 1.0614054
        %v1026 = vadd.f32 %v1024, -1.4531521
        %v1027 = vadd.f32 %v1025, -1.4531521
        %v1028 = vmul.f32 %v1026, %v1008
        %v1029 = vmul.f32 %v1027, %v1023
        %v1030 = vadd.f32 %v1028, 1.4214138
        %v1031 = vadd.f32 %v1029, 1.4214138
        %v1032 = vmul.f32 %v1030, %v1008
        %v1033 = vmul.f32 %v1031, %v1023
        %v1034 = vadd.f32 %v1032, -0.28449672
        %v1035 = vadd.f32 %v1033, -0.28449672
        %v1036 = vmul.f32 %v1034, %v1008
        %v1037 = vmul.f32 %v1035, %v1023
        %v1038 = vadd.f32 %v1036, 0.2548296
        %v1039 = vadd.f32 %v1037, 0.2548296
        %v1040 = vmul.f32 %v1038, %v1008
        %v1041 = vmul.f32 %v1039, %v1023
        %v1042 = vmul.f32 %v988, %v988
        %v1043 = vmul.f32 %v989, %v989
        %v1044 = vsub.f32 0.0, %v1042
        %v1045 = vsub.f32 0.0, %v1043
        %v1046 = vmul.f32 %v1044, 1.442695
        %v1047 = vpow.pop %v1046
        %v1048 = vmul.f32 %v1045, 1.442695
        %v1049 = vpow.pop %v1048
        %v1050 = vmul.f32 %v1040, %v1047
        %v1051 = vmul.f32 %v1041, %v1049
        %v1052 = vsub.f32 1.0, %v1050
        %v1053 = vsub.f32 1.0, %v1051
        %vm1054 = vcmp.lt.f32.partialorder %v986, 0.0
        %vm1055 = vcmp.lt.f32.partialorder %v987, 0.0
        %v1056 = vsub.f32 0.0, %v1052
        %v1057 = vsub.f32 0.0, %v1053
        %v1058 = vsel %vm1054, %v1056, %v1052
        %v1059 = vsel %vm1055, %v1057, %v1053
        %v1060 = vadd.f32 %v1058, 1.0
        %v1061 = vadd.f32 %v1059, 1.0
        %v1062 = vmul.f32 %v984, %v1060
        %v1063 = vmul.f32 %v985, %v1061
        %v1064 = vpack.c.bf16 %v1063, %v1062
        %1065 = vmatpush.bf16.msra.mxu0 0
        %1066 = vmatpush.bf16.msra.mxu0 0
        %1067 = vmatpush.bf16.msra.mxu0 0
        %1068 = vmatpush.bf16.msra.mxu0 0
        %1069 = vmatpush.bf16.msra.mxu0 0
        %1070 = vmatpush.bf16.msra.mxu0 0
        %1071 = vmatpush.bf16.msra.mxu0 0
        %1072 = vmatpush.bf16.msra.mxu0 %v1064
        %1073 = vmatmul.bf16.gmra.mxu0 %v624
        %v1074 = vpop.f32.mrf.mxu0
        %v1075 = vadd.f32 0.0, %v1074
        %v1076 = vpop.f32.mrf.mxu0
        %1077 = vdwg.mxu0
        %v1078 = vadd.f32 %v938, %v1075
        %v1079 = vadd.f32 %v1078, %v643
        %s1080 = scalar_lea.vmem %s451, 24 [#allocation5]
        %1081 = vst.msk [vmem:[%s1080] sm:$0xff] %vm469, %v1079
        %v1082 = vld [vmem:[%s451] sm:$0xff]
        %v1083 = vld [vmem:[%s451 + $0x8] sm:$0xff]
        %v1084 = vld [vmem:[%s451 + $0x10] sm:$0xff]
        %v1085 = vld [vmem:[%s451 + $0x18] sm:$0xff]
        %v1086 = vld [vmem:[%s7] sm:$0x1]
        %v1087 = vld [vmem:[%s8] sm:$0x1]
        %v1088 = vsel %vm469, %v1082, 0.0
        %1089 = vadd.xlane.f32.xlu0 %v1088
        %v1090 = vpop.xlane.xlu0 %1089
        %v1091 = vsel %vm469, %v1083, 0.0
        %1092 = vadd.xlane.f32.xlu0 %v1091
        %v1093 = vpop.xlane.xlu0 %1092
        %v1094 = vsel %vm469, %v1084, 0.0
        %1095 = vadd.xlane.f32.xlu0 %v1094
        %v1096 = vpop.xlane.xlu0 %1095
        %v1097 = vsel %vm469, %v1085, 0.0
        %1098 = vadd.xlane.f32.xlu0 %v1097
        %v1099 = vpop.xlane.xlu0 %1098
        %v1100 = vmul.f32 %v1090, 0.03125
        %v1101 = vmul.f32 %v1093, 0.03125
        %v1102 = vmul.f32 %v1096, 0.03125
        %v1103 = vmul.f32 %v1099, 0.03125
        %v1104 = vmul.f32 %v1082, %v1082
        %v1105 = vmul.f32 %v1083, %v1083
        %v1106 = vmul.f32 %v1084, %v1084
        %v1107 = vmul.f32 %v1085, %v1085
        %v1108 = vsel %vm469, %v1104, 0.0
        %1109 = vadd.xlane.f32.xlu0 %v1108
        %v1110 = vpop.xlane.xlu0 %1109
        %v1111 = vsel %vm469, %v1105, 0.0
        %1112 = vadd.xlane.f32.xlu0 %v1111
        %v1113 = vpop.xlane.xlu0 %1112
        %v1114 = vsel %vm469, %v1106, 0.0
        %1115 = vadd.xlane.f32.xlu0 %v1114
        %v1116 = vpop.xlane.xlu0 %1115
        %v1117 = vsel %vm469, %v1107, 0.0
        %1118 = vadd.xlane.f32.xlu0 %v1117
        %v1119 = vpop.xlane.xlu0 %1118
        %v1120 = vmul.f32 %v1110, 0.03125
        %v1121 = vmul.f32 %v1113, 0.03125
        %v1122 = vmul.f32 %v1116, 0.03125
        %v1123 = vmul.f32 %v1119, 0.03125
        %v1124 = vmul.f32 %v1100, %v1100
        %v1125 = vmul.f32 %v1101, %v1101
        %v1126 = vmul.f32 %v1102, %v1102
        %v1127 = vmul.f32 %v1103, %v1103
        %v1128 = vsub.f32 %v1120, %v1124
        %v1129 = vsub.f32 %v1121, %v1125
        %v1130 = vsub.f32 %v1122, %v1126
        %v1131 = vsub.f32 %v1123, %v1127
        %v1132 = vmax.f32 %v1128, 0.0
        %v1133 = vmax.f32 %v1129, 0.0
        %v1134 = vmax.f32 %v1130, 0.0
        %v1135 = vmax.f32 %v1131, 0.0
        %v1136 = vsub.f32 %v1082, %v1100
        %v1137 = vsub.f32 %v1083, %v1101
        %v1138 = vsub.f32 %v1084, %v1102
        %v1139 = vsub.f32 %v1085, %v1103
        %v1140 = vadd.f32 %v1132, 1e-05
        %v1141 = vadd.f32 %v1133, 1e-05
        %v1142 = vadd.f32 %v1134, 1e-05
        %v1143 = vadd.f32 %v1135, 1e-05
        %v1144 = vrsqrt.pop %v1140
        %v1145 = vmul.f32 %v1144, %v1140
        %v1146 = vmul.f32 %v1145, %v1144
        %v1147 = vmul.f32 0.5, %v1146
        %v1148 = vsub.f32 1.5, %v1147
        %v1149 = vmul.f32 %v1144, %v1148
        %vm1150 = vweird.f32 %v1140
        %vm1151 = vweird.f32 %v1144
        %vm1152 = vmor %vm1150, %vm1151
        %v1153 = vsel %vm1152, %v1144, %v1149
        %v1154 = vrsqrt.pop %v1141
        %v1155 = vmul.f32 %v1154, %v1141
        %v1156 = vmul.f32 %v1155, %v1154
        %v1157 = vmul.f32 0.5, %v1156
        %v1158 = vsub.f32 1.5, %v1157
        %v1159 = vmul.f32 %v1154, %v1158
        %vm1160 = vweird.f32 %v1141
        %vm1161 = vweird.f32 %v1154
        %vm1162 = vmor %vm1160, %vm1161
        %v1163 = vsel %vm1162, %v1154, %v1159
        %v1164 = vrsqrt.pop %v1142
        %v1165 = vmul.f32 %v1164, %v1142
        %v1166 = vmul.f32 %v1165, %v1164
        %v1167 = vmul.f32 0.5, %v1166
        %v1168 = vsub.f32 1.5, %v1167
        %v1169 = vmul.f32 %v1164, %v1168
        %vm1170 = vweird.f32 %v1142
        %vm1171 = vweird.f32 %v1164
        %vm1172 = vmor %vm1170, %vm1171
        %v1173 = vsel %vm1172, %v1164, %v1169
        %v1174 = vrsqrt.pop %v1143
        %v1175 = vmul.f32 %v1174, %v1143
        %v1176 = vmul.f32 %v1175, %v1174
        %v1177 = vmul.f32 0.5, %v1176
        %v1178 = vsub.f32 1.5, %v1177
        %v1179 = vmul.f32 %v1174, %v1178
        %vm1180 = vweird.f32 %v1143
        %vm1181 = vweird.f32 %v1174
        %vm1182 = vmor %vm1180, %vm1181
        %v1183 = vsel %vm1182, %v1174, %v1179
        %v1184 = vmul.f32 %v1136, %v1153
        %v1185 = vmul.f32 %v1137, %v1163
        %v1186 = vmul.f32 %v1138, %v1173
        %v1187 = vmul.f32 %v1139, %v1183
        %v1189 = vperm.slane %v1086, 0
        %v1191 = vmul.f32 %v1184, %v1189
        %v1192 = vmul.f32 %v1185, %v1189
        %v1193 = vmul.f32 %v1186, %v1189
        %v1194 = vmul.f32 %v1187, %v1189
        %v1196 = vperm.slane %v1087, 0
        %v1198 = vadd.f32 %v1191, %v1196
        %v1199 = vadd.f32 %v1192, %v1196
        %v1200 = vadd.f32 %v1193, %v1196
        %v1201 = vadd.f32 %v1194, %v1196
        %v1202 = vpack.c.bf16 %v1199, %v1198
        %v1203 = vpack.c.bf16 %v1201, %v1200
        %v1204 = vld [vmem:[#allocation2] sm:$0xf]
        %v1205 = vld [vmem:[#allocation2 + $0x4] sm:$0xf]
        %v1206 = vld [vmem:[#allocation2 + $0x8] sm:$0xf]
        %v1207 = vld [vmem:[#allocation2 + $0xc] sm:$0xf]
        %v1208 = vld [vmem:[%s10] sm:$0x1]
        %v1210 = vperm.slane %v1208, 0
        %v1216 = vunpack.c.l.b16 %v1204
        %v1217 = vunpack.c.l.b16 %v1205
        %v1218 = vunpack.c.l.b16 %v1206
        %v1219 = vunpack.c.l.b16 %v1207
        %v1220 = vpack.c.b16 %v1217, %v1216
        %v1221 = vpack.c.b16 %v1219, %v1218
        %v1225 = vsel %vm469, %v1202, 0
        %v1228 = vsel %vm469, %v1203, 0
        %1230 = vmatpush.bf16.msra.mxu0 0
        %1231 = vmatpush.bf16.msra.mxu0 0
        %1232 = vmatpush.bf16.msra.mxu0 0
        %1233 = vmatpush.bf16.msra.mxu0 0
        %1234 = vmatpush.bf16.msra.mxu0 0
        %1235 = vmatpush.bf16.msra.mxu0 0
        %1236 = vmatpush.bf16.msra.mxu0 %v1221
        %1237 = vmatpush.bf16.msra.mxu0 %v1220
        %1238 = vmatmul.bf16.gmra.mxu0 %v1225
        %v1239 = vpop.f32.mrf.mxu0
        %v1240 = vadd.f32 %v1210, %v1239
        %v1241 = vpop.f32.mrf.mxu0
        %v1242 = vadd.f32 %v1210, %v1241
        %1243 = vmatmul.bf16.gmra.mxu0 %v1228
        %v1244 = vpop.f32.mrf.mxu0
        %v1245 = vadd.f32 %v1210, %v1244
        %v1246 = vpop.f32.mrf.mxu0
        %v1247 = vadd.f32 %v1210, %v1246
        %1248 = vdwg.mxu0
        %v1249 = vmul.f32 %v1240, 0.5
        %v1250 = vmul.f32 %v1242, 0.5
        %v1251 = vmul.f32 %v1245, 0.5
        %v1252 = vmul.f32 %v1247, 0.5
        %v1253 = vmul.f32 %v1240, 0.70710677
        %v1254 = vmul.f32 %v1242, 0.70710677
        %v1255 = vmul.f32 %v1245, 0.70710677
        %v1256 = vmul.f32 %v1247, 0.70710677
        %v1257 = vand.u32 2147483647, %v1253
        %v1258 = vand.u32 2147483647, %v1254
        %v1259 = vand.u32 2147483647, %v1255
        %v1260 = vand.u32 2147483647, %v1256
        %v1261 = vmul.f32 %v1257, 0.3275911
        %v1262 = vmul.f32 %v1258, 0.3275911
        %v1263 = vmul.f32 %v1259, 0.3275911
        %v1264 = vmul.f32 %v1260, 0.3275911
        %v1265 = vadd.f32 %v1261, 1.0
        %v1266 = vadd.f32 %v1262, 1.0
        %v1267 = vadd.f32 %v1263, 1.0
        %v1268 = vadd.f32 %v1264, 1.0
        %v1269 = vrcp.pop %v1265
        %v1270 = vmul.f32 %v1265, %v1269
        %v1271 = vsub.f32 1.0, %v1270
        %v1272 = vmul.f32 %v1269, %v1271
        %v1273 = vadd.f32 %v1269, %v1272
        %vm1274 = vweird.f32 %v1265
        %vm1275 = vweird.f32 %v1269
        %vm1276 = vmor %vm1274, %vm1275
        %v1277 = vsel %vm1276, %v1269, %v1273
        %v1278 = vand.u32 2147483647, %v1265
        %vm1279 = vcmp.eq.f32.partialorder %v1278, 8.507059e+37
        %v1280 = vand.u32 %v1265, 2147483648
        %v1281 = vor.u32 1.1754944e-38, %v1280
        %v1282 = vsel %vm1279, %v1281, %v1277
        %v1283 = vmul.f32 1.0, %v1282
        %v1284 = vrcp.pop %v1266
        %v1285 = vmul.f32 %v1266, %v1284
        %v1286 = vsub.f32 1.0, %v1285
        %v1287 = vmul.f32 %v1284, %v1286
        %v1288 = vadd.f32 %v1284, %v1287
        %vm1289 = vweird.f32 %v1266
        %vm1290 = vweird.f32 %v1284
        %vm1291 = vmor %vm1289, %vm1290
        %v1292 = vsel %vm1291, %v1284, %v1288
        %v1293 = vand.u32 2147483647, %v1266
        %vm1294 = vcmp.eq.f32.partialorder %v1293, 8.507059e+37
        %v1295 = vand.u32 %v1266, 2147483648
        %v1296 = vor.u32 1.1754944e-38, %v1295
        %v1297 = vsel %vm1294, %v1296, %v1292
        %v1298 = vmul.f32 1.0, %v1297
        %v1299 = vrcp.pop %v1267
        %v1300 = vmul.f32 %v1267, %v1299
        %v1301 = vsub.f32 1.0, %v1300
        %v1302 = vmul.f32 %v1299, %v1301
        %v1303 = vadd.f32 %v1299, %v1302
        %vm1304 = vweird.f32 %v1267
        %vm1305 = vweird.f32 %v1299
        %vm1306 = vmor %vm1304, %vm1305
        %v1307 = vsel %vm1306, %v1299, %v1303
        %v1308 = vand.u32 2147483647, %v1267
        %vm1309 = vcmp.eq.f32.partialorder %v1308, 8.507059e+37
        %v1310 = vand.u32 %v1267, 2147483648
        %v1311 = vor.u32 1.1754944e-38, %v1310
        %v1312 = vsel %vm1309, %v1311, %v1307
        %v1313 = vmul.f32 1.0, %v1312
        %v1314 = vrcp.pop %v1268
        %v1315 = vmul.f32 %v1268, %v1314
        %v1316 = vsub.f32 1.0, %v1315
        %v1317 = vmul.f32 %v1314, %v1316
        %v1318 = vadd.f32 %v1314, %v1317
        %vm1319 = vweird.f32 %v1268
        %vm1320 = vweird.f32 %v1314
        %vm1321 = vmor %vm1319, %vm1320
        %v1322 = vsel %vm1321, %v1314, %v1318
        %v1323 = vand.u32 2147483647, %v1268
        %vm1324 = vcmp.eq.f32.partialorder %v1323, 8.507059e+37
        %v1325 = vand.u32 %v1268, 2147483648
        %v1326 = vor.u32 1.1754944e-38, %v1325
        %v1327 = vsel %vm1324, %v1326, %v1322
        %v1328 = vmul.f32 1.0, %v1327
        %v1329 = vmul.f32 %v1283, 1.0614054
        %v1330 = vmul.f32 %v1298, 1.0614054
        %v1331 = vmul.f32 %v1313, 1.0614054
        %v1332 = vmul.f32 %v1328, 1.0614054
        %v1333 = vadd.f32 %v1329, -1.4531521
        %v1334 = vadd.f32 %v1330, -1.4531521
        %v1335 = vadd.f32 %v1331, -1.4531521
        %v1336 = vadd.f32 %v1332, -1.4531521
        %v1337 = vmul.f32 %v1333, %v1283
        %v1338 = vmul.f32 %v1334, %v1298
        %v1339 = vmul.f32 %v1335, %v1313
        %v1340 = vmul.f32 %v1336, %v1328
        %v1341 = vadd.f32 %v1337, 1.4214138
        %v1342 = vadd.f32 %v1338, 1.4214138
        %v1343 = vadd.f32 %v1339, 1.4214138
        %v1344 = vadd.f32 %v1340, 1.4214138
        %v1345 = vmul.f32 %v1341, %v1283
        %v1346 = vmul.f32 %v1342, %v1298
        %v1347 = vmul.f32 %v1343, %v1313
        %v1348 = vmul.f32 %v1344, %v1328
        %v1349 = vadd.f32 %v1345, -0.28449672
        %v1350 = vadd.f32 %v1346, -0.28449672
        %v1351 = vadd.f32 %v1347, -0.28449672
        %v1352 = vadd.f32 %v1348, -0.28449672
        %v1353 = vmul.f32 %v1349, %v1283
        %v1354 = vmul.f32 %v1350, %v1298
        %v1355 = vmul.f32 %v1351, %v1313
        %v1356 = vmul.f32 %v1352, %v1328
        %v1357 = vadd.f32 %v1353, 0.2548296
        %v1358 = vadd.f32 %v1354, 0.2548296
        %v1359 = vadd.f32 %v1355, 0.2548296
        %v1360 = vadd.f32 %v1356, 0.2548296
        %v1361 = vmul.f32 %v1357, %v1283
        %v1362 = vmul.f32 %v1358, %v1298
        %v1363 = vmul.f32 %v1359, %v1313
        %v1364 = vmul.f32 %v1360, %v1328
        %v1365 = vmul.f32 %v1257, %v1257
        %v1366 = vmul.f32 %v1258, %v1258
        %v1367 = vmul.f32 %v1259, %v1259
        %v1368 = vmul.f32 %v1260, %v1260
        %v1369 = vsub.f32 0.0, %v1365
        %v1370 = vsub.f32 0.0, %v1366
        %v1371 = vsub.f32 0.0, %v1367
        %v1372 = vsub.f32 0.0, %v1368
        %v1373 = vmul.f32 %v1369, 1.442695
        %v1374 = vpow.pop %v1373
        %v1375 = vmul.f32 %v1370, 1.442695
        %v1376 = vpow.pop %v1375
        %v1377 = vmul.f32 %v1371, 1.442695
        %v1378 = vpow.pop %v1377
        %v1379 = vmul.f32 %v1372, 1.442695
        %v1380 = vpow.pop %v1379
        %v1381 = vmul.f32 %v1361, %v1374
        %v1382 = vmul.f32 %v1362, %v1376
        %v1383 = vmul.f32 %v1363, %v1378
        %v1384 = vmul.f32 %v1364, %v1380
        %v1385 = vsub.f32 1.0, %v1381
        %v1386 = vsub.f32 1.0, %v1382
        %v1387 = vsub.f32 1.0, %v1383
        %v1388 = vsub.f32 1.0, %v1384
        %vm1389 = vcmp.lt.f32.partialorder %v1253, 0.0
        %vm1390 = vcmp.lt.f32.partialorder %v1254, 0.0
        %vm1391 = vcmp.lt.f32.partialorder %v1255, 0.0
        %vm1392 = vcmp.lt.f32.partialorder %v1256, 0.0
        %v1393 = vsub.f32 0.0, %v1385
        %v1394 = vsub.f32 0.0, %v1386
        %v1395 = vsub.f32 0.0, %v1387
        %v1396 = vsub.f32 0.0, %v1388
        %v1397 = vsel %vm1389, %v1393, %v1385
        %v1398 = vsel %vm1390, %v1394, %v1386
        %v1399 = vsel %vm1391, %v1395, %v1387
        %v1400 = vsel %vm1392, %v1396, %v1388
        %v1401 = vadd.f32 %v1397, 1.0
        %v1402 = vadd.f32 %v1398, 1.0
        %v1403 = vadd.f32 %v1399, 1.0
        %v1404 = vadd.f32 %v1400, 1.0
        %v1405 = vmul.f32 %v1249, %v1401
        %v1406 = vmul.f32 %v1250, %v1402
        %v1407 = vmul.f32 %v1251, %v1403
        %v1408 = vmul.f32 %v1252, %v1404
        %v1409 = vpack.c.bf16 %v1406, %v1405
        %v1410 = vpack.c.bf16 %v1408, %v1407
        %v1411 = vld [vmem:[%s11] sm:$0xf]
        %v1412 = vld [vmem:[%s11 + $0x4] sm:$0xf]
        %v1413 = vld [vmem:[%s11 + $0x8] sm:$0xf]
        %v1414 = vld [vmem:[%s11 + $0xc] sm:$0xf]
        %v1415 = vld [vmem:[%s11 + $0x10] sm:$0xf]
        %v1416 = vld [vmem:[%s11 + $0x14] sm:$0xf]
        %v1417 = vld [vmem:[%s11 + $0x18] sm:$0xf]
        %v1418 = vld [vmem:[%s11 + $0x1c] sm:$0xf]
        %v1427 = vunpack.c.l.b16 %v1411
        %v1428 = vunpack.c.l.b16 %v1412
        %v1429 = vunpack.c.l.b16 %v1413
        %v1430 = vunpack.c.l.b16 %v1414
        %v1431 = vunpack.c.l.b16 %v1415
        %v1432 = vunpack.c.l.b16 %v1416
        %v1433 = vunpack.c.l.b16 %v1417
        %v1434 = vunpack.c.l.b16 %v1418
        %v1435 = vpack.c.b16 %v1428, %v1427
        %v1436 = vpack.c.b16 %v1430, %v1429
        %v1437 = vpack.c.b16 %v1432, %v1431
        %v1438 = vpack.c.b16 %v1434, %v1433
        %vm1443 = vcmask 523264
        %v1445 = vsel %vm1443, %v1409, 0
        %v1448 = vsel %vm1443, %v1410, 0
        %1450 = vmatpush.bf16.msra.mxu0 0
        %1451 = vmatpush.bf16.msra.mxu0 0
        %1452 = vmatpush.bf16.msra.mxu0 0
        %1453 = vmatpush.bf16.msra.mxu0 0
        %1454 = vmatpush.bf16.msra.mxu0 %v1438
        %1455 = vmatpush.bf16.msra.mxu0 %v1437
        %1456 = vmatpush.bf16.msra.mxu0 %v1436
        %1457 = vmatpush.bf16.msra.mxu0 %v1435
        %1458 = vmatmul.bf16.gmra.mxu0 %v1445
        %v1459 = vpop.f32.mrf.mxu0
        %v1460 = vadd.f32 0.0, %v1459
        %v1461 = vpop.f32.mrf.mxu0
        %v1462 = vadd.f32 0.0, %v1461
        %1463 = vmatmul.bf16.gmra.mxu0 %v1448
        %v1464 = vpop.f32.mrf.mxu0
        %v1465 = vadd.f32 0.0, %v1464
        %v1466 = vpop.f32.mrf.mxu0
        %v1467 = vadd.f32 0.0, %v1466
        %1468 = vdwg.mxu0
        %v1469 = vadd.f32 %v1082, %v1460
        %v1470 = vadd.f32 %v1083, %v1462
        %v1471 = vadd.f32 %v1084, %v1465
        %v1472 = vadd.f32 %v1085, %v1467
        %v1473 = vld [vmem:[%s12] sm:$0x1]
        %v1475 = vperm.slane %v1473, 0
        %v1477 = vadd.f32 %v1469, %v1475
        %v1478 = vadd.f32 %v1470, %v1475
        %v1479 = vadd.f32 %v1471, %v1475
        %v1480 = vadd.f32 %v1472, %v1475
        %1481 = vst.msk [vmem:[%s451] sm:$0xff] %vm469, %v1477
        %1482 = vst.msk [vmem:[%s451 + $0x8] sm:$0xff] %vm469, %v1478
        %1483 = vst.msk [vmem:[%s451 + $0x10] sm:$0xff] %vm469, %v1479
        %1484 = vst.msk [vmem:[%s451 + $0x18] sm:$0xff] %vm469, %v1480
        %s1485 = sand.u32 %s314, 1
        %s1486 = scalar_lea.sflag [#allocation4], %s1485
        %s1487 = sand.u32 %s314, 1
        %s1488 = smul.addr %s1487, 32
        %s1489 = scalar_lea.vmem [#allocation5], %s1488
        // Predicated region
        $region77: #{tpu_custom_call.1} parent=71 // pred_check
          %p1490 = pneg %p324
        $region78: #{tpu_custom_call.1} parent=71 // pred_check_branch
          %1492 = sbr.rel (%p1490) target = $region80
        $region79: #{tpu_custom_call.1} parent=71 // pred_region
          %s1493 = smul.u32 4, %s28
          %1495 = vsyncadd %s1486, 0
          %s1496 = smul.addr %s1493, 8
          %s1497 = scalar_lea.hbm %s13, %s1496
          %s1498 = sshll.u32 %s1489, 4
          %s1499 = int_to_ptr.vmem [resolvable:$true] %s1498
          %s1500 = sshll.u32 %s1497, 4
          %s1501 = int_to_ptr.hbm [resolvable:$true] %s1500
          %1506 = dma.vmem_to_hbm [thread:$0]  %s1499, 512, %s1501, %s1486, 128, 128, 8
        $region80: #{tpu_custom_call.1} parent=71 // pred_fallthru
          _
      $region72: #{tpu_custom_call.1} parent=5 // pred_fallthru
        _
      %p1507 = scmp.le.s32.totalorder 2, %s23
      // Predicated region
      $region81: #{tpu_custom_call.1} parent=5 // pred_check
        %p1508 = pneg %p1507
      $region82: #{tpu_custom_call.1} parent=5 // pred_check_branch
        %1510 = sbr.rel (%p1508) target = $region84
      $region83: #{tpu_custom_call.1} parent=5 // pred_region
        %s1511 = ssub.s32 %s23, 2
        // Predicated region
        $region85: #{tpu_custom_call.1} parent=83 // pred_check
          %p1512 = pneg %p330
        $region86: #{tpu_custom_call.1} parent=83 // pred_check_branch
          %1514 = sbr.rel (%p1512) target = $region88
        $region87: #{tpu_custom_call.1} parent=83 // pred_region
          %s1515 = sand.u32 %s315, 1
          %s1516 = scalar_lea.sflag [#allocation4], %s1515
          %s1517 = sand.u32 %s315, 1
          %s1518 = smul.addr %s1517, 32
          %s1519 = scalar_lea.vmem [#allocation5], %s1518
          %1521 = dma.done %s1516, 512
        $region88: #{tpu_custom_call.1} parent=83 // pred_fallthru
          _
      $region84: #{tpu_custom_call.1} parent=5 // pred_fallthru
        _
    $region6: #{tpu_custom_call.1} parent=1 // loop_footer
      %s27 = sadd.s32 1, %s23
    $region7: #{tpu_custom_call.1} parent=1 // loop_footer_branch
      %22 = sbr.rel target = $region3
    $region8: #{tpu_custom_call.1} parent=1 // loop_exit
      _
    %1522 = vsyncpa [#allocation3], 1
    %s1523 = scalar_lea.sflag [#allocation3], 1
    %1524 = vsyncpa %s1523, 1
    %1525 = vsyncpa [#allocation4], 1
    %s1526 = scalar_lea.sflag [#allocation4], 1
    %1527 = vsyncpa %s1526, 1

// kernel: tpu_custom_call.1
$region0: #{tpu_custom_call.1}
  #allocation0 [shape = 'u32[]', space=smem, size = 0x4, offset = 0x4, fixed_abs, tag = 'smem constant byte address 0x4 - core index']
  #allocation1 [shape = 'u32[72,128]{1,0:T(1,128)}', space=vmem, size = 0x9000, scoped, tag = 'internal scratch']
  %s0 = inlined_call_operand.vmem [shape: f32[8,8,32], index: 0, kind: input, shape index: {}]
  %s1 = inlined_call_operand.vmem [shape: f32[1,32], index: 1, kind: input, shape index: {}]
  %s2 = inlined_call_operand.vmem [shape: f32[1,32], index: 2, kind: input, shape index: {}]
  %s3 = inlined_call_operand.vmem [shape: bf16[16,8], index: 3, kind: input, shape index: {}]
  %s4 = inlined_call_operand.vmem [shape: f32[16,1], index: 4, kind: input, shape index: {}]
  %s5 = inlined_call_operand.vmem [shape: bf16[8,16], index: 5, kind: input, shape index: {}]
  %s6 = inlined_call_operand.vmem [shape: f32[8,1], index: 6, kind: input, shape index: {}]
  %s7 = inlined_call_operand.vmem [shape: f32[1,32], index: 7, kind: input, shape index: {}]
  %s8 = inlined_call_operand.vmem [shape: f32[1,32], index: 8, kind: input, shape index: {}]
  %s9 = inlined_call_operand.hbm [shape: bf16[32,64], index: 9, kind: input, shape index: {}]
  %s10 = inlined_call_operand.vmem [shape: f32[1,64], index: 10, kind: input, shape index: {}]
  %s11 = inlined_call_operand.vmem [shape: bf16[64,32], index: 11, kind: input, shape index: {}]
  %s12 = inlined_call_operand.vmem [shape: f32[1,32], index: 12, kind: input, shape index: {}]
  %s13 = inlined_call_operand.hbm [shape: f32[8,8,32], index: 13, kind: output, shape index: {}]
  %s14 = sld [smem:[#allocation0]]
  $region89: #{tpu_custom_call.1} parent=0
    _
  %s16 = ssub.s32 1, %s14
  %s17 = scalar_select 0, %s16, %s14
  $region1: #{tpu_custom_call.1} parent=0
    #allocation2 [shape = 'u8[8192]{0}', space=vmem, size = 0x2000, scoped, tag = 'input window, operand 9, single buffered']
    #allocation3 [shape = 's32[2]{0}', space=sflag, size = 0x8, scoped, tag = 'scoped memory for tpu_custom_call.1']
    #allocation4 [shape = 's32[2]{0}', space=sflag, size = 0x8, scoped, tag = 'scoped memory for tpu_custom_call.1']
    #allocation5 [shape = 'u8[32768]{0}', space=vmem, size = 0x8000, scoped, tag = 'output window, operand 0']
    %18 = vsyncpa [#allocation3], 0
    %19 = vsyncpa [#allocation4], 0
    %s20 = scalar_lea.sflag [#allocation4], 1
    %21 = vsyncpa %s20, 0
    loop: start=0, step=1, limit=4
    $region2: #{tpu_custom_call.1} parent=1 // loop_pre_header
      _
    $region3: #{tpu_custom_call.1} parent=1 // loop_header
      %s23 = sphi 0, %s27
      %p24 = scmp.ge.s32.totalorder %s23, 4
      %s33 = sphi 0, %s35
      %s36 = sphi 0, %s33
      %s37 = sphi 0, %s36
      %s53 = sphi 0, %s37
      %s57 = sphi 0, %s57
      %s59 = sphi 0, %s57
      %s60 = sphi 0, %s59
      %s74 = sphi 0, %s60
      %s78 = sphi 0, %s78
      %s80 = sphi 0, %s78
      %s81 = sphi 0, %s80
      %s95 = sphi 0, %s81
      %s99 = sphi 0, %s99
      %s101 = sphi 0, %s99
      %s102 = sphi 0, %s101
      %s116 = sphi 0, %s102
      %s120 = sphi 0, %s120
      %s122 = sphi 0, %s120
      %s123 = sphi 0, %s122
      %s137 = sphi 0, %s123
      %s141 = sphi 0, %s141
      %s143 = sphi 0, %s141
      %s144 = sphi 0, %s143
      %s158 = sphi 0, %s144
      %s162 = sphi 0, %s162
      %s164 = sphi 0, %s162
      %s165 = sphi 0, %s164
      %s179 = sphi 0, %s165
      %s183 = sphi 0, %s183
      %s185 = sphi 0, %s183
      %s186 = sphi 0, %s185
      %s200 = sphi 0, %s186
      %s204 = sphi 0, %s204
      %s206 = sphi 0, %s204
      %s207 = sphi 0, %s206
      %s221 = sphi 0, %s207
      %s225 = sphi 0, %s225
      %s227 = sphi 0, %s225
      %s228 = sphi 0, %s227
      %s242 = sphi 0, %s228
      %s246 = sphi 0, %s246
      %s248 = sphi 0, %s246
      %s249 = sphi 0, %s248
      %s263 = sphi 0, %s249
      %s267 = sphi 0, %s267
      %s269 = sphi 0, %s267
      %s270 = sphi 0, %s269
      %s284 = sphi 0, %s270
      %s288 = sphi 0, %s288
      %s290 = sphi 0, %s288
      %s291 = sphi 0, %s290
      %s305 = sphi 0, %s291
      %s311 = sphi 0, %s313
      %s314 = sphi 0, %s311
      %s315 = sphi 0, %s314
      %s331 = sphi 0, %s315
    $region4: #{tpu_custom_call.1} parent=1 // loop_header_branch
      %26 = sbr.rel (%p24) target = $region8
    $region5: #{tpu_custom_call.1} parent=1 // loop_body
      %s28 = ssub.s32 %s23, 1
      %s29 = ssub.s32 %s23, 2
      %s30 = sadd.s32 %s23, 1
      %s31 = ssub.s32 %s23, %s30
      %p32 = scmp.eq.s32.totalorder %s31, 0
      %s34 = sadd.s32 %s33, 1
      %s35 = scalar_select %p32, %s33, %s34
      %p38 = pneg %p32
      %p39 = scmp.eq.s32.totalorder %s23, 1
      %p40 = por %p38, %p39
      %p41 = scmp.ne.s32.totalorder %s33, %s36
      %p42 = scmp.eq.s32.totalorder %s23, 0
      %p43 = por %p41, %p42
      %p44 = scmp.ne.s32.totalorder %s33, %s36
      %p45 = scmp.eq.s32.totalorder %s28, 1
      %p46 = por %p44, %p45
      %p47 = scmp.ne.s32.totalorder %s36, %s37
      %p48 = scmp.eq.s32.totalorder %s28, 0
      %p49 = por %p47, %p48
      %p50 = scmp.ne.s32.totalorder %s36, %s37
      %p51 = scmp.eq.s32.totalorder %s29, 1
      %p52 = por %p50, %p51
      %p54 = scmp.ne.s32.totalorder %s37, %s53
      %p55 = scmp.eq.s32.totalorder %s29, 0
      %p56 = por %p54, %p55
      %s58 = sadd.s32 %s57, 1
      %p61 = scmp.eq.s32.totalorder %s23, 1
      %p62 = scmp.ne.s32.totalorder %s57, %s59
      %p63 = scmp.eq.s32.totalorder %s23, 0
      %p64 = por %p62, %p63
      %p65 = scmp.ne.s32.totalorder %s57, %s59
      %p66 = scmp.eq.s32.totalorder %s28, 1
      %p67 = por %p65, %p66
      %p68 = scmp.ne.s32.totalorder %s59, %s60
      %p69 = scmp.eq.s32.totalorder %s28, 0
      %p70 = por %p68, %p69
      %p71 = scmp.ne.s32.totalorder %s59, %s60
      %p72 = scmp.eq.s32.totalorder %s29, 1
      %p73 = por %p71, %p72
      %p75 = scmp.ne.s32.totalorder %s60, %s74
      %p76 = scmp.eq.s32.totalorder %s29, 0
      %p77 = por %p75, %p76
      %s79 = sadd.s32 %s78, 1
      %p82 = scmp.eq.s32.totalorder %s23, 1
      %p83 = scmp.ne.s32.totalorder %s78, %s80
      %p84 = scmp.eq.s32.totalorder %s23, 0
      %p85 = por %p83, %p84
      %p86 = scmp.ne.s32.totalorder %s78, %s80
      %p87 = scmp.eq.s32.totalorder %s28, 1
      %p88 = por %p86, %p87
      %p89 = scmp.ne.s32.totalorder %s80, %s81
      %p90 = scmp.eq.s32.totalorder %s28, 0
      %p91 = por %p89, %p90
      %p92 = scmp.ne.s32.totalorder %s80, %s81
      %p93 = scmp.eq.s32.totalorder %s29, 1
      %p94 = por %p92, %p93
      %p96 = scmp.ne.s32.totalorder %s81, %s95
      %p97 = scmp.eq.s32.totalorder %s29, 0
      %p98 = por %p96, %p97
      %s100 = sadd.s32 %s99, 1
      %p103 = scmp.eq.s32.totalorder %s23, 1
      %p104 = scmp.ne.s32.totalorder %s99, %s101
      %p105 = scmp.eq.s32.totalorder %s23, 0
      %p106 = por %p104, %p105
      %p107 = scmp.ne.s32.totalorder %s99, %s101
      %p108 = scmp.eq.s32.totalorder %s28, 1
      %p109 = por %p107, %p108
      %p110 = scmp.ne.s32.totalorder %s101, %s102
      %p111 = scmp.eq.s32.totalorder %s28, 0
      %p112 = por %p110, %p111
      %p113 = scmp.ne.s32.totalorder %s101, %s102
      %p114 = scmp.eq.s32.totalorder %s29, 1
      %p115 = por %p113, %p114
      %p117 = scmp.ne.s32.totalorder %s102, %s116
      %p118 = scmp.eq.s32.totalorder %s29, 0
      %p119 = por %p117, %p118
      %s121 = sadd.s32 %s120, 1
      %p124 = scmp.eq.s32.totalorder %s23, 1
      %p125 = scmp.ne.s32.totalorder %s120, %s122
      %p126 = scmp.eq.s32.totalorder %s23, 0
      %p127 = por %p125, %p126
      %p128 = scmp.ne.s32.totalorder %s120, %s122
      %p129 = scmp.eq.s32.totalorder %s28, 1
      %p130 = por %p128, %p129
      %p131 = scmp.ne.s32.totalorder %s122, %s123
      %p132 = scmp.eq.s32.totalorder %s28, 0
      %p133 = por %p131, %p132
      %p134 = scmp.ne.s32.totalorder %s122, %s123
      %p135 = scmp.eq.s32.totalorder %s29, 1
      %p136 = por %p134, %p135
      %p138 = scmp.ne.s32.totalorder %s123, %s137
      %p139 = scmp.eq.s32.totalorder %s29, 0
      %p140 = por %p138, %p139
      %s142 = sadd.s32 %s141, 1
      %p145 = scmp.eq.s32.totalorder %s23, 1
      %p146 = scmp.ne.s32.totalorder %s141, %s143
      %p147 = scmp.eq.s32.totalorder %s23, 0
      %p148 = por %p146, %p147
      %p149 = scmp.ne.s32.totalorder %s141, %s143
      %p150 = scmp.eq.s32.totalorder %s28, 1
      %p151 = por %p149, %p150
      %p152 = scmp.ne.s32.totalorder %s143, %s144
      %p153 = scmp.eq.s32.totalorder %s28, 0
      %p154 = por %p152, %p153
      %p155 = scmp.ne.s32.totalorder %s143, %s144
      %p156 = scmp.eq.s32.totalorder %s29, 1
      %p157 = por %p155, %p156
      %p159 = scmp.ne.s32.totalorder %s144, %s158
      %p160 = scmp.eq.s32.totalorder %s29, 0
      %p161 = por %p159, %p160
      %s163 = sadd.s32 %s162, 1
      %p166 = scmp.eq.s32.totalorder %s23, 1
      %p167 = scmp.ne.s32.totalorder %s162, %s164
      %p168 = scmp.eq.s32.totalorder %s23, 0
      %p169 = por %p167, %p168
      %p170 = scmp.ne.s32.totalorder %s162, %s164
      %p171 = scmp.eq.s32.totalorder %s28, 1
      %p172 = por %p170, %p171
      %p173 = scmp.ne.s32.totalorder %s164, %s165
      %p174 = scmp.eq.s32.totalorder %s28, 0
      %p175 = por %p173, %p174
      %p176 = scmp.ne.s32.totalorder %s164, %s165
      %p177 = scmp.eq.s32.totalorder %s29, 1
      %p178 = por %p176, %p177
      %p180 = scmp.ne.s32.totalorder %s165, %s179
      %p181 = scmp.eq.s32.totalorder %s29, 0
      %p182 = por %p180, %p181
      %s184 = sadd.s32 %s183, 1
      %p187 = scmp.eq.s32.totalorder %s23, 1
      %p188 = scmp.ne.s32.totalorder %s183, %s185
      %p189 = scmp.eq.s32.totalorder %s23, 0
      %p190 = por %p188, %p189
      %p191 = scmp.ne.s32.totalorder %s183, %s185
      %p192 = scmp.eq.s32.totalorder %s28, 1
      %p193 = por %p191, %p192
      %p194 = scmp.ne.s32.totalorder %s185, %s186
      %p195 = scmp.eq.s32.totalorder %s28, 0
      %p196 = por %p194, %p195
      %p197 = scmp.ne.s32.totalorder %s185, %s186
      %p198 = scmp.eq.s32.totalorder %s29, 1
      %p199 = por %p197, %p198
      %p201 = scmp.ne.s32.totalorder %s186, %s200
      %p202 = scmp.eq.s32.totalorder %s29, 0
      %p203 = por %p201, %p202
      %s205 = sadd.s32 %s204, 1
      %p208 = scmp.eq.s32.totalorder %s23, 1
      %p209 = scmp.ne.s32.totalorder %s204, %s206
      %p210 = scmp.eq.s32.totalorder %s23, 0
      %p211 = por %p209, %p210
      %p212 = scmp.ne.s32.totalorder %s204, %s206
      %p213 = scmp.eq.s32.totalorder %s28, 1
      %p214 = por %p212, %p213
      %p215 = scmp.ne.s32.totalorder %s206, %s207
      %p216 = scmp.eq.s32.totalorder %s28, 0
      %p217 = por %p215, %p216
      %p218 = scmp.ne.s32.totalorder %s206, %s207
      %p219 = scmp.eq.s32.totalorder %s29, 1
      %p220 = por %p218, %p219
      %p222 = scmp.ne.s32.totalorder %s207, %s221
      %p223 = scmp.eq.s32.totalorder %s29, 0
      %p224 = por %p222, %p223
      %s226 = sadd.s32 %s225, 1
      %p229 = scmp.eq.s32.totalorder %s23, 1
      %p230 = scmp.ne.s32.totalorder %s225, %s227
      %p231 = scmp.eq.s32.totalorder %s23, 0
      %p232 = por %p230, %p231
      %p233 = scmp.ne.s32.totalorder %s225, %s227
      %p234 = scmp.eq.s32.totalorder %s28, 1
      %p235 = por %p233, %p234
      %p236 = scmp.ne.s32.totalorder %s227, %s228
      %p237 = scmp.eq.s32.totalorder %s28, 0
      %p238 = por %p236, %p237
      %p239 = scmp.ne.s32.totalorder %s227, %s228
      %p240 = scmp.eq.s32.totalorder %s29, 1
      %p241 = por %p239, %p240
      %p243 = scmp.ne.s32.totalorder %s228, %s242
      %p244 = scmp.eq.s32.totalorder %s29, 0
      %p245 = por %p243, %p244
      %s247 = sadd.s32 %s246, 1
      %p250 = scmp.eq.s32.totalorder %s23, 1
      %p251 = scmp.ne.s32.totalorder %s246, %s248
      %p252 = scmp.eq.s32.totalorder %s23, 0
      %p253 = por %p251, %p252
      %p254 = scmp.ne.s32.totalorder %s246, %s248
      %p255 = scmp.eq.s32.totalorder %s28, 1
      %p256 = por %p254, %p255
      %p257 = scmp.ne.s32.totalorder %s248, %s249
      %p258 = scmp.eq.s32.totalorder %s28, 0
      %p259 = por %p257, %p258
      %p260 = scmp.ne.s32.totalorder %s248, %s249
      %p261 = scmp.eq.s32.totalorder %s29, 1
      %p262 = por %p260, %p261
      %p264 = scmp.ne.s32.totalorder %s249, %s263
      %p265 = scmp.eq.s32.totalorder %s29, 0
      %p266 = por %p264, %p265
      %s268 = sadd.s32 %s267, 1
      %p271 = scmp.eq.s32.totalorder %s23, 1
      %p272 = scmp.ne.s32.totalorder %s267, %s269
      %p273 = scmp.eq.s32.totalorder %s23, 0
      %p274 = por %p272, %p273
      %p275 = scmp.ne.s32.totalorder %s267, %s269
      %p276 = scmp.eq.s32.totalorder %s28, 1
      %p277 = por %p275, %p276
      %p278 = scmp.ne.s32.totalorder %s269, %s270
      %p279 = scmp.eq.s32.totalorder %s28, 0
      %p280 = por %p278, %p279
      %p281 = scmp.ne.s32.totalorder %s269, %s270
      %p282 = scmp.eq.s32.totalorder %s29, 1
      %p283 = por %p281, %p282
      %p285 = scmp.ne.s32.totalorder %s270, %s284
      %p286 = scmp.eq.s32.totalorder %s29, 0
      %p287 = por %p285, %p286
      %s289 = sadd.s32 %s288, 1
      %p292 = scmp.eq.s32.totalorder %s23, 1
      %p293 = scmp.ne.s32.totalorder %s288, %s290
      %p294 = scmp.eq.s32.totalorder %s23, 0
      %p295 = por %p293, %p294
      %p296 = scmp.ne.s32.totalorder %s288, %s290
      %p297 = scmp.eq.s32.totalorder %s28, 1
      %p298 = por %p296, %p297
      %p299 = scmp.ne.s32.totalorder %s290, %s291
      %p300 = scmp.eq.s32.totalorder %s28, 0
      %p301 = por %p299, %p300
      %p302 = scmp.ne.s32.totalorder %s290, %s291
      %p303 = scmp.eq.s32.totalorder %s29, 1
      %p304 = por %p302, %p303
      %p306 = scmp.ne.s32.totalorder %s291, %s305
      %p307 = scmp.eq.s32.totalorder %s29, 0
      %p308 = por %p306, %p307
      %s309 = ssub.s32 %s23, %s30
      %p310 = scmp.eq.s32.totalorder %s309, 0
      %s312 = sadd.s32 %s311, 1
      %s313 = scalar_select %p310, %s311, %s312
      %p316 = pneg %p310
      %p317 = scmp.eq.s32.totalorder %s23, 1
      %p318 = por %p316, %p317
      %p319 = scmp.ne.s32.totalorder %s311, %s314
      %p320 = scmp.eq.s32.totalorder %s23, 0
      %p321 = por %p319, %p320
      %p322 = scmp.ne.s32.totalorder %s311, %s314
      %p323 = scmp.eq.s32.totalorder %s28, 1
      %p324 = por %p322, %p323
      %p325 = scmp.ne.s32.totalorder %s314, %s315
      %p326 = scmp.eq.s32.totalorder %s28, 0
      %p327 = por %p325, %p326
      %p328 = scmp.ne.s32.totalorder %s314, %s315
      %p329 = scmp.eq.s32.totalorder %s29, 1
      %p330 = por %p328, %p329
      %p332 = scmp.ne.s32.totalorder %s315, %s331
      %p333 = scmp.eq.s32.totalorder %s29, 0
      %p334 = por %p332, %p333
      %p335 = scmp.le.s32.totalorder 1, %s23
      %p336 = scmp.lt.s32.totalorder %s23, 3
      %p337 = pnand %p335, %p336
      %p338 = pneg %p337
      // Predicated region
      $region9: #{tpu_custom_call.1} parent=5 // pred_check
        _
      $region10: #{tpu_custom_call.1} parent=5 // pred_check_branch
        %340 = sbr.rel (%p337) target = $region12
      $region11: #{tpu_custom_call.1} parent=5 // pred_region
        %s341 = ssub.s32 %s23, 1
        // Predicated region
        $region13: #{tpu_custom_call.1} parent=11 // pred_check
          %p342 = pneg %p70
        $region14: #{tpu_custom_call.1} parent=11 // pred_check_branch
          %344 = sbr.rel (%p342) target = $region16
        $region15: #{tpu_custom_call.1} parent=11 // pred_region
          _
        $region16: #{tpu_custom_call.1} parent=11 // pred_fallthru
          _
        // Predicated region
        $region17: #{tpu_custom_call.1} parent=11 // pred_check
          %p345 = pneg %p91
        $region18: #{tpu_custom_call.1} parent=11 // pred_check_branch
          %347 = sbr.rel (%p345) target = $region20
        $region19: #{tpu_custom_call.1} parent=11 // pred_region
          _
        $region20: #{tpu_custom_call.1} parent=11 // pred_fallthru
          _
        // Predicated region
        $region21: #{tpu_custom_call.1} parent=11 // pred_check
          %p348 = pneg %p112
        $region22: #{tpu_custom_call.1} parent=11 // pred_check_branch
          %350 = sbr.rel (%p348) target = $region24
        $region23: #{tpu_custom_call.1} parent=11 // pred_region
          _
        $region24: #{tpu_custom_call.1} parent=11 // pred_fallthru
          _
        // Predicated region
        $region25: #{tpu_custom_call.1} parent=11 // pred_check
          %p351 = pneg %p133
        $region26: #{tpu_custom_call.1} parent=11 // pred_check_branch
          %353 = sbr.rel (%p351) target = $region28
        $region27: #{tpu_custom_call.1} parent=11 // pred_region
          _
        $region28: #{tpu_custom_call.1} parent=11 // pred_fallthru
          _
        // Predicated region
        $region29: #{tpu_custom_call.1} parent=11 // pred_check
          %p354 = pneg %p154
        $region30: #{tpu_custom_call.1} parent=11 // pred_check_branch
          %356 = sbr.rel (%p354) target = $region32
        $region31: #{tpu_custom_call.1} parent=11 // pred_region
          _
        $region32: #{tpu_custom_call.1} parent=11 // pred_fallthru
          _
        // Predicated region
        $region33: #{tpu_custom_call.1} parent=11 // pred_check
          %p357 = pneg %p175
        $region34: #{tpu_custom_call.1} parent=11 // pred_check_branch
          %359 = sbr.rel (%p357) target = $region36
        $region35: #{tpu_custom_call.1} parent=11 // pred_region
          _
        $region36: #{tpu_custom_call.1} parent=11 // pred_fallthru
          _
        // Predicated region
        $region37: #{tpu_custom_call.1} parent=11 // pred_check
          %p360 = pneg %p196
        $region38: #{tpu_custom_call.1} parent=11 // pred_check_branch
          %362 = sbr.rel (%p360) target = $region40
        $region39: #{tpu_custom_call.1} parent=11 // pred_region
          _
        $region40: #{tpu_custom_call.1} parent=11 // pred_fallthru
          _
        // Predicated region
        $region41: #{tpu_custom_call.1} parent=11 // pred_check
          %p363 = pneg %p217
        $region42: #{tpu_custom_call.1} parent=11 // pred_check_branch
          %365 = sbr.rel (%p363) target = $region44
        $region43: #{tpu_custom_call.1} parent=11 // pred_region
          _
        $region44: #{tpu_custom_call.1} parent=11 // pred_fallthru
          _
        // Predicated region
        $region45: #{tpu_custom_call.1} parent=11 // pred_check
          %p366 = pneg %p238
        $region46: #{tpu_custom_call.1} parent=11 // pred_check_branch
          %368 = sbr.rel (%p366) target = $region48
        $region47: #{tpu_custom_call.1} parent=11 // pred_region
          %370 = vsyncadd [#allocation3], 0
          %s371 = sshll.u32 %s9, 4
          %s372 = int_to_ptr.hbm [resolvable:$true] %s371
          %s373 = sshll.u32 [#allocation2], 4
          %s374 = int_to_ptr.vmem [resolvable:$true] %s373
          %379 = dma.hbm_to_vmem [thread:$0]  %s372, 256, %s374, [#allocation3], 64, 64, 4
        $region48: #{tpu_custom_call.1} parent=11 // pred_fallthru
          _
        // Predicated region
        $region49: #{tpu_custom_call.1} parent=11 // pred_check
          %p380 = pneg %p259
        $region50: #{tpu_custom_call.1} parent=11 // pred_check_branch
          %382 = sbr.rel (%p380) target = $region52
        $region51: #{tpu_custom_call.1} parent=11 // pred_region
          _
        $region52: #{tpu_custom_call.1} parent=11 // pred_fallthru
          _
        // Predicated region
        $region53: #{tpu_custom_call.1} parent=11 // pred_check
          %p383 = pneg %p280
        $region54: #{tpu_custom_call.1} parent=11 // pred_check_branch
          %385 = sbr.rel (%p383) target = $region56
        $region55: #{tpu_custom_call.1} parent=11 // pred_region
          _
        $region56: #{tpu_custom_call.1} parent=11 // pred_fallthru
          _
        // Predicated region
        $region57: #{tpu_custom_call.1} parent=11 // pred_check
          %p386 = pneg %p301
        $region58: #{tpu_custom_call.1} parent=11 // pred_check_branch
          %388 = sbr.rel (%p386) target = $region60
        $region59: #{tpu_custom_call.1} parent=11 // pred_region
          _
        $region60: #{tpu_custom_call.1} parent=11 // pred_fallthru
          _
      $region12: #{tpu_custom_call.1} parent=5 // pred_fallthru
        _
      %p389 = scmp.lt.s32.totalorder %s23, 2
      // Predicated region
      $region61: #{tpu_custom_call.1} parent=5 // pred_check
        %p390 = pneg %p389
      $region62: #{tpu_custom_call.1} parent=5 // pred_check_branch
        %392 = sbr.rel (%p390) target = $region64
      $region63: #{tpu_custom_call.1} parent=5 // pred_region
        // Predicated region
        $region65: #{tpu_custom_call.1} parent=63 // pred_check
          %p393 = pneg %p43
        $region66: #{tpu_custom_call.1} parent=63 // pred_check_branch
          %395 = sbr.rel (%p393) target = $region68
        $region67: #{tpu_custom_call.1} parent=63 // pred_region
          %s396 = smul.u32 4, %s23
          %p397 = scmp.lt.s32.totalorder %s396, 7
          %s398 = scalar_select %p397, %s396, 7
          %s399 = smul.addr %s398, 8
          %s400 = scalar_lea.vmem %s0, %s399
          %s401 = smul.u32 4, %s23
        $region68: #{tpu_custom_call.1} parent=63 // pred_fallthru
          _
      $region64: #{tpu_custom_call.1} parent=5 // pred_fallthru
        _
      %p402 = scmp.le.s32.totalorder 1, %s23
      %p403 = scmp.lt.s32.totalorder %s23, 3
      %p404 = pnand %p402, %p403
      %p405 = pneg %p404
      // Predicated region
      $region69: #{tpu_custom_call.1} parent=5 // pred_check
        _
      $region70: #{tpu_custom_call.1} parent=5 // pred_check_branch
        %407 = sbr.rel (%p404) target = $region72
      $region71: #{tpu_custom_call.1} parent=5 // pred_region
        %s408 = ssub.s32 %s23, 1
        // Predicated region
        $region73: #{tpu_custom_call.1} parent=71 // pred_check
          %p409 = pneg %p238
        $region74: #{tpu_custom_call.1} parent=71 // pred_check_branch
          %411 = sbr.rel (%p409) target = $region76
        $region75: #{tpu_custom_call.1} parent=71 // pred_region
          %413 = dma.done [#allocation3], 256
        $region76: #{tpu_custom_call.1} parent=71 // pred_fallthru
          _
        %s414 = smul.u32 4, %s28
        %p415 = scmp.lt.s32.totalorder %s414, 7
        %s416 = scalar_select %p415, %s414, 7
        %s417 = smul.addr %s416, 8
        %s418 = scalar_lea.vmem %s0, %s417
        %p419 = pneg %p49
        %p420 = pneg %p46
        %p421 = pneg %p70
        %p422 = pneg %p67
        %p423 = pneg %p91
        %p424 = pneg %p88
        %p425 = pneg %p112
        %p426 = pneg %p109
        %p427 = pneg %p133
        %p428 = pneg %p130
        %p429 = pneg %p154
        %p430 = pneg %p151
        %p431 = pneg %p175
        %p432 = pneg %p172
        %p433 = pneg %p196
        %p434 = pneg %p193
        %p435 = pneg %p217
        %p436 = pneg %p214
        %p437 = pneg %p238
        %p438 = pneg %p235
        %p439 = pneg %p259
        %p440 = pneg %p256
        %p441 = pneg %p280
        %p442 = pneg %p277
        %p443 = pneg %p301
        %p444 = pneg %p298
        %p445 = pneg %p327
        %p446 = pneg %p324
        %s447 = sand.u32 %s314, 1
        %s448 = scalar_lea.sflag [#allocation4], %s447
        %s449 = sand.u32 %s314, 1
        %s450 = smul.addr %s449, 32
        %s451 = scalar_lea.vmem [#allocation5], %s450
        %s452 = smul.u32 4, %s28
        %p453 = scmp.lt.s32.totalorder %s452, 7
        %s454 = scalar_select %p453, %s452, 7
        %s455 = smul.addr %s454, 8
        %s456 = scalar_lea.vmem %s0, %s455
        %s457 = smul.u32 4, %s28
        %s458 = smul.u32 4, %s28
        %v460 = vld [vmem:[%s3] sm:$0xf]
        %v461 = vld [vmem:[%s3 + $0x4] sm:$0xf]
        %v462 = vld [vmem:[%s5] sm:$0xf]
        %v463 = vld [vmem:[%s4] sm:$0xff]
        %v464 = vld [vmem:[%s4 + $0x8] sm:$0xff]
        %v465 = vld [vmem:[%s6] sm:$0xff]
        %v466 = vld [vmem:[%s1] sm:$0x1]
        %v467 = vld [vmem:[%s2] sm:$0x1]
        %v468 = vld [vmem:[%s456] sm:$0xff]
        %vm469 = vcmask 261120
        %v470 = vsel %vm469, %v468, 0.0
        %471 = vadd.xlane.f32.xlu0 %v470
        %v472 = vpop.xlane.xlu0 %471
        %v473 = vmul.f32 %v472, 0.03125
        %v474 = vmul.f32 %v468, %v468
        %v475 = vsel %vm469, %v474, 0.0
        %476 = vadd.xlane.f32.xlu0 %v475
        %v477 = vpop.xlane.xlu0 %476
        %v478 = vmul.f32 %v477, 0.03125
        %v479 = vmul.f32 %v473, %v473
        %v480 = vsub.f32 %v478, %v479
        %v481 = vmax.f32 %v480, 0.0
        %v482 = vsub.f32 %v468, %v473
        %v483 = vadd.f32 %v481, 1e-05
        %v484 = vrsqrt.pop %v483
        %v485 = vmul.f32 %v484, %v483
        %v486 = vmul.f32 %v485, %v484
        %v487 = vmul.f32 0.5, %v486
        %v488 = vsub.f32 1.5, %v487
        %v489 = vmul.f32 %v484, %v488
        %vm490 = vweird.f32 %v483
        %vm491 = vweird.f32 %v484
        %vm492 = vmor %vm490, %vm491
        %v493 = vsel %vm492, %v484, %v489
        %v494 = vmul.f32 %v482, %v493
        %v496 = vperm.slane %v466, 0
        %v498 = vmul.f32 %v494, %v496
        %v500 = vperm.slane %v467, 0
        %v502 = vadd.f32 %v498, %v500
        %v503 = vpack.c.bf16 %v502, %v502
        %505 = vset.pattern.permute.xlu0 0
        %506 = vperm.xlu0 %505, %v463
        %v507 = vpop.permute.xlu0 %506
        %510 = vset.pattern.permute.xlu0 0
        %511 = vperm.xlu0 %510, %v464
        %v512 = vpop.permute.xlu0 %511
        %v516 = vunpack.c.l.b16 %v460
        %v517 = vunpack.c.l.b16 %v461
        %v518 = vpack.c.b16 %v517, %v516
        %vm519 = vcmask 64512
        %v521 = vsel %vm519, %v518, 0
        %vm523 = vcmask 1043456
        %v525 = vsel %vm523, %v503, 0
        %527 = vmatpush.bf16.msra.mxu0 0
        %528 = vmatpush.bf16.msra.mxu0 0
        %529 = vmatpush.bf16.msra.mxu0 0
        %530 = vmatpush.bf16.msra.mxu0 0
        %531 = vmatpush.bf16.msra.mxu0 0
        %532 = vmatpush.bf16.msra.mxu0 0
        %533 = vmatpush.bf16.msra.mxu0 0
        %534 = vmatpush.bf16.msra.mxu0 %v525
        %535 = vmatmul.bf16.gmra.mxu0 %v521
        %v536 = vpop.f32.mrf.mxu0
        %v537 = vadd.f32 %v507, %v536
        %v538 = vpop.f32.mrf.mxu0
        %v539 = vadd.f32 %v512, %v538
        %540 = vdwg.mxu0
        %v541 = vmul.f32 %v537, 0.5
        %v542 = vmul.f32 %v539, 0.5
        %v543 = vmul.f32 %v537, 0.70710677
        %v544 = vmul.f32 %v539, 0.70710677
        %v545 = vand.u32 2147483647, %v543
        %v546 = vand.u32 2147483647, %v544
        %v547 = vmul.f32 %v545, 0.3275911
        %v548 = vmul.f32 %v546, 0.3275911
        %v549 = vadd.f32 %v547, 1.0
        %v550 = vadd.f32 %v548, 1.0
        %v551 = vrcp.pop %v549
        %v552 = vmul.f32 %v549, %v551
        %v553 = vsub.f32 1.0, %v552
        %v554 = vmul.f32 %v551, %v553
        %v555 = vadd.f32 %v551, %v554
        %vm556 = vweird.f32 %v549
        %vm557 = vweird.f32 %v551
        %vm558 = vmor %vm556, %vm557
        %v559 = vsel %vm558, %v551, %v555
        %v560 = vand.u32 2147483647, %v549
        %vm561 = vcmp.eq.f32.partialorder %v560, 8.507059e+37
        %v562 = vand.u32 %v549, 2147483648
        %v563 = vor.u32 1.1754944e-38, %v562
        %v564 = vsel %vm561, %v563, %v559
        %v565 = vmul.f32 1.0, %v564
        %v566 = vrcp.pop %v550
        %v567 = vmul.f32 %v550, %v566
        %v568 = vsub.f32 1.0, %v567
        %v569 = vmul.f32 %v566, %v568
        %v570 = vadd.f32 %v566, %v569
        %vm571 = vweird.f32 %v550
        %vm572 = vweird.f32 %v566
        %vm573 = vmor %vm571, %vm572
        %v574 = vsel %vm573, %v566, %v570
        %v575 = vand.u32 2147483647, %v550
        %vm576 = vcmp.eq.f32.partialorder %v575, 8.507059e+37
        %v577 = vand.u32 %v550, 2147483648
        %v578 = vor.u32 1.1754944e-38, %v577
        %v579 = vsel %vm576, %v578, %v574
        %v580 = vmul.f32 1.0, %v579
        %v581 = vmul.f32 %v565, 1.0614054
        %v582 = vmul.f32 %v580, 1.0614054
        %v583 = vadd.f32 %v581, -1.4531521
        %v584 = vadd.f32 %v582, -1.4531521
        %v585 = vmul.f32 %v583, %v565
        %v586 = vmul.f32 %v584, %v580
        %v587 = vadd.f32 %v585, 1.4214138
        %v588 = vadd.f32 %v586, 1.4214138
        %v589 = vmul.f32 %v587, %v565
        %v590 = vmul.f32 %v588, %v580
        %v591 = vadd.f32 %v589, -0.28449672
        %v592 = vadd.f32 %v590, -0.28449672
        %v593 = vmul.f32 %v591, %v565
        %v594 = vmul.f32 %v592, %v580
        %v595 = vadd.f32 %v593, 0.2548296
        %v596 = vadd.f32 %v594, 0.2548296
        %v597 = vmul.f32 %v595, %v565
        %v598 = vmul.f32 %v596, %v580
        %v599 = vmul.f32 %v545, %v545
        %v600 = vmul.f32 %v546, %v546
        %v601 = vsub.f32 0.0, %v599
        %v602 = vsub.f32 0.0, %v600
        %v603 = vmul.f32 %v601, 1.442695
        %v604 = vpow.pop %v603
        %v605 = vmul.f32 %v602, 1.442695
        %v606 = vpow.pop %v605
        %v607 = vmul.f32 %v597, %v604
        %v608 = vmul.f32 %v598, %v606
        %v609 = vsub.f32 1.0, %v607
        %v610 = vsub.f32 1.0, %v608
        %vm611 = vcmp.lt.f32.partialorder %v543, 0.0
        %vm612 = vcmp.lt.f32.partialorder %v544, 0.0
        %v613 = vsub.f32 0.0, %v609
        %v614 = vsub.f32 0.0, %v610
        %v615 = vsel %vm611, %v613, %v609
        %v616 = vsel %vm612, %v614, %v610
        %v617 = vadd.f32 %v615, 1.0
        %v618 = vadd.f32 %v616, 1.0
        %v619 = vmul.f32 %v541, %v617
        %v620 = vmul.f32 %v542, %v618
        %v621 = vpack.c.bf16 %v620, %v619
        %vm622 = vcmask 130048
        %v624 = vsel %vm622, %v462, 0
        %626 = vmatpush.bf16.msra.mxu0 0
        %627 = vmatpush.bf16.msra.mxu0 0
        %628 = vmatpush.bf16.msra.mxu0 0
        %629 = vmatpush.bf16.msra.mxu0 0
        %630 = vmatpush.bf16.msra.mxu0 0
        %631 = vmatpush.bf16.msra.mxu0 0
        %632 = vmatpush.bf16.msra.mxu0 0
        %633 = vmatpush.bf16.msra.mxu0 %v621
        %634 = vmatmul.bf16.gmra.mxu0 %v624
        %v635 = vpop.f32.mrf.mxu0
        %v636 = vadd.f32 0.0, %v635
        %v637 = vpop.f32.mrf.mxu0
        %638 = vdwg.mxu0
        %v639 = vadd.f32 %v468, %v636
        %641 = vset.pattern.permute.xlu0 0
        %642 = vperm.xlu0 %641, %v465
        %v643 = vpop.permute.xlu0 %642
        %v645 = vadd.f32 %v639, %v643
        %646 = vst.msk [vmem:[%s451] sm:$0xff] %vm469, %v645
        %s647 = scalar_lea.vmem %s456, 8
        %v648 = vld [vmem:[%s647] sm:$0xff]
        %v649 = vsel %vm469, %v648, 0.0
        %650 = vadd.xlane.f32.xlu0 %v649
        %v651 = vpop.xlane.xlu0 %650
        %v652 = vmul.f32 %v651, 0.03125
        %v653 = vmul.f32 %v648, %v648
        %v654 = vsel %vm469, %v653, 0.0
        %655 = vadd.xlane.f32.xlu0 %v654
        %v656 = vpop.xlane.xlu0 %655
        %v657 = vmul.f32 %v656, 0.03125
        %v658 = vmul.f32 %v652, %v652
        %v659 = vsub.f32 %v657, %v658
        %v660 = vmax.f32 %v659, 0.0
        %v661 = vsub.f32 %v648, %v652
        %v662 = vadd.f32 %v660, 1e-05
        %v663 = vrsqrt.pop %v662
        %v664 = vmul.f32 %v663, %v662
        %v665 = vmul.f32 %v664, %v663
        %v666 = vmul.f32 0.5, %v665
        %v667 = vsub.f32 1.5, %v666
        %v668 = vmul.f32 %v663, %v667
        %vm669 = vweird.f32 %v662
        %vm670 = vweird.f32 %v663
        %vm671 = vmor %vm669, %vm670
        %v672 = vsel %vm671, %v663, %v668
        %v673 = vmul.f32 %v661, %v672
        %v674 = vmul.f32 %v673, %v496
        %v675 = vadd.f32 %v674, %v500
        %v676 = vpack.c.bf16 %v675, %v675
        %v678 = vsel %vm523, %v676, 0
        %680 = vmatpush.bf16.msra.mxu0 0
        %681 = vmatpush.bf16.msra.mxu0 0
        %682 = vmatpush.bf16.msra.mxu0 0
        %683 = vmatpush.bf16.msra.mxu0 0
        %684 = vmatpush.bf16.msra.mxu0 0
        %685 = vmatpush.bf16.msra.mxu0 0
        %686 = vmatpush.bf16.msra.mxu0 0
        %687 = vmatpush.bf16.msra.mxu0 %v678
        %688 = vmatmul.bf16.gmra.mxu0 %v521
        %v689 = vpop.f32.mrf.mxu0
        %v690 = vadd.f32 %v507, %v689
        %v691 = vpop.f32.mrf.mxu0
        %v692 = vadd.f32 %v512, %v691
        %693 = vdwg.mxu0
        %v694 = vmul.f32 %v690, 0.5
        %v695 = vmul.f32 %v692, 0.5
        %v696 = vmul.f32 %v690, 0.70710677
        %v697 = vmul.f32 %v692, 0.70710677
        %v698 = vand.u32 2147483647, %v696
        %v699 = vand.u32 2147483647, %v697
        %v700 = vmul.f32 %v698, 0.3275911
        %v701 = vmul.f32 %v699, 0.3275911
        %v702 = vadd.f32 %v700, 1.0
        %v703 = vadd.f32 %v701, 1.0
        %v704 = vrcp.pop %v702
        %v705 = vmul.f32 %v702, %v704
        %v706 = vsub.f32 1.0, %v705
        %v707 = vmul.f32 %v704, %v706
        %v708 = vadd.f32 %v704, %v707
        %vm709 = vweird.f32 %v702
        %vm710 = vweird.f32 %v704
        %vm711 = vmor %vm709, %vm710
        %v712 = vsel %vm711, %v704, %v708
        %v713 = vand.u32 2147483647, %v702
        %vm714 = vcmp.eq.f32.partialorder %v713, 8.507059e+37
        %v715 = vand.u32 %v702, 2147483648
        %v716 = vor.u32 1.1754944e-38, %v715
        %v717 = vsel %vm714, %v716, %v712
        %v718 = vmul.f32 1.0, %v717
        %v719 = vrcp.pop %v703
        %v720 = vmul.f32 %v703, %v719
        %v721 = vsub.f32 1.0, %v720
        %v722 = vmul.f32 %v719, %v721
        %v723 = vadd.f32 %v719, %v722
        %vm724 = vweird.f32 %v703
        %vm725 = vweird.f32 %v719
        %vm726 = vmor %vm724, %vm725
        %v727 = vsel %vm726, %v719, %v723
        %v728 = vand.u32 2147483647, %v703
        %vm729 = vcmp.eq.f32.partialorder %v728, 8.507059e+37
        %v730 = vand.u32 %v703, 2147483648
        %v731 = vor.u32 1.1754944e-38, %v730
        %v732 = vsel %vm729, %v731, %v727
        %v733 = vmul.f32 1.0, %v732
        %v734 = vmul.f32 %v718, 1.0614054
        %v735 = vmul.f32 %v733, 1.0614054
        %v736 = vadd.f32 %v734, -1.4531521
        %v737 = vadd.f32 %v735, -1.4531521
        %v738 = vmul.f32 %v736, %v718
        %v739 = vmul.f32 %v737, %v733
        %v740 = vadd.f32 %v738, 1.4214138
        %v741 = vadd.f32 %v739, 1.4214138
        %v742 = vmul.f32 %v740, %v718
        %v743 = vmul.f32 %v741, %v733
        %v744 = vadd.f32 %v742, -0.28449672
        %v745 = vadd.f32 %v743, -0.28449672
        %v746 = vmul.f32 %v744, %v718
        %v747 = vmul.f32 %v745, %v733
        %v748 = vadd.f32 %v746, 0.2548296
        %v749 = vadd.f32 %v747, 0.2548296
        %v750 = vmul.f32 %v748, %v718
        %v751 = vmul.f32 %v749, %v733
        %v752 = vmul.f32 %v698, %v698
        %v753 = vmul.f32 %v699, %v699
        %v754 = vsub.f32 0.0, %v752
        %v755 = vsub.f32 0.0, %v753
        %v756 = vmul.f32 %v754, 1.442695
        %v757 = vpow.pop %v756
        %v758 = vmul.f32 %v755, 1.442695
        %v759 = vpow.pop %v758
        %v760 = vmul.f32 %v750, %v757
        %v761 = vmul.f32 %v751, %v759
        %v762 = vsub.f32 1.0, %v760
        %v763 = vsub.f32 1.0, %v761
        %vm764 = vcmp.lt.f32.partialorder %v696, 0.0
        %vm765 = vcmp.lt.f32.partialorder %v697, 0.0
        %v766 = vsub.f32 0.0, %v762
        %v767 = vsub.f32 0.0, %v763
        %v768 = vsel %vm764, %v766, %v762
        %v769 = vsel %vm765, %v767, %v763
        %v770 = vadd.f32 %v768, 1.0
        %v771 = vadd.f32 %v769, 1.0
        %v772 = vmul.f32 %v694, %v770
        %v773 = vmul.f32 %v695, %v771
        %v774 = vpack.c.bf16 %v773, %v772
        %775 = vmatpush.bf16.msra.mxu0 0
        %776 = vmatpush.bf16.msra.mxu0 0
        %777 = vmatpush.bf16.msra.mxu0 0
        %778 = vmatpush.bf16.msra.mxu0 0
        %779 = vmatpush.bf16.msra.mxu0 0
        %780 = vmatpush.bf16.msra.mxu0 0
        %781 = vmatpush.bf16.msra.mxu0 0
        %782 = vmatpush.bf16.msra.mxu0 %v774
        %783 = vmatmul.bf16.gmra.mxu0 %v624
        %v784 = vpop.f32.mrf.mxu0
        %v785 = vadd.f32 0.0, %v784
        %v786 = vpop.f32.mrf.mxu0
        %787 = vdwg.mxu0
        %v788 = vadd.f32 %v648, %v785
        %v789 = vadd.f32 %v788, %v643
        %s790 = scalar_lea.vmem %s451, 8 [#allocation5]
        %791 = vst.msk [vmem:[%s790] sm:$0xff] %vm469, %v789
        %s792 = scalar_lea.vmem %s456, 16
        %v793 = vld [vmem:[%s792] sm:$0xff]
        %v794 = vsel %vm469, %v793, 0.0
        %795 = vadd.xlane.f32.xlu0 %v794
        %v796 = vpop.xlane.xlu0 %795
        %v797 = vmul.f32 %v796, 0.03125
        %v798 = vmul.f32 %v793, %v793
        %v799 = vsel %vm469, %v798, 0.0
        %800 = vadd.xlane.f32.xlu0 %v799
        %v801 = vpop.xlane.xlu0 %800
        %v802 = vmul.f32 %v801, 0.03125
        %v803 = vmul.f32 %v797, %v797
        %v804 = vsub.f32 %v802, %v803
        %v805 = vmax.f32 %v804, 0.0
        %v806 = vsub.f32 %v793, %v797
        %v807 = vadd.f32 %v805, 1e-05
        %v808 = vrsqrt.pop %v807
        %v809 = vmul.f32 %v808, %v807
        %v810 = vmul.f32 %v809, %v808
        %v811 = vmul.f32 0.5, %v810
        %v812 = vsub.f32 1.5, %v811
        %v813 = vmul.f32 %v808, %v812
        %vm814 = vweird.f32 %v807
        %vm815 = vweird.f32 %v808
        %vm816 = vmor %vm814, %vm815
        %v817 = vsel %vm816, %v808, %v813
        %v818 = vmul.f32 %v806, %v817
        %v819 = vmul.f32 %v818, %v496
        %v820 = vadd.f32 %v819, %v500
        %v821 = vpack.c.bf16 %v820, %v820
        %v823 = vsel %vm523, %v821, 0
        %825 = vmatpush.bf16.msra.mxu0 0
        %826 = vmatpush.bf16.msra.mxu0 0
        %827 = vmatpush.bf16.msra.mxu0 0
        %828 = vmatpush.bf16.msra.mxu0 0
        %829 = vmatpush.bf16.msra.mxu0 0
        %830 = vmatpush.bf16.msra.mxu0 0
        %831 = vmatpush.bf16.msra.mxu0 0
        %832 = vmatpush.bf16.msra.mxu0 %v823
        %833 = vmatmul.bf16.gmra.mxu0 %v521
        %v834 = vpop.f32.mrf.mxu0
        %v835 = vadd.f32 %v507, %v834
        %v836 = vpop.f32.mrf.mxu0
        %v837 = vadd.f32 %v512, %v836
        %838 = vdwg.mxu0
        %v839 = vmul.f32 %v835, 0.5
        %v840 = vmul.f32 %v837, 0.5
        %v841 = vmul.f32 %v835, 0.70710677
        %v842 = vmul.f32 %v837, 0.70710677
        %v843 = vand.u32 2147483647, %v841
        %v844 = vand.u32 2147483647, %v842
        %v845 = vmul.f32 %v843, 0.3275911
        %v846 = vmul.f32 %v844, 0.3275911
        %v847 = vadd.f32 %v845, 1.0
        %v848 = vadd.f32 %v846, 1.0
        %v849 = vrcp.pop %v847
        %v850 = vmul.f32 %v847, %v849
        %v851 = vsub.f32 1.0, %v850
        %v852 = vmul.f32 %v849, %v851
        %v853 = vadd.f32 %v849, %v852
        %vm854 = vweird.f32 %v847
        %vm855 = vweird.f32 %v849
        %vm856 = vmor %vm854, %vm855
        %v857 = vsel %vm856, %v849, %v853
        %v858 = vand.u32 2147483647, %v847
        %vm859 = vcmp.eq.f32.partialorder %v858, 8.507059e+37
        %v860 = vand.u32 %v847, 2147483648
        %v861 = vor.u32 1.1754944e-38, %v860
        %v862 = vsel %vm859, %v861, %v857
        %v863 = vmul.f32 1.0, %v862
        %v864 = vrcp.pop %v848
        %v865 = vmul.f32 %v848, %v864
        %v866 = vsub.f32 1.0, %v865
        %v867 = vmul.f32 %v864, %v866
        %v868 = vadd.f32 %v864, %v867
        %vm869 = vweird.f32 %v848
        %vm870 = vweird.f32 %v864
        %vm871 = vmor %vm869, %vm870
        %v872 = vsel %vm871, %v864, %v868
        %v873 = vand.u32 2147483647, %v848
        %vm874 = vcmp.eq.f32.partialorder %v873, 8.507059e+37
        %v875 = vand.u32 %v848, 2147483648
        %v876 = vor.u32 1.1754944e-38, %v875
        %v877 = vsel %vm874, %v876, %v872
        %v878 = vmul.f32 1.0, %v877
        %v879 = vmul.f32 %v863, 1.0614054
        %v880 = vmul.f32 %v878, 1.0614054
        %v881 = vadd.f32 %v879, -1.4531521
        %v882 = vadd.f32 %v880, -1.4531521
        %v883 = vmul.f32 %v881, %v863
        %v884 = vmul.f32 %v882, %v878
        %v885 = vadd.f32 %v883, 1.4214138
        %v886 = vadd.f32 %v884, 1.4214138
        %v887 = vmul.f32 %v885, %v863
        %v888 = vmul.f32 %v886, %v878
        %v889 = vadd.f32 %v887, -0.28449672
        %v890 = vadd.f32 %v888, -0.28449672
        %v891 = vmul.f32 %v889, %v863
        %v892 = vmul.f32 %v890, %v878
        %v893 = vadd.f32 %v891, 0.2548296
        %v894 = vadd.f32 %v892, 0.2548296
        %v895 = vmul.f32 %v893, %v863
        %v896 = vmul.f32 %v894, %v878
        %v897 = vmul.f32 %v843, %v843
        %v898 = vmul.f32 %v844, %v844
        %v899 = vsub.f32 0.0, %v897
        %v900 = vsub.f32 0.0, %v898
        %v901 = vmul.f32 %v899, 1.442695
        %v902 = vpow.pop %v901
        %v903 = vmul.f32 %v900, 1.442695
        %v904 = vpow.pop %v903
        %v905 = vmul.f32 %v895, %v902
        %v906 = vmul.f32 %v896, %v904
        %v907 = vsub.f32 1.0, %v905
        %v908 = vsub.f32 1.0, %v906
        %vm909 = vcmp.lt.f32.partialorder %v841, 0.0
        %vm910 = vcmp.lt.f32.partialorder %v842, 0.0
        %v911 = vsub.f32 0.0, %v907
        %v912 = vsub.f32 0.0, %v908
        %v913 = vsel %vm909, %v911, %v907
        %v914 = vsel %vm910, %v912, %v908
        %v915 = vadd.f32 %v913, 1.0
        %v916 = vadd.f32 %v914, 1.0
        %v917 = vmul.f32 %v839, %v915
        %v918 = vmul.f32 %v840, %v916
        %v919 = vpack.c.bf16 %v918, %v917
        %920 = vmatpush.bf16.msra.mxu0 0
        %921 = vmatpush.bf16.msra.mxu0 0
        %922 = vmatpush.bf16.msra.mxu0 0
        %923 = vmatpush.bf16.msra.mxu0 0
        %924 = vmatpush.bf16.msra.mxu0 0
        %925 = vmatpush.bf16.msra.mxu0 0
        %926 = vmatpush.bf16.msra.mxu0 0
        %927 = vmatpush.bf16.msra.mxu0 %v919
        %928 = vmatmul.bf16.gmra.mxu0 %v624
        %v929 = vpop.f32.mrf.mxu0
        %v930 = vadd.f32 0.0, %v929
        %v931 = vpop.f32.mrf.mxu0
        %932 = vdwg.mxu0
        %v933 = vadd.f32 %v793, %v930
        %v934 = vadd.f32 %v933, %v643
        %s935 = scalar_lea.vmem %s451, 16 [#allocation5]
        %936 = vst.msk [vmem:[%s935] sm:$0xff] %vm469, %v934
        %s937 = scalar_lea.vmem %s456, 24
        %v938 = vld [vmem:[%s937] sm:$0xff]
        %v939 = vsel %vm469, %v938, 0.0
        %940 = vadd.xlane.f32.xlu0 %v939
        %v941 = vpop.xlane.xlu0 %940
        %v942 = vmul.f32 %v941, 0.03125
        %v943 = vmul.f32 %v938, %v938
        %v944 = vsel %vm469, %v943, 0.0
        %945 = vadd.xlane.f32.xlu0 %v944
        %v946 = vpop.xlane.xlu0 %945
        %v947 = vmul.f32 %v946, 0.03125
        %v948 = vmul.f32 %v942, %v942
        %v949 = vsub.f32 %v947, %v948
        %v950 = vmax.f32 %v949, 0.0
        %v951 = vsub.f32 %v938, %v942
        %v952 = vadd.f32 %v950, 1e-05
        %v953 = vrsqrt.pop %v952
        %v954 = vmul.f32 %v953, %v952
        %v955 = vmul.f32 %v954, %v953
        %v956 = vmul.f32 0.5, %v955
        %v957 = vsub.f32 1.5, %v956
        %v958 = vmul.f32 %v953, %v957
        %vm959 = vweird.f32 %v952
        %vm960 = vweird.f32 %v953
        %vm961 = vmor %vm959, %vm960
        %v962 = vsel %vm961, %v953, %v958
        %v963 = vmul.f32 %v951, %v962
        %v964 = vmul.f32 %v963, %v496
        %v965 = vadd.f32 %v964, %v500
        %v966 = vpack.c.bf16 %v965, %v965
        %v968 = vsel %vm523, %v966, 0
        %970 = vmatpush.bf16.msra.mxu0 0
        %971 = vmatpush.bf16.msra.mxu0 0
        %972 = vmatpush.bf16.msra.mxu0 0
        %973 = vmatpush.bf16.msra.mxu0 0
        %974 = vmatpush.bf16.msra.mxu0 0
        %975 = vmatpush.bf16.msra.mxu0 0
        %976 = vmatpush.bf16.msra.mxu0 0
        %977 = vmatpush.bf16.msra.mxu0 %v968
        %978 = vmatmul.bf16.gmra.mxu0 %v521
        %v979 = vpop.f32.mrf.mxu0
        %v980 = vadd.f32 %v507, %v979
        %v981 = vpop.f32.mrf.mxu0
        %v982 = vadd.f32 %v512, %v981
        %983 = vdwg.mxu0
        %v984 = vmul.f32 %v980, 0.5
        %v985 = vmul.f32 %v982, 0.5
        %v986 = vmul.f32 %v980, 0.70710677
        %v987 = vmul.f32 %v982, 0.70710677
        %v988 = vand.u32 2147483647, %v986
        %v989 = vand.u32 2147483647, %v987
        %v990 = vmul.f32 %v988, 0.3275911
        %v991 = vmul.f32 %v989, 0.3275911
        %v992 = vadd.f32 %v990, 1.0
        %v993 = vadd.f32 %v991, 1.0
        %v994 = vrcp.pop %v992
        %v995 = vmul.f32 %v992, %v994
        %v996 = vsub.f32 1.0, %v995
        %v997 = vmul.f32 %v994, %v996
        %v998 = vadd.f32 %v994, %v997
        %vm999 = vweird.f32 %v992
        %vm1000 = vweird.f32 %v994
        %vm1001 = vmor %vm999, %vm1000
        %v1002 = vsel %vm1001, %v994, %v998
        %v1003 = vand.u32 2147483647, %v992
        %vm1004 = vcmp.eq.f32.partialorder %v1003, 8.507059e+37
        %v1005 = vand.u32 %v992, 2147483648
        %v1006 = vor.u32 1.1754944e-38, %v1005
        %v1007 = vsel %vm1004, %v1006, %v1002
        %v1008 = vmul.f32 1.0, %v1007
        %v1009 = vrcp.pop %v993
        %v1010 = vmul.f32 %v993, %v1009
        %v1011 = vsub.f32 1.0, %v1010
        %v1012 = vmul.f32 %v1009, %v1011
        %v1013 = vadd.f32 %v1009, %v1012
        %vm1014 = vweird.f32 %v993
        %vm1015 = vweird.f32 %v1009
        %vm1016 = vmor %vm1014, %vm1015
        %v1017 = vsel %vm1016, %v1009, %v1013
        %v1018 = vand.u32 2147483647, %v993
        %vm1019 = vcmp.eq.f32.partialorder %v1018, 8.507059e+37
        %v1020 = vand.u32 %v993, 2147483648
        %v1021 = vor.u32 1.1754944e-38, %v1020
        %v1022 = vsel %vm1019, %v1021, %v1017
        %v1023 = vmul.f32 1.0, %v1022
        %v1024 = vmul.f32 %v1008, 1.0614054
        %v1025 = vmul.f32 %v1023, 1.0614054
        %v1026 = vadd.f32 %v1024, -1.4531521
        %v1027 = vadd.f32 %v1025, -1.4531521
        %v1028 = vmul.f32 %v1026, %v1008
        %v1029 = vmul.f32 %v1027, %v1023
        %v1030 = vadd.f32 %v1028, 1.4214138
        %v1031 = vadd.f32 %v1029, 1.4214138
        %v1032 = vmul.f32 %v1030, %v1008
        %v1033 = vmul.f32 %v1031, %v1023
        %v1034 = vadd.f32 %v1032, -0.28449672
        %v1035 = vadd.f32 %v1033, -0.28449672
        %v1036 = vmul.f32 %v1034, %v1008
        %v1037 = vmul.f32 %v1035, %v1023
        %v1038 = vadd.f32 %v1036, 0.2548296
        %v1039 = vadd.f32 %v1037, 0.2548296
        %v1040 = vmul.f32 %v1038, %v1008
        %v1041 = vmul.f32 %v1039, %v1023
        %v1042 = vmul.f32 %v988, %v988
        %v1043 = vmul.f32 %v989, %v989
        %v1044 = vsub.f32 0.0, %v1042
        %v1045 = vsub.f32 0.0, %v1043
        %v1046 = vmul.f32 %v1044, 1.442695
        %v1047 = vpow.pop %v1046
        %v1048 = vmul.f32 %v1045, 1.442695
        %v1049 = vpow.pop %v1048
        %v1050 = vmul.f32 %v1040, %v1047
        %v1051 = vmul.f32 %v1041, %v1049
        %v1052 = vsub.f32 1.0, %v1050
        %v1053 = vsub.f32 1.0, %v1051
        %vm1054 = vcmp.lt.f32.partialorder %v986, 0.0
        %vm1055 = vcmp.lt.f32.partialorder %v987, 0.0
        %v1056 = vsub.f32 0.0, %v1052
        %v1057 = vsub.f32 0.0, %v1053
        %v1058 = vsel %vm1054, %v1056, %v1052
        %v1059 = vsel %vm1055, %v1057, %v1053
        %v1060 = vadd.f32 %v1058, 1.0
        %v1061 = vadd.f32 %v1059, 1.0
        %v1062 = vmul.f32 %v984, %v1060
        %v1063 = vmul.f32 %v985, %v1061
        %v1064 = vpack.c.bf16 %v1063, %v1062
        %1065 = vmatpush.bf16.msra.mxu0 0
        %1066 = vmatpush.bf16.msra.mxu0 0
        %1067 = vmatpush.bf16.msra.mxu0 0
        %1068 = vmatpush.bf16.msra.mxu0 0
        %1069 = vmatpush.bf16.msra.mxu0 0
        %1070 = vmatpush.bf16.msra.mxu0 0
        %1071 = vmatpush.bf16.msra.mxu0 0
        %1072 = vmatpush.bf16.msra.mxu0 %v1064
        %1073 = vmatmul.bf16.gmra.mxu0 %v624
        %v1074 = vpop.f32.mrf.mxu0
        %v1075 = vadd.f32 0.0, %v1074
        %v1076 = vpop.f32.mrf.mxu0
        %1077 = vdwg.mxu0
        %v1078 = vadd.f32 %v938, %v1075
        %v1079 = vadd.f32 %v1078, %v643
        %s1080 = scalar_lea.vmem %s451, 24 [#allocation5]
        %1081 = vst.msk [vmem:[%s1080] sm:$0xff] %vm469, %v1079
        %v1082 = vld [vmem:[%s451] sm:$0xff]
        %v1083 = vld [vmem:[%s451 + $0x8] sm:$0xff]
        %v1084 = vld [vmem:[%s451 + $0x10] sm:$0xff]
        %v1085 = vld [vmem:[%s451 + $0x18] sm:$0xff]
        %v1086 = vld [vmem:[%s7] sm:$0x1]
        %v1087 = vld [vmem:[%s8] sm:$0x1]
        %v1088 = vsel %vm469, %v1082, 0.0
        %1089 = vadd.xlane.f32.xlu0 %v1088
        %v1090 = vpop.xlane.xlu0 %1089
        %v1091 = vsel %vm469, %v1083, 0.0
        %1092 = vadd.xlane.f32.xlu0 %v1091
        %v1093 = vpop.xlane.xlu0 %1092
        %v1094 = vsel %vm469, %v1084, 0.0
        %1095 = vadd.xlane.f32.xlu0 %v1094
        %v1096 = vpop.xlane.xlu0 %1095
        %v1097 = vsel %vm469, %v1085, 0.0
        %1098 = vadd.xlane.f32.xlu0 %v1097
        %v1099 = vpop.xlane.xlu0 %1098
        %v1100 = vmul.f32 %v1090, 0.03125
        %v1101 = vmul.f32 %v1093, 0.03125
        %v1102 = vmul.f32 %v1096, 0.03125
        %v1103 = vmul.f32 %v1099, 0.03125
        %v1104 = vmul.f32 %v1082, %v1082
        %v1105 = vmul.f32 %v1083, %v1083
        %v1106 = vmul.f32 %v1084, %v1084
        %v1107 = vmul.f32 %v1085, %v1085
        %v1108 = vsel %vm469, %v1104, 0.0
        %1109 = vadd.xlane.f32.xlu0 %v1108
        %v1110 = vpop.xlane.xlu0 %1109
        %v1111 = vsel %vm469, %v1105, 0.0
        %1112 = vadd.xlane.f32.xlu0 %v1111
        %v1113 = vpop.xlane.xlu0 %1112
        %v1114 = vsel %vm469, %v1106, 0.0
        %1115 = vadd.xlane.f32.xlu0 %v1114
        %v1116 = vpop.xlane.xlu0 %1115
        %v1117 = vsel %vm469, %v1107, 0.0
        %1118 = vadd.xlane.f32.xlu0 %v1117
        %v1119 = vpop.xlane.xlu0 %1118
        %v1120 = vmul.f32 %v1110, 0.03125
        %v1121 = vmul.f32 %v1113, 0.03125
        %v1122 = vmul.f32 %v1116, 0.03125
        %v1123 = vmul.f32 %v1119, 0.03125
        %v1124 = vmul.f32 %v1100, %v1100
        %v1125 = vmul.f32 %v1101, %v1101
        %v1126 = vmul.f32 %v1102, %v1102
        %v1127 = vmul.f32 %v1103, %v1103
        %v1128 = vsub.f32 %v1120, %v1124
        %v1129 = vsub.f32 %v1121, %v1125
        %v1130 = vsub.f32 %v1122, %v1126
        %v1131 = vsub.f32 %v1123, %v1127
        %v1132 = vmax.f32 %v1128, 0.0
        %v1133 = vmax.f32 %v1129, 0.0
        %v1134 = vmax.f32 %v1130, 0.0
        %v1135 = vmax.f32 %v1131, 0.0
        %v1136 = vsub.f32 %v1082, %v1100
        %v1137 = vsub.f32 %v1083, %v1101
        %v1138 = vsub.f32 %v1084, %v1102
        %v1139 = vsub.f32 %v1085, %v1103
        %v1140 = vadd.f32 %v1132, 1e-05
        %v1141 = vadd.f32 %v1133, 1e-05
        %v1142 = vadd.f32 %v1134, 1e-05
        %v1143 = vadd.f32 %v1135, 1e-05
        %v1144 = vrsqrt.pop %v1140
        %v1145 = vmul.f32 %v1144, %v1140
        %v1146 = vmul.f32 %v1145, %v1144
        %v1147 = vmul.f32 0.5, %v1146
        %v1148 = vsub.f32 1.5, %v1147
        %v1149 = vmul.f32 %v1144, %v1148
        %vm1150 = vweird.f32 %v1140
        %vm1151 = vweird.f32 %v1144
        %vm1152 = vmor %vm1150, %vm1151
        %v1153 = vsel %vm1152, %v1144, %v1149
        %v1154 = vrsqrt.pop %v1141
        %v1155 = vmul.f32 %v1154, %v1141
        %v1156 = vmul.f32 %v1155, %v1154
        %v1157 = vmul.f32 0.5, %v1156
        %v1158 = vsub.f32 1.5, %v1157
        %v1159 = vmul.f32 %v1154, %v1158
        %vm1160 = vweird.f32 %v1141
        %vm1161 = vweird.f32 %v1154
        %vm1162 = vmor %vm1160, %vm1161
        %v1163 = vsel %vm1162, %v1154, %v1159
        %v1164 = vrsqrt.pop %v1142
        %v1165 = vmul.f32 %v1164, %v1142
        %v1166 = vmul.f32 %v1165, %v1164
        %v1167 = vmul.f32 0.5, %v1166
        %v1168 = vsub.f32 1.5, %v1167
        %v1169 = vmul.f32 %v1164, %v1168
        %vm1170 = vweird.f32 %v1142
        %vm1171 = vweird.f32 %v1164
        %vm1172 = vmor %vm1170, %vm1171
        %v1173 = vsel %vm1172, %v1164, %v1169
        %v1174 = vrsqrt.pop %v1143
        %v1175 = vmul.f32 %v1174, %v1143
        %v1176 = vmul.f32 %v1175, %v1174
        %v1177 = vmul.f32 0.5, %v1176
        %v1178 = vsub.f32 1.5, %v1177
        %v1179 = vmul.f32 %v1174, %v1178
        %vm1180 = vweird.f32 %v1143
        %vm1181 = vweird.f32 %v1174
        %vm1182 = vmor %vm1180, %vm1181
        %v1183 = vsel %vm1182, %v1174, %v1179
        %v1184 = vmul.f32 %v1136, %v1153
        %v1185 = vmul.f32 %v1137, %v1163
        %v1186 = vmul.f32 %v1138, %v1173
        %v1187 = vmul.f32 %v1139, %v1183
        %v1189 = vperm.slane %v1086, 0
        %v1191 = vmul.f32 %v1184, %v1189
        %v1192 = vmul.f32 %v1185, %v1189
        %v1193 = vmul.f32 %v1186, %v1189
        %v1194 = vmul.f32 %v1187, %v1189
        %v1196 = vperm.slane %v1087, 0
        %v1198 = vadd.f32 %v1191, %v1196
        %v1199 = vadd.f32 %v1192, %v1196
        %v1200 = vadd.f32 %v1193, %v1196
        %v1201 = vadd.f32 %v1194, %v1196
        %v1202 = vpack.c.bf16 %v1199, %v1198
        %v1203 = vpack.c.bf16 %v1201, %v1200
        %v1204 = vld [vmem:[#allocation2] sm:$0xf]
        %v1205 = vld [vmem:[#allocation2 + $0x4] sm:$0xf]
        %v1206 = vld [vmem:[#allocation2 + $0x8] sm:$0xf]
        %v1207 = vld [vmem:[#allocation2 + $0xc] sm:$0xf]
        %v1208 = vld [vmem:[%s10] sm:$0x1]
        %v1210 = vperm.slane %v1208, 0
        %v1216 = vunpack.c.l.b16 %v1204
        %v1217 = vunpack.c.l.b16 %v1205
        %v1218 = vunpack.c.l.b16 %v1206
        %v1219 = vunpack.c.l.b16 %v1207
        %v1220 = vpack.c.b16 %v1217, %v1216
        %v1221 = vpack.c.b16 %v1219, %v1218
        %v1225 = vsel %vm469, %v1202, 0
        %v1228 = vsel %vm469, %v1203, 0
        %1230 = vmatpush.bf16.msra.mxu0 0
        %1231 = vmatpush.bf16.msra.mxu0 0
        %1232 = vmatpush.bf16.msra.mxu0 0
        %1233 = vmatpush.bf16.msra.mxu0 0
        %1234 = vmatpush.bf16.msra.mxu0 0
        %1235 = vmatpush.bf16.msra.mxu0 0
        %1236 = vmatpush.bf16.msra.mxu0 %v1221
        %1237 = vmatpush.bf16.msra.mxu0 %v1220
        %1238 = vmatmul.bf16.gmra.mxu0 %v1225
        %v1239 = vpop.f32.mrf.mxu0
        %v1240 = vadd.f32 %v1210, %v1239
        %v1241 = vpop.f32.mrf.mxu0
        %v1242 = vadd.f32 %v1210, %v1241
        %1243 = vmatmul.bf16.gmra.mxu0 %v1228
        %v1244 = vpop.f32.mrf.mxu0
        %v1245 = vadd.f32 %v1210, %v1244
        %v1246 = vpop.f32.mrf.mxu0
        %v1247 = vadd.f32 %v1210, %v1246
        %1248 = vdwg.mxu0
        %v1249 = vmul.f32 %v1240, 0.5
        %v1250 = vmul.f32 %v1242, 0.5
        %v1251 = vmul.f32 %v1245, 0.5
        %v1252 = vmul.f32 %v1247, 0.5
        %v1253 = vmul.f32 %v1240, 0.70710677
        %v1254 = vmul.f32 %v1242, 0.70710677
        %v1255 = vmul.f32 %v1245, 0.70710677
        %v1256 = vmul.f32 %v1247, 0.70710677
        %v1257 = vand.u32 2147483647, %v1253
        %v1258 = vand.u32 2147483647, %v1254
        %v1259 = vand.u32 2147483647, %v1255
        %v1260 = vand.u32 2147483647, %v1256
        %v1261 = vmul.f32 %v1257, 0.3275911
        %v1262 = vmul.f32 %v1258, 0.3275911
        %v1263 = vmul.f32 %v1259, 0.3275911
        %v1264 = vmul.f32 %v1260, 0.3275911
        %v1265 = vadd.f32 %v1261, 1.0
        %v1266 = vadd.f32 %v1262, 1.0
        %v1267 = vadd.f32 %v1263, 1.0
        %v1268 = vadd.f32 %v1264, 1.0
        %v1269 = vrcp.pop %v1265
        %v1270 = vmul.f32 %v1265, %v1269
        %v1271 = vsub.f32 1.0, %v1270
        %v1272 = vmul.f32 %v1269, %v1271
        %v1273 = vadd.f32 %v1269, %v1272
        %vm1274 = vweird.f32 %v1265
        %vm1275 = vweird.f32 %v1269
        %vm1276 = vmor %vm1274, %vm1275
        %v1277 = vsel %vm1276, %v1269, %v1273
        %v1278 = vand.u32 2147483647, %v1265
        %vm1279 = vcmp.eq.f32.partialorder %v1278, 8.507059e+37
        %v1280 = vand.u32 %v1265, 2147483648
        %v1281 = vor.u32 1.1754944e-38, %v1280
        %v1282 = vsel %vm1279, %v1281, %v1277
        %v1283 = vmul.f32 1.0, %v1282
        %v1284 = vrcp.pop %v1266
        %v1285 = vmul.f32 %v1266, %v1284
        %v1286 = vsub.f32 1.0, %v1285
        %v1287 = vmul.f32 %v1284, %v1286
        %v1288 = vadd.f32 %v1284, %v1287
        %vm1289 = vweird.f32 %v1266
        %vm1290 = vweird.f32 %v1284
        %vm1291 = vmor %vm1289, %vm1290
        %v1292 = vsel %vm1291, %v1284, %v1288
        %v1293 = vand.u32 2147483647, %v1266
        %vm1294 = vcmp.eq.f32.partialorder %v1293, 8.507059e+37
        %v1295 = vand.u32 %v1266, 2147483648
        %v1296 = vor.u32 1.1754944e-38, %v1295
        %v1297 = vsel %vm1294, %v1296, %v1292
        %v1298 = vmul.f32 1.0, %v1297
        %v1299 = vrcp.pop %v1267
        %v1300 = vmul.f32 %v1267, %v1299
        %v1301 = vsub.f32 1.0, %v1300
        %v1302 = vmul.f32 %v1299, %v1301
        %v1303 = vadd.f32 %v1299, %v1302
        %vm1304 = vweird.f32 %v1267
        %vm1305 = vweird.f32 %v1299
        %vm1306 = vmor %vm1304, %vm1305
        %v1307 = vsel %vm1306, %v1299, %v1303
        %v1308 = vand.u32 2147483647, %v1267
        %vm1309 = vcmp.eq.f32.partialorder %v1308, 8.507059e+37
        %v1310 = vand.u32 %v1267, 2147483648
        %v1311 = vor.u32 1.1754944e-38, %v1310
        %v1312 = vsel %vm1309, %v1311, %v1307
        %v1313 = vmul.f32 1.0, %v1312
        %v1314 = vrcp.pop %v1268
        %v1315 = vmul.f32 %v1268, %v1314
        %v1316 = vsub.f32 1.0, %v1315
        %v1317 = vmul.f32 %v1314, %v1316
        %v1318 = vadd.f32 %v1314, %v1317
        %vm1319 = vweird.f32 %v1268
        %vm1320 = vweird.f32 %v1314
        %vm1321 = vmor %vm1319, %vm1320
        %v1322 = vsel %vm1321, %v1314, %v1318
        %v1323 = vand.u32 2147483647, %v1268
        %vm1324 = vcmp.eq.f32.partialorder %v1323, 8.507059e+37
        %v1325 = vand.u32 %v1268, 2147483648
        %v1326 = vor.u32 1.1754944e-38, %v1325
        %v1327 = vsel %vm1324, %v1326, %v1322
        %v1328 = vmul.f32 1.0, %v1327
        %v1329 = vmul.f32 %v1283, 1.0614054
        %v1330 = vmul.f32 %v1298, 1.0614054
        %v1331 = vmul.f32 %v1313, 1.0614054
        %v1332 = vmul.f32 %v1328, 1.0614054
        %v1333 = vadd.f32 %v1329, -1.4531521
        %v1334 = vadd.f32 %v1330, -1.4531521
        %v1335 = vadd.f32 %v1331, -1.4531521
        %v1336 = vadd.f32 %v1332, -1.4531521
        %v1337 = vmul.f32 %v1333, %v1283
        %v1338 = vmul.f32 %v1334, %v1298
        %v1339 = vmul.f32 %v1335, %v1313
        %v1340 = vmul.f32 %v1336, %v1328
        %v1341 = vadd.f32 %v1337, 1.4214138
        %v1342 = vadd.f32 %v1338, 1.4214138
        %v1343 = vadd.f32 %v1339, 1.4214138
        %v1344 = vadd.f32 %v1340, 1.4214138
        %v1345 = vmul.f32 %v1341, %v1283
        %v1346 = vmul.f32 %v1342, %v1298
        %v1347 = vmul.f32 %v1343, %v1313
        %v1348 = vmul.f32 %v1344, %v1328
        %v1349 = vadd.f32 %v1345, -0.28449672
        %v1350 = vadd.f32 %v1346, -0.28449672
        %v1351 = vadd.f32 %v1347, -0.28449672
        %v1352 = vadd.f32 %v1348, -0.28449672
        %v1353 = vmul.f32 %v1349, %v1283
        %v1354 = vmul.f32 %v1350, %v1298
        %v1355 = vmul.f32 %v1351, %v1313
        %v1356 = vmul.f32 %v1352, %v1328
        %v1357 = vadd.f32 %v1353, 0.2548296
        %v1358 = vadd.f32 %v1354, 0.2548296
        %v1359 = vadd.f32 %v1355, 0.2548296
        %v1360 = vadd.f32 %v1356, 0.2548296
        %v1361 = vmul.f32 %v1357, %v1283
        %v1362 = vmul.f32 %v1358, %v1298
        %v1363 = vmul.f32 %v1359, %v1313
        %v1364 = vmul.f32 %v1360, %v1328
        %v1365 = vmul.f32 %v1257, %v1257
        %v1366 = vmul.f32 %v1258, %v1258
        %v1367 = vmul.f32 %v1259, %v1259
        %v1368 = vmul.f32 %v1260, %v1260
        %v1369 = vsub.f32 0.0, %v1365
        %v1370 = vsub.f32 0.0, %v1366
        %v1371 = vsub.f32 0.0, %v1367
        %v1372 = vsub.f32 0.0, %v1368
        %v1373 = vmul.f32 %v1369, 1.442695
        %v1374 = vpow.pop %v1373
        %v1375 = vmul.f32 %v1370, 1.442695
        %v1376 = vpow.pop %v1375
        %v1377 = vmul.f32 %v1371, 1.442695
        %v1378 = vpow.pop %v1377
        %v1379 = vmul.f32 %v1372, 1.442695
        %v1380 = vpow.pop %v1379
        %v1381 = vmul.f32 %v1361, %v1374
        %v1382 = vmul.f32 %v1362, %v1376
        %v1383 = vmul.f32 %v1363, %v1378
        %v1384 = vmul.f32 %v1364, %v1380
        %v1385 = vsub.f32 1.0, %v1381
        %v1386 = vsub.f32 1.0, %v1382
        %v1387 = vsub.f32 1.0, %v1383
        %v1388 = vsub.f32 1.0, %v1384
        %vm1389 = vcmp.lt.f32.partialorder %v1253, 0.0
        %vm1390 = vcmp.lt.f32.partialorder %v1254, 0.0
        %vm1391 = vcmp.lt.f32.partialorder %v1255, 0.0
        %vm1392 = vcmp.lt.f32.partialorder %v1256, 0.0
        %v1393 = vsub.f32 0.0, %v1385
        %v1394 = vsub.f32 0.0, %v1386
        %v1395 = vsub.f32 0.0, %v1387
        %v1396 = vsub.f32 0.0, %v1388
        %v1397 = vsel %vm1389, %v1393, %v1385
        %v1398 = vsel %vm1390, %v1394, %v1386
        %v1399 = vsel %vm1391, %v1395, %v1387
        %v1400 = vsel %vm1392, %v1396, %v1388
        %v1401 = vadd.f32 %v1397, 1.0
        %v1402 = vadd.f32 %v1398, 1.0
        %v1403 = vadd.f32 %v1399, 1.0
        %v1404 = vadd.f32 %v1400, 1.0
        %v1405 = vmul.f32 %v1249, %v1401
        %v1406 = vmul.f32 %v1250, %v1402
        %v1407 = vmul.f32 %v1251, %v1403
        %v1408 = vmul.f32 %v1252, %v1404
        %v1409 = vpack.c.bf16 %v1406, %v1405
        %v1410 = vpack.c.bf16 %v1408, %v1407
        %v1411 = vld [vmem:[%s11] sm:$0xf]
        %v1412 = vld [vmem:[%s11 + $0x4] sm:$0xf]
        %v1413 = vld [vmem:[%s11 + $0x8] sm:$0xf]
        %v1414 = vld [vmem:[%s11 + $0xc] sm:$0xf]
        %v1415 = vld [vmem:[%s11 + $0x10] sm:$0xf]
        %v1416 = vld [vmem:[%s11 + $0x14] sm:$0xf]
        %v1417 = vld [vmem:[%s11 + $0x18] sm:$0xf]
        %v1418 = vld [vmem:[%s11 + $0x1c] sm:$0xf]
        %v1427 = vunpack.c.l.b16 %v1411
        %v1428 = vunpack.c.l.b16 %v1412
        %v1429 = vunpack.c.l.b16 %v1413
        %v1430 = vunpack.c.l.b16 %v1414
        %v1431 = vunpack.c.l.b16 %v1415
        %v1432 = vunpack.c.l.b16 %v1416
        %v1433 = vunpack.c.l.b16 %v1417
        %v1434 = vunpack.c.l.b16 %v1418
        %v1435 = vpack.c.b16 %v1428, %v1427
        %v1436 = vpack.c.b16 %v1430, %v1429
        %v1437 = vpack.c.b16 %v1432, %v1431
        %v1438 = vpack.c.b16 %v1434, %v1433
        %vm1443 = vcmask 523264
        %v1445 = vsel %vm1443, %v1409, 0
        %v1448 = vsel %vm1443, %v1410, 0
        %1450 = vmatpush.bf16.msra.mxu0 0
        %1451 = vmatpush.bf16.msra.mxu0 0
        %1452 = vmatpush.bf16.msra.mxu0 0
        %1453 = vmatpush.bf16.msra.mxu0 0
        %1454 = vmatpush.bf16.msra.mxu0 %v1438
        %1455 = vmatpush.bf16.msra.mxu0 %v1437
        %1456 = vmatpush.bf16.msra.mxu0 %v1436
        %1457 = vmatpush.bf16.msra.mxu0 %v1435
        %1458 = vmatmul.bf16.gmra.mxu0 %v1445
        %v1459 = vpop.f32.mrf.mxu0
        %v1460 = vadd.f32 0.0, %v1459
        %v1461 = vpop.f32.mrf.mxu0
        %v1462 = vadd.f32 0.0, %v1461
        %1463 = vmatmul.bf16.gmra.mxu0 %v1448
        %v1464 = vpop.f32.mrf.mxu0
        %v1465 = vadd.f32 0.0, %v1464
        %v1466 = vpop.f32.mrf.mxu0
        %v1467 = vadd.f32 0.0, %v1466
        %1468 = vdwg.mxu0
        %v1469 = vadd.f32 %v1082, %v1460
        %v1470 = vadd.f32 %v1083, %v1462
        %v1471 = vadd.f32 %v1084, %v1465
        %v1472 = vadd.f32 %v1085, %v1467
        %v1473 = vld [vmem:[%s12] sm:$0x1]
        %v1475 = vperm.slane %v1473, 0
        %v1477 = vadd.f32 %v1469, %v1475
        %v1478 = vadd.f32 %v1470, %v1475
        %v1479 = vadd.f32 %v1471, %v1475
        %v1480 = vadd.f32 %v1472, %v1475
        %1481 = vst.msk [vmem:[%s451] sm:$0xff] %vm469, %v1477
        %1482 = vst.msk [vmem:[%s451 + $0x8] sm:$0xff] %vm469, %v1478
        %1483 = vst.msk [vmem:[%s451 + $0x10] sm:$0xff] %vm469, %v1479
        %1484 = vst.msk [vmem:[%s451 + $0x18] sm:$0xff] %vm469, %v1480
        %s1485 = sand.u32 %s314, 1
        %s1486 = scalar_lea.sflag [#allocation4], %s1485
        %s1487 = sand.u32 %s314, 1
        %s1488 = smul.addr %s1487, 32
        %s1489 = scalar_lea.vmem [#allocation5], %s1488
        // Predicated region
        $region77: #{tpu_custom_call.1} parent=71 // pred_check
          %p1490 = pneg %p324
        $region78: #{tpu_custom_call.1} parent=71 // pred_check_branch
          %1492 = sbr.rel (%p1490) target = $region80
        $region79: #{tpu_custom_call.1} parent=71 // pred_region
          %s1493 = smul.u32 4, %s28
          %1495 = vsyncadd %s1486, 0
          %s1496 = smul.addr %s1493, 8
          %s1497 = scalar_lea.hbm %s13, %s1496
          %s1498 = sshll.u32 %s1489, 4
          %s1499 = int_to_ptr.vmem [resolvable:$true] %s1498
          %s1500 = sshll.u32 %s1497, 4
          %s1501 = int_to_ptr.hbm [resolvable:$true] %s1500
          %1506 = dma.vmem_to_hbm [thread:$0]  %s1499, 512, %s1501, %s1486, 128, 128, 8
        $region80: #{tpu_custom_call.1} parent=71 // pred_fallthru
          _
      $region72: #{tpu_custom_call.1} parent=5 // pred_fallthru
        _
      %p1507 = scmp.le.s32.totalorder 2, %s23
      // Predicated region
      $region81: #{tpu_custom_call.1} parent=5 // pred_check
        %p1508 = pneg %p1507
      $region82: #{tpu_custom_call.1} parent=5 // pred_check_branch
        %1510 = sbr.rel (%p1508) target = $region84
      $region83: #{tpu_custom_call.1} parent=5 // pred_region
        %s1511 = ssub.s32 %s23, 2
        // Predicated region
        $region85: #{tpu_custom_call.1} parent=83 // pred_check
          %p1512 = pneg %p330
        $region86: #{tpu_custom_call.1} parent=83 // pred_check_branch
          %1514 = sbr.rel (%p1512) target = $region88
        $region87: #{tpu_custom_call.1} parent=83 // pred_region
          %s1515 = sand.u32 %s315, 1
          %s1516 = scalar_lea.sflag [#allocation4], %s1515
          %s1517 = sand.u32 %s315, 1
          %s1518 = smul.addr %s1517, 32
          %s1519 = scalar_lea.vmem [#allocation5], %s1518
          %1521 = dma.done %s1516, 512
        $region88: #{tpu_custom_call.1} parent=83 // pred_fallthru
          _
      $region84: #{tpu_custom_call.1} parent=5 // pred_fallthru
        _
    $region6: #{tpu_custom_call.1} parent=1 // loop_footer
      %s27 = sadd.s32 1, %s23
    $region7: #{tpu_custom_call.1} parent=1 // loop_footer_branch
      %22 = sbr.rel target = $region3
    $region8: #{tpu_custom_call.1} parent=1 // loop_exit
      _
    %1522 = vsyncpa [#allocation3], 1
    %s1523 = scalar_lea.sflag [#allocation3], 1
    %1524 = vsyncpa %s1523, 1
    %1525 = vsyncpa [#allocation4], 1
    %s1526 = scalar_lea.sflag [#allocation4], 1
    %1527 = vsyncpa %s1526, 1

</llo_original>
